<compile_context>
chip_gen: v7x
topology: tpu7x:2x2x1
jax: 0.10.0
libtpu: 0.0.40
codegen_flags: <defaults>
</compile_context>

<pallas_src>
import functools

import jax
import jax.numpy as jnp
from jax.experimental import pallas as pl
from jax.experimental.pallas import tpu as pltpu


def _clam_sb_kernel(
    # inputs (per-tile h, resident weights)
    h_ref,        # [TN, L]   bf16
    w_fc_ref,     # [L, H]    bf16
    b_fc_ref,     # [1, H]    f32
    w_ab_ref,     # [H, 2D]   bf16  (w_a | w_b fused)
    b_ab_ref,     # [1, 2D]   f32   (b_a | b_b fused)
    wc_t_ref,     # [1, D]    bf16  (w_c transposed)
    b_c_ref,      # [1, 1]    f32
    w_cls_ref,    # [H, C]    bf16
    b_cls_ref,    # [1, C]    f32
    # outputs
    logits_ref,   # [1, C]    f32
    yprob_ref,    # [1, C]    f32
    araw_ref,     # [1, TN]   f32  (lane-dense slice of the [1, N] row)
    # scratch (online-softmax carry, persists across grid steps)
    m_ref,        # [1, 1]    f32  running max
    l_ref,        # [1, 1]    f32  running denominator
    acc_ref,      # [1, H]    f32  running (unnormalized) pooled feature
    *,
    n_valid,      # true bag size (pre-padding)
    tile_n,       # TN
    attn_d,       # D
):
    i = pl.program_id(0)
    nsteps = pl.num_programs(0)

    @pl.when(i == 0)
    def _():
        m_ref[...] = jnp.full(m_ref.shape, -jnp.inf, jnp.float32)
        l_ref[...] = jnp.zeros(l_ref.shape, jnp.float32)
        acc_ref[...] = jnp.zeros(acc_ref.shape, jnp.float32)

    h_bf = h_ref[...]                                              # bf16 [TN, L]

    # fc: Linear(L -> H) + ReLU   (bf16 MXU, f32 accumulate, f32 elementwise)
    h1 = jnp.dot(h_bf, w_fc_ref[...],
                 preferred_element_type=jnp.float32) + b_fc_ref[...]
    h1 = jnp.maximum(h1, 0.0)                                      # f32 [TN, H]
    h1_bf = h1.astype(jnp.bfloat16)

    # fused gated attention: one [TN, 2D] matmul, then tanh/sigmoid halves
    g = jnp.dot(h1_bf, w_ab_ref[...],
                preferred_element_type=jnp.float32) + b_ab_ref[...]
    a = jnp.tanh(g[:, :attn_d])                                    # f32 [TN, D]
    b = jax.nn.sigmoid(g[:, attn_d:])                              # f32 [TN, D]
    ab_bf = (a * b).astype(jnp.bfloat16)

    # attention score as a lane-dense [1, TN] row: contract D of (a*b) with w_c^T
    s = jax.lax.dot_general(
        wc_t_ref[...], ab_bf,
        dimension_numbers=(((1,), (1,)), ((), ())),
        preferred_element_type=jnp.float32,
    )                                                              # f32 [1, TN]

    # A_raw includes the attention_c bias (a constant offset cancels inside the
    # softmax, so it is only added here).
    araw_ref[...] = s + b_c_ref[...]

    # mask padded tail lanes (h was zero-padded up to a tile multiple)
    col = i * tile_n + jax.lax.broadcasted_iota(jnp.int32, s.shape, 1)
    s = jnp.where(col < n_valid, s, -jnp.inf)

    # online softmax + attention-weighted pooling on the MXU
    m_prev = m_ref[...]
    m_new = jnp.maximum(m_prev, jnp.max(s, axis=1, keepdims=True))  # [1, 1]
    alpha = jnp.exp(m_prev - m_new)
    p = jnp.exp(s - m_new)                                          # [1, TN], 0 on pad
    l_ref[...] = alpha * l_ref[...] + jnp.sum(p, axis=1, keepdims=True)
    acc_ref[...] = alpha * acc_ref[...] + jnp.dot(
        p.astype(jnp.bfloat16), h1_bf, preferred_element_type=jnp.float32)
    m_ref[...] = m_new

    @pl.when(i == nsteps - 1)
    def _():
        # M = softmax(A)^T @ h1   (normalize the running accumulator)
        M = acc_ref[...] * pl.reciprocal(l_ref[...], approx=False)  # f32 [1, H]
        logits = jnp.dot(M.astype(jnp.bfloat16), w_cls_ref[...],
                         preferred_element_type=jnp.float32) + b_cls_ref[...]
        logits_ref[...] = logits
        # Y_prob = softmax(logits, dim=1)
        lmax = jnp.max(logits, axis=1, keepdims=True)
        le = jnp.exp(logits - lmax)
        yprob_ref[...] = le * pl.reciprocal(
            jnp.sum(le, axis=1, keepdims=True), approx=False)


@functools.partial(jax.jit, static_argnames=("tile_n",))
def clam_sb_forward(h, params, tile_n=512):
    """Returns (logits, Y_prob, Y_hat, A_raw) — A_raw is [1, N] (lane-dense)."""
    n, embed = h.shape
    hidden = params["w_fc"].shape[1]
    attn_d = params["w_a"].shape[1]
    n_classes = params["w_cls"].shape[1]

    tn = int(tile_n)
    n_pad = ((n + tn - 1) // tn) * tn
    grid = n_pad // tn

    # bf16 MXU operands (halves the HBM->VMEM DMA bytes for h and the weights)
    h_bf = h.astype(jnp.bfloat16)
    if n_pad != n:
        h_bf = jnp.pad(h_bf, ((0, n_pad - n), (0, 0)))

    # Fuse the gating weights into one [H, 2D] matmul; transpose w_c to [1, D].
    w_ab = jnp.concatenate([params["w_a"], params["w_b"]], axis=1).astype(jnp.bfloat16)
    b_ab = jnp.concatenate([params["b_a"], params["b_b"]], axis=1)
    wc_t = jnp.transpose(params["w_c"], (1, 0)).astype(jnp.bfloat16)

    inputs = (
        h_bf,
        params["w_fc"].astype(jnp.bfloat16), params["b_fc"],
        w_ab, b_ab,
        wc_t, params["b_c"],
        params["w_cls"].astype(jnp.bfloat16), params["b_cls"],
    )

    kernel = functools.partial(
        _clam_sb_kernel, n_valid=n, tile_n=tn, attn_d=attn_d)

    grid_spec = pltpu.PrefetchScalarGridSpec(
        num_scalar_prefetch=0,
        grid=(grid,),
        in_specs=[
            pl.BlockSpec((tn, embed), lambda i: (i, 0)),           # h tile
            pl.BlockSpec((embed, hidden), lambda i: (0, 0)),       # w_fc (resident)
            pl.BlockSpec((1, hidden), lambda i: (0, 0)),           # b_fc
            pl.BlockSpec((hidden, 2 * attn_d), lambda i: (0, 0)),  # w_ab
            pl.BlockSpec((1, 2 * attn_d), lambda i: (0, 0)),       # b_ab
            pl.BlockSpec((1, attn_d), lambda i: (0, 0)),           # w_c^T
            pl.BlockSpec((1, 1), lambda i: (0, 0)),                # b_c
            pl.BlockSpec((hidden, n_classes), lambda i: (0, 0)),   # w_cls
            pl.BlockSpec((1, n_classes), lambda i: (0, 0)),        # b_cls
        ],
        out_specs=(
            pl.BlockSpec((1, n_classes), lambda i: (0, 0)),        # logits
            pl.BlockSpec((1, n_classes), lambda i: (0, 0)),        # Y_prob
            pl.BlockSpec((1, tn), lambda i: (0, i)),               # A_raw row
        ),
        scratch_shapes=[
            pltpu.VMEM((1, 1), jnp.float32),        # running max
            pltpu.VMEM((1, 1), jnp.float32),        # running denom
            pltpu.VMEM((1, hidden), jnp.float32),   # pooled accumulator
        ],
    )

    logits, y_prob, a_raw_pad = pl.pallas_call(
        kernel,
        out_shape=(
            jax.ShapeDtypeStruct((1, n_classes), jnp.float32),
            jax.ShapeDtypeStruct((1, n_classes), jnp.float32),
            jax.ShapeDtypeStruct((1, n_pad), jnp.float32),
        ),
        grid_spec=grid_spec,
        compiler_params=pltpu.CompilerParams(
            dimension_semantics=("arbitrary",),   # grid axis carries the reduction
            vmem_limit_bytes=32 << 20,            # actual need ~4 MiB; v7x-safe
        ),
    )(*inputs)

    a_raw = a_raw_pad[:, :n]                          # [1, N], already transposed
    y_hat = jnp.argmax(logits, axis=1, keepdims=True)  # Y_hat = topk(logits,1)[1]
    return logits, y_prob, y_hat, a_raw


def init_params(key, embed_dim=1024, hidden=512, attn_dim=256, n_classes=2):
    """Deterministic synthetic parameters. Weights stored as [in, out]."""
    ks = jax.random.split(key, 10)
    scale = 0.02
    return {
        "w_fc": scale * jax.random.normal(ks[0], (embed_dim, hidden), jnp.float32),
        "b_fc": scale * jax.random.normal(ks[1], (1, hidden), jnp.float32),
        "w_a": scale * jax.random.normal(ks[2], (hidden, attn_dim), jnp.float32),
        "b_a": scale * jax.random.normal(ks[3], (1, attn_dim), jnp.float32),
        "w_b": scale * jax.random.normal(ks[4], (hidden, attn_dim), jnp.float32),
        "b_b": scale * jax.random.normal(ks[5], (1, attn_dim), jnp.float32),
        "w_c": scale * jax.random.normal(ks[6], (attn_dim, 1), jnp.float32),
        "b_c": scale * jax.random.normal(ks[7], (1, 1), jnp.float32),
        "w_cls": scale * jax.random.normal(ks[8], (hidden, n_classes), jnp.float32),
        "b_cls": scale * jax.random.normal(ks[9], (1, n_classes), jnp.float32),
    }


def reference_forward(h, params):
    """Plain-JAX f32 reference mirroring the PyTorch forward."""
    h1 = jnp.maximum(h @ params["w_fc"] + params["b_fc"], 0.0)
    a = jnp.tanh(h1 @ params["w_a"] + params["b_a"])
    b = jax.nn.sigmoid(h1 @ params["w_b"] + params["b_b"])
    A = (a * b) @ params["w_c"] + params["b_c"]          # [N, 1]
    A_raw = A.T                                          # [1, N]
    A_sm = jax.nn.softmax(A_raw, axis=1)                 # [1, N]
    M = A_sm @ h1                                        # [1, H]
    logits = M @ params["w_cls"] + params["b_cls"]       # [1, C]
    y_prob = jax.nn.softmax(logits, axis=1)
    y_hat = jnp.argmax(logits, axis=1, keepdims=True)
    return logits, y_prob, y_hat, A_raw


if __name__ == "__main__":
    key = jax.random.PRNGKey(0)
    k_h, k_p = jax.random.split(key)

    # CLAM_SB('small', embed_dim=1024): sizes = [1024, 512, 256], n_classes=2.
    N = 300           # bag size; deliberately NOT a tile multiple (exercises masking)
    EMBED = 1024
    HIDDEN, ATTN_D, NCLS = 512, 256, 2

    h = jax.random.normal(k_h, (N, EMBED), jnp.float32)
    params = init_params(k_p, EMBED, HIDDEN, ATTN_D, NCLS)

    # tile_n=128 -> grid of 3 tiles + masked tail: exercises the online-softmax path.
    logits, y_prob, y_hat, a_raw = clam_sb_forward(h, params, tile_n=128)
    jax.block_until_ready((logits, y_prob, y_hat, a_raw))

    # sanity check vs. plain-JAX f32 reference
    r_logits, r_prob, r_yhat, r_araw = reference_forward(h, params)
    assert logits.shape == (1, NCLS) and y_prob.shape == (1, NCLS)
    assert y_hat.shape == (1, 1) and a_raw.shape == (1, N)
    # bf16 MXU operands (f32 accumulate) => loosened tolerances vs the f32 reference.
    assert jnp.allclose(a_raw, r_araw, atol=2e-2, rtol=2e-2)
    assert jnp.allclose(logits, r_logits, atol=3e-2, rtol=3e-2)
    assert jnp.allclose(y_prob, r_prob, atol=2e-2, rtol=2e-2)
    # argmax can legitimately flip only when the two logits sit within bf16 noise.
    if float(jnp.abs(r_logits[0, 0] - r_logits[0, 1])) > 5e-2:
        assert jnp.array_equal(y_hat, r_yhat)

    print("KERNEL_OK")
</pallas_src>

<mosaic_0001>
module attributes {stable_mosaic.version = 11 : i64} {
  func.func @_clam_sb_kernel(%arg0: i32, %arg1: memref<128x1024xbf16, #tpu.memory_space<vmem>>, %arg2: memref<1024x512xbf16, #tpu.memory_space<vmem>>, %arg3: memref<1x512xf32, #tpu.memory_space<vmem>>, %arg4: memref<512x512xbf16, #tpu.memory_space<vmem>>, %arg5: memref<1x512xf32, #tpu.memory_space<vmem>>, %arg6: memref<1x256xbf16, #tpu.memory_space<vmem>>, %arg7: memref<1x1xf32, #tpu.memory_space<vmem>>, %arg8: memref<512x2xbf16, #tpu.memory_space<vmem>>, %arg9: memref<1x2xf32, #tpu.memory_space<vmem>>, %arg10: memref<1x2xf32, #tpu.memory_space<vmem>>, %arg11: memref<1x2xf32, #tpu.memory_space<vmem>>, %arg12: memref<1x128xf32, #tpu.memory_space<vmem>>, %arg13: memref<1x1xf32, #tpu.memory_space<vmem>>, %arg14: memref<1x1xf32, #tpu.memory_space<vmem>>, %arg15: memref<1x512xf32, #tpu.memory_space<vmem>>) attributes {dimension_semantics = [#tpu.dimension_semantics<arbitrary>], iteration_bounds = array<i64: 3>, scalar_prefetch = 0 : i64, scratch_operands = 3 : i64, tpu.core_type = #tpu.core_type<tc>, window_params = [{transform_indices = @transform_0, window_bounds = array<i64: 128, 1024>}, {pipeline_mode = #tpu.pipeline_mode<synchronous>, transform_indices = @transform_1, window_bounds = array<i64: 1024, 512>}, {pipeline_mode = #tpu.pipeline_mode<synchronous>, transform_indices = @transform_2, window_bounds = array<i64: 1, 512>}, {pipeline_mode = #tpu.pipeline_mode<synchronous>, transform_indices = @transform_3, window_bounds = array<i64: 512, 512>}, {pipeline_mode = #tpu.pipeline_mode<synchronous>, transform_indices = @transform_4, window_bounds = array<i64: 1, 512>}, {pipeline_mode = #tpu.pipeline_mode<synchronous>, transform_indices = @transform_5, window_bounds = array<i64: 1, 256>}, {pipeline_mode = #tpu.pipeline_mode<synchronous>, transform_indices = @transform_6, window_bounds = array<i64: 1, 1>}, {pipeline_mode = #tpu.pipeline_mode<synchronous>, transform_indices = @transform_7, window_bounds = array<i64: 512, 2>}, {pipeline_mode = #tpu.pipeline_mode<synchronous>, transform_indices = @transform_8, window_bounds = array<i64: 1, 2>}, {pipeline_mode = #tpu.pipeline_mode<synchronous>, transform_indices = @transform_9, window_bounds = array<i64: 1, 2>}, {pipeline_mode = #tpu.pipeline_mode<synchronous>, transform_indices = @transform_10, window_bounds = array<i64: 1, 2>}, {transform_indices = @transform_11, window_bounds = array<i64: 1, 128>}]} {
    %c0_i32 = arith.constant 0 : i32
    %0 = arith.cmpi eq, %arg0, %c0_i32 : i32
    %1 = arith.extui %0 : i1 to i32
    %c0_i32_0 = arith.constant 0 : i32
    %2 = arith.cmpi ne, %1, %c0_i32_0 : i32
    scf.if %2 {
      %cst_37 = arith.constant 0xFF800000 : f32
      %67 = vector.broadcast %cst_37 : f32 to vector<1x1xf32>
      %c0_38 = arith.constant 0 : index
      %c0_39 = arith.constant 0 : index
      %68 = vector.load %arg13[%c0_38, %c0_39] : memref<1x1xf32, #tpu.memory_space<vmem>>, vector<1x1xf32>
      tpu.vector_store %arg13[%c0_38, %c0_39], %67 {strides = array<i32>} : memref<1x1xf32, #tpu.memory_space<vmem>>, vector<1x1xf32>,
      %cst_40 = arith.constant 0.000000e+00 : f32
      %69 = vector.broadcast %cst_40 : f32 to vector<1x1xf32>
      %c0_41 = arith.constant 0 : index
      %c0_42 = arith.constant 0 : index
      %70 = vector.load %arg14[%c0_41, %c0_42] : memref<1x1xf32, #tpu.memory_space<vmem>>, vector<1x1xf32>
      tpu.vector_store %arg14[%c0_41, %c0_42], %69 {strides = array<i32>} : memref<1x1xf32, #tpu.memory_space<vmem>>, vector<1x1xf32>,
      %cst_43 = arith.constant 0.000000e+00 : f32
      %71 = vector.broadcast %cst_43 : f32 to vector<1x512xf32>
      %c0_44 = arith.constant 0 : index
      %c0_45 = arith.constant 0 : index
      %72 = vector.load %arg15[%c0_44, %c0_45] : memref<1x512xf32, #tpu.memory_space<vmem>>, vector<1x512xf32>
      tpu.vector_store %arg15[%c0_44, %c0_45], %71 {strides = array<i32>} : memref<1x512xf32, #tpu.memory_space<vmem>>, vector<1x512xf32>,
    } else {
    }
    %c0 = arith.constant 0 : index
    %c0_1 = arith.constant 0 : index
    %3 = vector.load %arg1[%c0, %c0_1] : memref<128x1024xbf16, #tpu.memory_space<vmem>>, vector<128x1024xbf16>
    %c0_2 = arith.constant 0 : index
    %c0_3 = arith.constant 0 : index
    %4 = vector.load %arg2[%c0_2, %c0_3] : memref<1024x512xbf16, #tpu.memory_space<vmem>>, vector<1024x512xbf16>
    %cst = arith.constant dense<0.000000e+00> : vector<128x512xf32>
    %5 = tpu.matmul %3, %4, %cst {dimension_numbers = #tpu.dot_dimension_numbers<[1], [0], [0], [1], [0, 0, 1, 1], [], []>} : vector<128x1024xbf16>, vector<1024x512xbf16>, vector<128x512xf32> -> vector<128x512xf32>
    %c0_4 = arith.constant 0 : index
    %c0_5 = arith.constant 0 : index
    %6 = vector.load %arg3[%c0_4, %c0_5] : memref<1x512xf32, #tpu.memory_space<vmem>>, vector<1x512xf32>
    %7 = vector.broadcast %6 : vector<1x512xf32> to vector<128x512xf32>
    %8 = arith.addf %5, %7 : vector<128x512xf32>
    %cst_6 = arith.constant 0.000000e+00 : f32
    %9 = vector.broadcast %cst_6 : f32 to vector<128x512xf32>
    %10 = arith.maximumf %8, %9 : vector<128x512xf32>
    %11 = arith.truncf %10 : vector<128x512xf32> to vector<128x512xbf16>
    %c0_7 = arith.constant 0 : index
    %c0_8 = arith.constant 0 : index
    %12 = vector.load %arg4[%c0_7, %c0_8] : memref<512x512xbf16, #tpu.memory_space<vmem>>, vector<512x512xbf16>
    %cst_9 = arith.constant dense<0.000000e+00> : vector<128x512xf32>
    %13 = tpu.matmul %11, %12, %cst_9 {dimension_numbers = #tpu.dot_dimension_numbers<[1], [0], [0], [1], [0, 0, 1, 1], [], []>} : vector<128x512xbf16>, vector<512x512xbf16>, vector<128x512xf32> -> vector<128x512xf32>
    %c0_10 = arith.constant 0 : index
    %c0_11 = arith.constant 0 : index
    %14 = vector.load %arg5[%c0_10, %c0_11] : memref<1x512xf32, #tpu.memory_space<vmem>>, vector<1x512xf32>
    %15 = vector.broadcast %14 : vector<1x512xf32> to vector<128x512xf32>
    %16 = arith.addf %13, %15 : vector<128x512xf32>
    %17 = vector.extract_strided_slice %16 {offsets = [0, 0], sizes = [128, 256], strides = [1, 1]} : vector<128x512xf32> to vector<128x256xf32>
    %18 = math.tanh %17 : vector<128x256xf32>
    %19 = vector.extract_strided_slice %16 {offsets = [0, 256], sizes = [128, 256], strides = [1, 1]} : vector<128x512xf32> to vector<128x256xf32>
    %20 = arith.negf %19 : vector<128x256xf32>
    %21 = math.exp %20 : vector<128x256xf32>
    %cst_12 = arith.constant 1.000000e+00 : f32
    %22 = vector.broadcast %cst_12 : f32 to vector<128x256xf32>
    %23 = arith.addf %22, %21 : vector<128x256xf32>
    %24 = arith.divf %22, %23 : vector<128x256xf32>
    %25 = arith.mulf %18, %24 : vector<128x256xf32>
    %26 = arith.truncf %25 : vector<128x256xf32> to vector<128x256xbf16>
    %c0_13 = arith.constant 0 : index
    %c0_14 = arith.constant 0 : index
    %27 = vector.load %arg6[%c0_13, %c0_14] : memref<1x256xbf16, #tpu.memory_space<vmem>>, vector<1x256xbf16>
    %cst_15 = arith.constant dense<0.000000e+00> : vector<1x128xf32>
    %28 = tpu.matmul %27, %26, %cst_15 {dimension_numbers = #tpu.dot_dimension_numbers<[1], [1], [0], [0], [0, 0, 1, 0], [], []>} : vector<1x256xbf16>, vector<128x256xbf16>, vector<1x128xf32> -> vector<1x128xf32>
    %c0_16 = arith.constant 0 : index
    %c0_17 = arith.constant 0 : index
    %29 = vector.load %arg7[%c0_16, %c0_17] : memref<1x1xf32, #tpu.memory_space<vmem>>, vector<1x1xf32>
    %30 = vector.broadcast %29 : vector<1x1xf32> to vector<1x128xf32>
    %31 = arith.addf %28, %30 : vector<1x128xf32>
    %c0_18 = arith.constant 0 : index
    %c0_19 = arith.constant 0 : index
    %32 = vector.load %arg12[%c0_18, %c0_19] : memref<1x128xf32, #tpu.memory_space<vmem>>, vector<1x128xf32>
    tpu.vector_store %arg12[%c0_18, %c0_19], %31 {strides = array<i32>} : memref<1x128xf32, #tpu.memory_space<vmem>>, vector<1x128xf32>,
    %c128_i32 = arith.constant 128 : i32
    %33 = arith.muli %arg0, %c128_i32 : i32
    %34 = tpu.iota {dimensions = array<i32: 1>} : vector<1x128xi32>
    %35 = vector.broadcast %33 : i32 to vector<1x128xi32>
    %36 = arith.addi %35, %34 : vector<1x128xi32>
    %c300_i32 = arith.constant 300 : i32
    %37 = vector.broadcast %c300_i32 : i32 to vector<1x128xi32>
    %38 = arith.cmpi slt, %36, %37 : vector<1x128xi32>
    %cst_20 = arith.constant 0xFF800000 : f32
    %39 = vector.broadcast %cst_20 : f32 to vector<1x128xf32>
    %40 = arith.select %38, %28, %39 : vector<1x128xi1>, vector<1x128xf32>
    %c0_21 = arith.constant 0 : index
    %c0_22 = arith.constant 0 : index
    %41 = vector.load %arg13[%c0_21, %c0_22] : memref<1x1xf32, #tpu.memory_space<vmem>>, vector<1x1xf32>
    %cst_23 = arith.constant dense<0xFF800000> : vector<1xf32>
    %42 = vector.multi_reduction <maximumf>, %40, %cst_23 [1] : vector<1x128xf32> to vector<1xf32>
    %43 = vector.shape_cast %42 : vector<1xf32> to vector<1x1xf32>
    %44 = arith.maximumf %41, %43 : vector<1x1xf32>
    %45 = arith.subf %41, %44 : vector<1x1xf32>
    %46 = math.exp %45 : vector<1x1xf32>
    %47 = vector.broadcast %44 : vector<1x1xf32> to vector<1x128xf32>
    %48 = arith.subf %40, %47 : vector<1x128xf32>
    %49 = math.exp %48 : vector<1x128xf32>
    %c0_24 = arith.constant 0 : index
    %c0_25 = arith.constant 0 : index
    %50 = vector.load %arg14[%c0_24, %c0_25] : memref<1x1xf32, #tpu.memory_space<vmem>>, vector<1x1xf32>
    %51 = arith.mulf %46, %50 : vector<1x1xf32>
    %cst_26 = arith.constant dense<0.000000e+00> : vector<1xf32>
    %52 = vector.multi_reduction <add>, %49, %cst_26 [1] : vector<1x128xf32> to vector<1xf32>
    %53 = vector.shape_cast %52 : vector<1xf32> to vector<1x1xf32>
    %54 = arith.addf %51, %53 : vector<1x1xf32>
    %c0_27 = arith.constant 0 : index
    %c0_28 = arith.constant 0 : index
    %55 = vector.load %arg14[%c0_27, %c0_28] : memref<1x1xf32, #tpu.memory_space<vmem>>, vector<1x1xf32>
    tpu.vector_store %arg14[%c0_27, %c0_28], %54 {strides = array<i32>} : memref<1x1xf32, #tpu.memory_space<vmem>>, vector<1x1xf32>,
    %c0_29 = arith.constant 0 : index
    %c0_30 = arith.constant 0 : index
    %56 = vector.load %arg15[%c0_29, %c0_30] : memref<1x512xf32, #tpu.memory_space<vmem>>, vector<1x512xf32>
    %57 = vector.broadcast %46 : vector<1x1xf32> to vector<1x512xf32>
    %58 = arith.mulf %57, %56 : vector<1x512xf32>
    %59 = arith.truncf %49 : vector<1x128xf32> to vector<1x128xbf16>
    %cst_31 = arith.constant dense<0.000000e+00> : vector<1x512xf32>
    %60 = tpu.matmul %59, %11, %cst_31 {dimension_numbers = #tpu.dot_dimension_numbers<[1], [0], [0], [1], [0, 0, 1, 1], [], []>} : vector<1x128xbf16>, vector<128x512xbf16>, vector<1x512xf32> -> vector<1x512xf32>
    %61 = arith.addf %58, %60 : vector<1x512xf32>
    %c0_32 = arith.constant 0 : index
    %c0_33 = arith.constant 0 : index
    %62 = vector.load %arg15[%c0_32, %c0_33] : memref<1x512xf32, #tpu.memory_space<vmem>>, vector<1x512xf32>
    tpu.vector_store %arg15[%c0_32, %c0_33], %61 {strides = array<i32>} : memref<1x512xf32, #tpu.memory_space<vmem>>, vector<1x512xf32>,
    %c0_34 = arith.constant 0 : index
    %c0_35 = arith.constant 0 : index
    %63 = vector.load %arg13[%c0_34, %c0_35] : memref<1x1xf32, #tpu.memory_space<vmem>>, vector<1x1xf32>
    tpu.vector_store %arg13[%c0_34, %c0_35], %44 {strides = array<i32>} : memref<1x1xf32, #tpu.memory_space<vmem>>, vector<1x1xf32>,
    %c2_i32 = arith.constant 2 : i32
    %64 = arith.cmpi eq, %arg0, %c2_i32 : i32
    %65 = arith.extui %64 : i1 to i32
    %c0_i32_36 = arith.constant 0 : i32
    %66 = arith.cmpi ne, %65, %c0_i32_36 : i32
    scf.if %66 {
      %c0_37 = arith.constant 0 : index
      %c0_38 = arith.constant 0 : index
      %67 = vector.load %arg15[%c0_37, %c0_38] : memref<1x512xf32, #tpu.memory_space<vmem>>, vector<1x512xf32>
      %c0_39 = arith.constant 0 : index
      %c0_40 = arith.constant 0 : index
      %68 = vector.load %arg14[%c0_39, %c0_40] : memref<1x1xf32, #tpu.memory_space<vmem>>, vector<1x1xf32>
      %69 = tpu.reciprocal %68 : vector<1x1xf32> -> vector<1x1xf32>
      %70 = vector.broadcast %69 : vector<1x1xf32> to vector<1x512xf32>
      %71 = arith.mulf %67, %70 : vector<1x512xf32>
      %72 = arith.truncf %71 : vector<1x512xf32> to vector<1x512xbf16>
      %c0_41 = arith.constant 0 : index
      %c0_42 = arith.constant 0 : index
      %73 = vector.load %arg8[%c0_41, %c0_42] : memref<512x2xbf16, #tpu.memory_space<vmem>>, vector<512x2xbf16>
      %cst_43 = arith.constant dense<0.000000e+00> : vector<1x2xf32>
      %74 = tpu.matmul %72, %73, %cst_43 {dimension_numbers = #tpu.dot_dimension_numbers<[1], [0], [0], [1], [0, 0, 1, 1], [], []>} : vector<1x512xbf16>, vector<512x2xbf16>, vector<1x2xf32> -> vector<1x2xf32>
      %c0_44 = arith.constant 0 : index
      %c0_45 = arith.constant 0 : index
      %75 = vector.load %arg9[%c0_44, %c0_45] : memref<1x2xf32, #tpu.memory_space<vmem>>, vector<1x2xf32>
      %76 = arith.addf %74, %75 : vector<1x2xf32>
      %c0_46 = arith.constant 0 : index
      %c0_47 = arith.constant 0 : index
      %77 = vector.load %arg10[%c0_46, %c0_47] : memref<1x2xf32, #tpu.memory_space<vmem>>, vector<1x2xf32>
      tpu.vector_store %arg10[%c0_46, %c0_47], %76 {strides = array<i32>} : memref<1x2xf32, #tpu.memory_space<vmem>>, vector<1x2xf32>,
      %cst_48 = arith.constant dense<0xFF800000> : vector<1xf32>
      %78 = vector.multi_reduction <maximumf>, %76, %cst_48 [1] : vector<1x2xf32> to vector<1xf32>
      %79 = vector.shape_cast %78 : vector<1xf32> to vector<1x1xf32>
      %80 = vector.broadcast %79 : vector<1x1xf32> to vector<1x2xf32>
      %81 = arith.subf %76, %80 : vector<1x2xf32>
      %82 = math.exp %81 : vector<1x2xf32>
      %cst_49 = arith.constant dense<0.000000e+00> : vector<1xf32>
      %83 = vector.multi_reduction <add>, %82, %cst_49 [1] : vector<1x2xf32> to vector<1xf32>
      %84 = vector.shape_cast %83 : vector<1xf32> to vector<1x1xf32>
      %85 = tpu.reciprocal %84 : vector<1x1xf32> -> vector<1x1xf32>
      %86 = vector.broadcast %85 : vector<1x1xf32> to vector<1x2xf32>
      %87 = arith.mulf %82, %86 : vector<1x2xf32>
      %c0_50 = arith.constant 0 : index
      %c0_51 = arith.constant 0 : index
      %88 = vector.load %arg11[%c0_50, %c0_51] : memref<1x2xf32, #tpu.memory_space<vmem>>, vector<1x2xf32>
      tpu.vector_store %arg11[%c0_50, %c0_51], %87 {strides = array<i32>} : memref<1x2xf32, #tpu.memory_space<vmem>>, vector<1x2xf32>,
    } else {
    }
    return
  }
  func.func @transform_0(%arg0: i32) -> (i32, i32) {
    %c0_i32 = arith.constant 0 : i32
    %c0_i32_0 = arith.constant 0 : i32
    return %arg0, %c0_i32 : i32, i32
  }
  func.func @transform_1(%arg0: i32) -> (i32, i32) {
    %c0_i32 = arith.constant 0 : i32
    %c0_i32_0 = arith.constant 0 : i32
    %c0_i32_1 = arith.constant 0 : i32
    return %c0_i32, %c0_i32_0 : i32, i32
  }
  func.func @transform_2(%arg0: i32) -> (i32, i32) {
    %c0_i32 = arith.constant 0 : i32
    %c0_i32_0 = arith.constant 0 : i32
    %c0_i32_1 = arith.constant 0 : i32
    return %c0_i32, %c0_i32_0 : i32, i32
  }
  func.func @transform_3(%arg0: i32) -> (i32, i32) {
    %c0_i32 = arith.constant 0 : i32
    %c0_i32_0 = arith.constant 0 : i32
    %c0_i32_1 = arith.constant 0 : i32
    return %c0_i32, %c0_i32_0 : i32, i32
  }
  func.func @transform_4(%arg0: i32) -> (i32, i32) {
    %c0_i32 = arith.constant 0 : i32
    %c0_i32_0 = arith.constant 0 : i32
    %c0_i32_1 = arith.constant 0 : i32
    return %c0_i32, %c0_i32_0 : i32, i32
  }
  func.func @transform_5(%arg0: i32) -> (i32, i32) {
    %c0_i32 = arith.constant 0 : i32
    %c0_i32_0 = arith.constant 0 : i32
    %c0_i32_1 = arith.constant 0 : i32
    return %c0_i32, %c0_i32_0 : i32, i32
  }
  func.func @transform_6(%arg0: i32) -> (i32, i32) {
    %c0_i32 = arith.constant 0 : i32
    %c0_i32_0 = arith.constant 0 : i32
    %c0_i32_1 = arith.constant 0 : i32
    return %c0_i32, %c0_i32_0 : i32, i32
  }
  func.func @transform_7(%arg0: i32) -> (i32, i32) {
    %c0_i32 = arith.constant 0 : i32
    %c0_i32_0 = arith.constant 0 : i32
    %c0_i32_1 = arith.constant 0 : i32
    return %c0_i32, %c0_i32_0 : i32, i32
  }
  func.func @transform_8(%arg0: i32) -> (i32, i32) {
    %c0_i32 = arith.constant 0 : i32
    %c0_i32_0 = arith.constant 0 : i32
    %c0_i32_1 = arith.constant 0 : i32
    return %c0_i32, %c0_i32_0 : i32, i32
  }
  func.func @transform_9(%arg0: i32) -> (i32, i32) {
    %c0_i32 = arith.constant 0 : i32
    %c0_i32_0 = arith.constant 0 : i32
    %c0_i32_1 = arith.constant 0 : i32
    return %c0_i32, %c0_i32_0 : i32, i32
  }
  func.func @transform_10(%arg0: i32) -> (i32, i32) {
    %c0_i32 = arith.constant 0 : i32
    %c0_i32_0 = arith.constant 0 : i32
    %c0_i32_1 = arith.constant 0 : i32
    return %c0_i32, %c0_i32_0 : i32, i32
  }
  func.func @transform_11(%arg0: i32) -> (i32, i32) {
    %c0_i32 = arith.constant 0 : i32
    %c0_i32_0 = arith.constant 0 : i32
    return %c0_i32, %arg0 : i32, i32
  }
}

</mosaic_0001>

<llo_original>
// kernel: clam_sb_forward.1
$region0: #{clam_sb_forward.1}
  #allocation0 [shape = 'u32[]', space=smem, size = 0x4, offset = 0x4, fixed_abs, tag = 'smem constant byte address 0x4 - core index']
  #allocation1 [shape = 'u32[144,128]{1,0:T(1,128)}', space=vmem, size = 0x12000, scoped, tag = 'internal scratch']
  #allocation2 [shape = 'f32[1,1]{1,0:T(1,128)}', space=vmem, size = 0x200, scoped, tag = 'scratch operand']
  #allocation3 [shape = 'f32[1,1]{1,0:T(1,128)}', space=vmem, size = 0x200, scoped, tag = 'scratch operand']
  #allocation4 [shape = 'f32[1,512]{1,0:T(1,128)}', space=vmem, size = 0x800, scoped, tag = 'scratch operand']
  #allocation5 [shape = 'f32[1,1]{1,0:T(1,128)S(1)}', space=vmem, size = 0x200, scoped, tag = 'scoped memory for clam_sb_forward.1']
  %s0 = inlined_call_operand.vmem [shape: bf16[384,1024], index: 0, kind: input, shape index: {}]
  %s1 = inlined_call_operand.vmem [shape: bf16[1024,512], index: 1, kind: input, shape index: {}]
  %s2 = inlined_call_operand.vmem [shape: f32[1,512], index: 2, kind: input, shape index: {}]
  %s3 = inlined_call_operand.vmem [shape: bf16[512,512], index: 3, kind: input, shape index: {}]
  %s4 = inlined_call_operand.vmem [shape: f32[1,512], index: 4, kind: input, shape index: {}]
  %s5 = inlined_call_operand.vmem [shape: bf16[1,256], index: 5, kind: input, shape index: {}]
  %s6 = inlined_call_operand.<no memory space> [shape: f32[1,1], index: 6, kind: input, shape index: {}]
  %s7 = inlined_call_operand.vmem [shape: bf16[512,2], index: 7, kind: input, shape index: {}]
  %s8 = inlined_call_operand.vmem [shape: f32[1,2], index: 8, kind: input, shape index: {}]
  %s9 = inlined_call_operand.vmem [shape: f32[1,2], index: 9, kind: output, shape index: {0}]
  %s10 = inlined_call_operand.hbm [shape: f32[1,2], index: 10, kind: output, shape index: {1}]
  %s11 = inlined_call_operand.hbm [shape: f32[1,384], index: 11, kind: output, shape index: {2}]
  %12 = xla_tuple %s9, %s10, %s11
  %s13 = sld [smem:[#allocation0]]
  $region93: #{clam_sb_forward.1} parent=0
    _
  %s15 = ssub.s32 1, %s13
  %s16 = scalar_select 0, %s15, %s13
  %v17 = vstv %s6
  %18 = vst [vmem:[#allocation5] sm:$0x1] %v17
  $region1: #{clam_sb_forward.1} parent=0
    #allocation6 [shape = 'u8[512]{0}', space=vmem, size = 0x400, scoped, tag = 'output window, operand 1, single buffered']
    #allocation7 [shape = 's32[2]{0}', space=sflag, size = 0x8, scoped, tag = 'scoped memory for clam_sb_forward.1']
    #allocation8 [shape = 'u8[1024]{0}', space=vmem, size = 0x400, scoped, tag = 'output window, operand 2']
    #allocation9 [shape = 's32[2]{0}', space=sflag, size = 0x8, scoped, tag = 'scoped memory for clam_sb_forward.1']
    %19 = vsyncpa [#allocation7], 0
    %20 = vsyncpa [#allocation9], 0
    %s21 = scalar_lea.sflag [#allocation9], 1
    %22 = vsyncpa %s21, 0
    loop: start=0, step=1, limit=5
    $region2: #{clam_sb_forward.1} parent=1 // loop_pre_header
      _
    $region3: #{clam_sb_forward.1} parent=1 // loop_header
      %s24 = sphi 0, %s28
      %p25 = scmp.ge.s32.totalorder %s24, 5
      %s34 = sphi 0, %s36
      %s37 = sphi 0, %s34
      %s38 = sphi 0, %s37
      %s54 = sphi 0, %s38
      %s58 = sphi 0, %s58
      %s60 = sphi 0, %s58
      %s61 = sphi 0, %s60
      %s75 = sphi 0, %s61
      %s79 = sphi 0, %s79
      %s81 = sphi 0, %s79
      %s82 = sphi 0, %s81
      %s96 = sphi 0, %s82
      %s100 = sphi 0, %s100
      %s102 = sphi 0, %s100
      %s103 = sphi 0, %s102
      %s117 = sphi 0, %s103
      %s121 = sphi 0, %s121
      %s123 = sphi 0, %s121
      %s124 = sphi 0, %s123
      %s138 = sphi 0, %s124
      %s142 = sphi 0, %s142
      %s144 = sphi 0, %s142
      %s145 = sphi 0, %s144
      %s159 = sphi 0, %s145
      %s163 = sphi 0, %s163
      %s165 = sphi 0, %s163
      %s166 = sphi 0, %s165
      %s180 = sphi 0, %s166
      %s184 = sphi 0, %s184
      %s186 = sphi 0, %s184
      %s187 = sphi 0, %s186
      %s201 = sphi 0, %s187
      %s205 = sphi 0, %s205
      %s207 = sphi 0, %s205
      %s208 = sphi 0, %s207
      %s222 = sphi 0, %s208
      %s226 = sphi 0, %s226
      %s228 = sphi 0, %s226
      %s229 = sphi 0, %s228
      %s243 = sphi 0, %s229
      %s247 = sphi 0, %s247
      %s249 = sphi 0, %s247
      %s250 = sphi 0, %s249
      %s264 = sphi 0, %s250
      %s270 = sphi 0, %s272
      %s273 = sphi 0, %s270
      %s274 = sphi 0, %s273
      %s290 = sphi 0, %s274
    $region4: #{clam_sb_forward.1} parent=1 // loop_header_branch
      %27 = sbr.rel (%p25) target = $region8
    $region5: #{clam_sb_forward.1} parent=1 // loop_body
      %s29 = ssub.s32 %s24, 1
      %s30 = ssub.s32 %s24, 2
      %s31 = sadd.s32 %s24, 1
      %s32 = ssub.s32 %s24, %s31
      %p33 = scmp.eq.s32.totalorder %s32, 0
      %s35 = sadd.s32 %s34, 1
      %s36 = scalar_select %p33, %s34, %s35
      %p39 = pneg %p33
      %p40 = scmp.eq.s32.totalorder %s24, 2
      %p41 = por %p39, %p40
      %p42 = scmp.ne.s32.totalorder %s34, %s37
      %p43 = scmp.eq.s32.totalorder %s24, 0
      %p44 = por %p42, %p43
      %p45 = scmp.ne.s32.totalorder %s34, %s37
      %p46 = scmp.eq.s32.totalorder %s29, 2
      %p47 = por %p45, %p46
      %p48 = scmp.ne.s32.totalorder %s37, %s38
      %p49 = scmp.eq.s32.totalorder %s29, 0
      %p50 = por %p48, %p49
      %p51 = scmp.ne.s32.totalorder %s37, %s38
      %p52 = scmp.eq.s32.totalorder %s30, 2
      %p53 = por %p51, %p52
      %p55 = scmp.ne.s32.totalorder %s38, %s54
      %p56 = scmp.eq.s32.totalorder %s30, 0
      %p57 = por %p55, %p56
      %s59 = sadd.s32 %s58, 1
      %p62 = scmp.eq.s32.totalorder %s24, 2
      %p63 = scmp.ne.s32.totalorder %s58, %s60
      %p64 = scmp.eq.s32.totalorder %s24, 0
      %p65 = por %p63, %p64
      %p66 = scmp.ne.s32.totalorder %s58, %s60
      %p67 = scmp.eq.s32.totalorder %s29, 2
      %p68 = por %p66, %p67
      %p69 = scmp.ne.s32.totalorder %s60, %s61
      %p70 = scmp.eq.s32.totalorder %s29, 0
      %p71 = por %p69, %p70
      %p72 = scmp.ne.s32.totalorder %s60, %s61
      %p73 = scmp.eq.s32.totalorder %s30, 2
      %p74 = por %p72, %p73
      %p76 = scmp.ne.s32.totalorder %s61, %s75
      %p77 = scmp.eq.s32.totalorder %s30, 0
      %p78 = por %p76, %p77
      %s80 = sadd.s32 %s79, 1
      %p83 = scmp.eq.s32.totalorder %s24, 2
      %p84 = scmp.ne.s32.totalorder %s79, %s81
      %p85 = scmp.eq.s32.totalorder %s24, 0
      %p86 = por %p84, %p85
      %p87 = scmp.ne.s32.totalorder %s79, %s81
      %p88 = scmp.eq.s32.totalorder %s29, 2
      %p89 = por %p87, %p88
      %p90 = scmp.ne.s32.totalorder %s81, %s82
      %p91 = scmp.eq.s32.totalorder %s29, 0
      %p92 = por %p90, %p91
      %p93 = scmp.ne.s32.totalorder %s81, %s82
      %p94 = scmp.eq.s32.totalorder %s30, 2
      %p95 = por %p93, %p94
      %p97 = scmp.ne.s32.totalorder %s82, %s96
      %p98 = scmp.eq.s32.totalorder %s30, 0
      %p99 = por %p97, %p98
      %s101 = sadd.s32 %s100, 1
      %p104 = scmp.eq.s32.totalorder %s24, 2
      %p105 = scmp.ne.s32.totalorder %s100, %s102
      %p106 = scmp.eq.s32.totalorder %s24, 0
      %p107 = por %p105, %p106
      %p108 = scmp.ne.s32.totalorder %s100, %s102
      %p109 = scmp.eq.s32.totalorder %s29, 2
      %p110 = por %p108, %p109
      %p111 = scmp.ne.s32.totalorder %s102, %s103
      %p112 = scmp.eq.s32.totalorder %s29, 0
      %p113 = por %p111, %p112
      %p114 = scmp.ne.s32.totalorder %s102, %s103
      %p115 = scmp.eq.s32.totalorder %s30, 2
      %p116 = por %p114, %p115
      %p118 = scmp.ne.s32.totalorder %s103, %s117
      %p119 = scmp.eq.s32.totalorder %s30, 0
      %p120 = por %p118, %p119
      %s122 = sadd.s32 %s121, 1
      %p125 = scmp.eq.s32.totalorder %s24, 2
      %p126 = scmp.ne.s32.totalorder %s121, %s123
      %p127 = scmp.eq.s32.totalorder %s24, 0
      %p128 = por %p126, %p127
      %p129 = scmp.ne.s32.totalorder %s121, %s123
      %p130 = scmp.eq.s32.totalorder %s29, 2
      %p131 = por %p129, %p130
      %p132 = scmp.ne.s32.totalorder %s123, %s124
      %p133 = scmp.eq.s32.totalorder %s29, 0
      %p134 = por %p132, %p133
      %p135 = scmp.ne.s32.totalorder %s123, %s124
      %p136 = scmp.eq.s32.totalorder %s30, 2
      %p137 = por %p135, %p136
      %p139 = scmp.ne.s32.totalorder %s124, %s138
      %p140 = scmp.eq.s32.totalorder %s30, 0
      %p141 = por %p139, %p140
      %s143 = sadd.s32 %s142, 1
      %p146 = scmp.eq.s32.totalorder %s24, 2
      %p147 = scmp.ne.s32.totalorder %s142, %s144
      %p148 = scmp.eq.s32.totalorder %s24, 0
      %p149 = por %p147, %p148
      %p150 = scmp.ne.s32.totalorder %s142, %s144
      %p151 = scmp.eq.s32.totalorder %s29, 2
      %p152 = por %p150, %p151
      %p153 = scmp.ne.s32.totalorder %s144, %s145
      %p154 = scmp.eq.s32.totalorder %s29, 0
      %p155 = por %p153, %p154
      %p156 = scmp.ne.s32.totalorder %s144, %s145
      %p157 = scmp.eq.s32.totalorder %s30, 2
      %p158 = por %p156, %p157
      %p160 = scmp.ne.s32.totalorder %s145, %s159
      %p161 = scmp.eq.s32.totalorder %s30, 0
      %p162 = por %p160, %p161
      %s164 = sadd.s32 %s163, 1
      %p167 = scmp.eq.s32.totalorder %s24, 2
      %p168 = scmp.ne.s32.totalorder %s163, %s165
      %p169 = scmp.eq.s32.totalorder %s24, 0
      %p170 = por %p168, %p169
      %p171 = scmp.ne.s32.totalorder %s163, %s165
      %p172 = scmp.eq.s32.totalorder %s29, 2
      %p173 = por %p171, %p172
      %p174 = scmp.ne.s32.totalorder %s165, %s166
      %p175 = scmp.eq.s32.totalorder %s29, 0
      %p176 = por %p174, %p175
      %p177 = scmp.ne.s32.totalorder %s165, %s166
      %p178 = scmp.eq.s32.totalorder %s30, 2
      %p179 = por %p177, %p178
      %p181 = scmp.ne.s32.totalorder %s166, %s180
      %p182 = scmp.eq.s32.totalorder %s30, 0
      %p183 = por %p181, %p182
      %s185 = sadd.s32 %s184, 1
      %p188 = scmp.eq.s32.totalorder %s24, 2
      %p189 = scmp.ne.s32.totalorder %s184, %s186
      %p190 = scmp.eq.s32.totalorder %s24, 0
      %p191 = por %p189, %p190
      %p192 = scmp.ne.s32.totalorder %s184, %s186
      %p193 = scmp.eq.s32.totalorder %s29, 2
      %p194 = por %p192, %p193
      %p195 = scmp.ne.s32.totalorder %s186, %s187
      %p196 = scmp.eq.s32.totalorder %s29, 0
      %p197 = por %p195, %p196
      %p198 = scmp.ne.s32.totalorder %s186, %s187
      %p199 = scmp.eq.s32.totalorder %s30, 2
      %p200 = por %p198, %p199
      %p202 = scmp.ne.s32.totalorder %s187, %s201
      %p203 = scmp.eq.s32.totalorder %s30, 0
      %p204 = por %p202, %p203
      %s206 = sadd.s32 %s205, 1
      %p209 = scmp.eq.s32.totalorder %s24, 2
      %p210 = scmp.ne.s32.totalorder %s205, %s207
      %p211 = scmp.eq.s32.totalorder %s24, 0
      %p212 = por %p210, %p211
      %p213 = scmp.ne.s32.totalorder %s205, %s207
      %p214 = scmp.eq.s32.totalorder %s29, 2
      %p215 = por %p213, %p214
      %p216 = scmp.ne.s32.totalorder %s207, %s208
      %p217 = scmp.eq.s32.totalorder %s29, 0
      %p218 = por %p216, %p217
      %p219 = scmp.ne.s32.totalorder %s207, %s208
      %p220 = scmp.eq.s32.totalorder %s30, 2
      %p221 = por %p219, %p220
      %p223 = scmp.ne.s32.totalorder %s208, %s222
      %p224 = scmp.eq.s32.totalorder %s30, 0
      %p225 = por %p223, %p224
      %s227 = sadd.s32 %s226, 1
      %p230 = scmp.eq.s32.totalorder %s24, 2
      %p231 = scmp.ne.s32.totalorder %s226, %s228
      %p232 = scmp.eq.s32.totalorder %s24, 0
      %p233 = por %p231, %p232
      %p234 = scmp.ne.s32.totalorder %s226, %s228
      %p235 = scmp.eq.s32.totalorder %s29, 2
      %p236 = por %p234, %p235
      %p237 = scmp.ne.s32.totalorder %s228, %s229
      %p238 = scmp.eq.s32.totalorder %s29, 0
      %p239 = por %p237, %p238
      %p240 = scmp.ne.s32.totalorder %s228, %s229
      %p241 = scmp.eq.s32.totalorder %s30, 2
      %p242 = por %p240, %p241
      %p244 = scmp.ne.s32.totalorder %s229, %s243
      %p245 = scmp.eq.s32.totalorder %s30, 0
      %p246 = por %p244, %p245
      %s248 = sadd.s32 %s247, 1
      %p251 = scmp.eq.s32.totalorder %s24, 2
      %p252 = scmp.ne.s32.totalorder %s247, %s249
      %p253 = scmp.eq.s32.totalorder %s24, 0
      %p254 = por %p252, %p253
      %p255 = scmp.ne.s32.totalorder %s247, %s249
      %p256 = scmp.eq.s32.totalorder %s29, 2
      %p257 = por %p255, %p256
      %p258 = scmp.ne.s32.totalorder %s249, %s250
      %p259 = scmp.eq.s32.totalorder %s29, 0
      %p260 = por %p258, %p259
      %p261 = scmp.ne.s32.totalorder %s249, %s250
      %p262 = scmp.eq.s32.totalorder %s30, 2
      %p263 = por %p261, %p262
      %p265 = scmp.ne.s32.totalorder %s250, %s264
      %p266 = scmp.eq.s32.totalorder %s30, 0
      %p267 = por %p265, %p266
      %s268 = ssub.s32 %s24, %s31
      %p269 = scmp.eq.s32.totalorder %s268, 0
      %s271 = sadd.s32 %s270, 1
      %s272 = scalar_select %p269, %s270, %s271
      %p275 = pneg %p269
      %p276 = scmp.eq.s32.totalorder %s24, 2
      %p277 = por %p275, %p276
      %p278 = scmp.ne.s32.totalorder %s270, %s273
      %p279 = scmp.eq.s32.totalorder %s24, 0
      %p280 = por %p278, %p279
      %p281 = scmp.ne.s32.totalorder %s270, %s273
      %p282 = scmp.eq.s32.totalorder %s29, 2
      %p283 = por %p281, %p282
      %p284 = scmp.ne.s32.totalorder %s273, %s274
      %p285 = scmp.eq.s32.totalorder %s29, 0
      %p286 = por %p284, %p285
      %p287 = scmp.ne.s32.totalorder %s273, %s274
      %p288 = scmp.eq.s32.totalorder %s30, 2
      %p289 = por %p287, %p288
      %p291 = scmp.ne.s32.totalorder %s274, %s290
      %p292 = scmp.eq.s32.totalorder %s30, 0
      %p293 = por %p291, %p292
      %p294 = scmp.le.s32.totalorder 1, %s24
      %p295 = scmp.lt.s32.totalorder %s24, 4
      %p296 = pnand %p294, %p295
      %p297 = pneg %p296
      // Predicated region
      $region9: #{clam_sb_forward.1} parent=5 // pred_check
        _
      $region10: #{clam_sb_forward.1} parent=5 // pred_check_branch
        %299 = sbr.rel (%p296) target = $region12
      $region11: #{clam_sb_forward.1} parent=5 // pred_region
        %s300 = ssub.s32 %s24, 1
        // Predicated region
        $region13: #{clam_sb_forward.1} parent=11 // pred_check
          %p301 = pneg %p71
        $region14: #{clam_sb_forward.1} parent=11 // pred_check_branch
          %303 = sbr.rel (%p301) target = $region16
        $region15: #{clam_sb_forward.1} parent=11 // pred_region
          _
        $region16: #{clam_sb_forward.1} parent=11 // pred_fallthru
          _
        // Predicated region
        $region17: #{clam_sb_forward.1} parent=11 // pred_check
          %p304 = pneg %p92
        $region18: #{clam_sb_forward.1} parent=11 // pred_check_branch
          %306 = sbr.rel (%p304) target = $region20
        $region19: #{clam_sb_forward.1} parent=11 // pred_region
          _
        $region20: #{clam_sb_forward.1} parent=11 // pred_fallthru
          _
        // Predicated region
        $region21: #{clam_sb_forward.1} parent=11 // pred_check
          %p307 = pneg %p113
        $region22: #{clam_sb_forward.1} parent=11 // pred_check_branch
          %309 = sbr.rel (%p307) target = $region24
        $region23: #{clam_sb_forward.1} parent=11 // pred_region
          _
        $region24: #{clam_sb_forward.1} parent=11 // pred_fallthru
          _
        // Predicated region
        $region25: #{clam_sb_forward.1} parent=11 // pred_check
          %p310 = pneg %p134
        $region26: #{clam_sb_forward.1} parent=11 // pred_check_branch
          %312 = sbr.rel (%p310) target = $region28
        $region27: #{clam_sb_forward.1} parent=11 // pred_region
          _
        $region28: #{clam_sb_forward.1} parent=11 // pred_fallthru
          _
        // Predicated region
        $region29: #{clam_sb_forward.1} parent=11 // pred_check
          %p313 = pneg %p155
        $region30: #{clam_sb_forward.1} parent=11 // pred_check_branch
          %315 = sbr.rel (%p313) target = $region32
        $region31: #{clam_sb_forward.1} parent=11 // pred_region
          _
        $region32: #{clam_sb_forward.1} parent=11 // pred_fallthru
          _
        // Predicated region
        $region33: #{clam_sb_forward.1} parent=11 // pred_check
          %p316 = pneg %p176
        $region34: #{clam_sb_forward.1} parent=11 // pred_check_branch
          %318 = sbr.rel (%p316) target = $region36
        $region35: #{clam_sb_forward.1} parent=11 // pred_region
          _
        $region36: #{clam_sb_forward.1} parent=11 // pred_fallthru
          _
        // Predicated region
        $region37: #{clam_sb_forward.1} parent=11 // pred_check
          %p319 = pneg %p197
        $region38: #{clam_sb_forward.1} parent=11 // pred_check_branch
          %321 = sbr.rel (%p319) target = $region40
        $region39: #{clam_sb_forward.1} parent=11 // pred_region
          _
        $region40: #{clam_sb_forward.1} parent=11 // pred_fallthru
          _
        // Predicated region
        $region41: #{clam_sb_forward.1} parent=11 // pred_check
          %p322 = pneg %p218
        $region42: #{clam_sb_forward.1} parent=11 // pred_check_branch
          %324 = sbr.rel (%p322) target = $region44
        $region43: #{clam_sb_forward.1} parent=11 // pred_region
          _
        $region44: #{clam_sb_forward.1} parent=11 // pred_fallthru
          _
      $region12: #{clam_sb_forward.1} parent=5 // pred_fallthru
        _
      %p325 = scmp.lt.s32.totalorder %s24, 3
      // Predicated region
      $region45: #{clam_sb_forward.1} parent=5 // pred_check
        %p326 = pneg %p325
      $region46: #{clam_sb_forward.1} parent=5 // pred_check_branch
        %328 = sbr.rel (%p326) target = $region48
      $region47: #{clam_sb_forward.1} parent=5 // pred_region
        // Predicated region
        $region49: #{clam_sb_forward.1} parent=47 // pred_check
          %p329 = pneg %p44
        $region50: #{clam_sb_forward.1} parent=47 // pred_check_branch
          %331 = sbr.rel (%p329) target = $region52
        $region51: #{clam_sb_forward.1} parent=47 // pred_region
          %s332 = smul.u32 16, %s24
          %p333 = scmp.lt.s32.totalorder %s332, 47
          %s334 = scalar_select %p333, %s332, 47
          %s335 = smul.addr %s334, 8
          %s336 = smul.addr %s335, 4
          %s337 = scalar_lea.vmem %s0, %s336
          %s338 = smul.u32 16, %s24
        $region52: #{clam_sb_forward.1} parent=47 // pred_fallthru
          _
      $region48: #{clam_sb_forward.1} parent=5 // pred_fallthru
        _
      %p339 = scmp.le.s32.totalorder 1, %s24
      %p340 = scmp.lt.s32.totalorder %s24, 4
      %p341 = pnand %p339, %p340
      %p342 = pneg %p341
      // Predicated region
      $region53: #{clam_sb_forward.1} parent=5 // pred_check
        _
      $region54: #{clam_sb_forward.1} parent=5 // pred_check_branch
        %344 = sbr.rel (%p341) target = $region56
      $region55: #{clam_sb_forward.1} parent=5 // pred_region
        %s345 = ssub.s32 %s24, 1
        %s346 = smul.u32 16, %s29
        %p347 = scmp.lt.s32.totalorder %s346, 47
        %s348 = scalar_select %p347, %s346, 47
        %s349 = smul.addr %s348, 8
        %s350 = smul.addr %s349, 4
        %s351 = scalar_lea.vmem %s0, %s350
        %p352 = pneg %p50
        %p353 = pneg %p47
        %p354 = pneg %p71
        %p355 = pneg %p68
        %p356 = pneg %p92
        %p357 = pneg %p89
        %p358 = pneg %p113
        %p359 = pneg %p110
        %p360 = pneg %p134
        %p361 = pneg %p131
        %p362 = pneg %p155
        %p363 = pneg %p152
        %p364 = pneg %p176
        %p365 = pneg %p173
        %p366 = pneg %p197
        %p367 = pneg %p194
        %p368 = pneg %p218
        %p369 = pneg %p215
        %p370 = pneg %p239
        %p371 = pneg %p236
        %p372 = pneg %p260
        %p373 = pneg %p257
        %p374 = pneg %p286
        %p375 = pneg %p283
        %s376 = sand.u32 %s273, 1
        %s377 = scalar_lea.sflag [#allocation9], %s376
        %s378 = sand.u32 %s273, 1
        %s379 = scalar_lea.vmem [#allocation8], %s378
        %s380 = smul.u32 16, %s29
        %p381 = scmp.lt.s32.totalorder %s380, 47
        %s382 = scalar_select %p381, %s380, 47
        %s383 = smul.addr %s382, 8
        %s384 = smul.addr %s383, 4
        %s385 = scalar_lea.vmem %s0, %s384
        %s386 = smul.u32 16, %s29
        %p388 = scmp.eq.s32.totalorder %s29, 0
        // Predicated region
        $region57: #{clam_sb_forward.1} parent=55 // pred_check
          %p389 = pneg %p388
        $region58: #{clam_sb_forward.1} parent=55 // pred_check_branch
          %391 = sbr.rel (%p389) target = $region60
        $region59: #{clam_sb_forward.1} parent=55 // pred_region
          %vm392 = vcmask 0
          %393 = vst.msk [vmem:[#allocation2] sm:$0x1] %vm392, -inf
          %394 = vst.msk [vmem:[#allocation3] sm:$0x1] %vm392, 0.0
          %v395 = vlaneseq
          %vm396 = vcmp.ge.s32.totalorder %v395, 0
          %vm397 = vcmp.lt.s32.totalorder %v395, 512
          %vm398 = vmand %vm396, %vm397
          %399 = vst.msk [vmem:[#allocation4] sm:$0xf] %vm398, 0.0
        $region60: #{clam_sb_forward.1} parent=55 // pred_fallthru
          _
        %v400 = vld [vmem:[%s385] sm:$0xff]
        %v401 = vld [vmem:[%s385 + $0x8] sm:$0xff]
        %v402 = vld [vmem:[%s385 + $0x10] sm:$0xff]
        %v403 = vld [vmem:[%s385 + $0x18] sm:$0xff]
        %v404 = vld [vmem:[%s385 + $0x20] sm:$0xff]
        %v405 = vld [vmem:[%s385 + $0x28] sm:$0xff]
        %v406 = vld [vmem:[%s385 + $0x30] sm:$0xff]
        %v407 = vld [vmem:[%s385 + $0x38] sm:$0xff]
        %v408 = vld [vmem:[%s385 + $0x40] sm:$0xff]
        %v409 = vld [vmem:[%s385 + $0x48] sm:$0xff]
        %v410 = vld [vmem:[%s385 + $0x50] sm:$0xff]
        %v411 = vld [vmem:[%s385 + $0x58] sm:$0xff]
        %v412 = vld [vmem:[%s385 + $0x60] sm:$0xff]
        %v413 = vld [vmem:[%s385 + $0x68] sm:$0xff]
        %v414 = vld [vmem:[%s385 + $0x70] sm:$0xff]
        %v415 = vld [vmem:[%s385 + $0x78] sm:$0xff]
        %v416 = vld [vmem:[%s385 + $0x80] sm:$0xff]
        %v417 = vld [vmem:[%s385 + $0x88] sm:$0xff]
        %v418 = vld [vmem:[%s385 + $0x90] sm:$0xff]
        %v419 = vld [vmem:[%s385 + $0x98] sm:$0xff]
        %v420 = vld [vmem:[%s385 + $0xa0] sm:$0xff]
        %v421 = vld [vmem:[%s385 + $0xa8] sm:$0xff]
        %v422 = vld [vmem:[%s385 + $0xb0] sm:$0xff]
        %v423 = vld [vmem:[%s385 + $0xb8] sm:$0xff]
        %v424 = vld [vmem:[%s385 + $0xc0] sm:$0xff]
        %v425 = vld [vmem:[%s385 + $0xc8] sm:$0xff]
        %v426 = vld [vmem:[%s385 + $0xd0] sm:$0xff]
        %v427 = vld [vmem:[%s385 + $0xd8] sm:$0xff]
        %v428 = vld [vmem:[%s385 + $0xe0] sm:$0xff]
        %v429 = vld [vmem:[%s385 + $0xe8] sm:$0xff]
        %v430 = vld [vmem:[%s385 + $0xf0] sm:$0xff]
        %v431 = vld [vmem:[%s385 + $0xf8] sm:$0xff]
        %v432 = vld [vmem:[%s385 + $0x100] sm:$0xff]
        %v433 = vld [vmem:[%s385 + $0x108] sm:$0xff]
        %v434 = vld [vmem:[%s385 + $0x110] sm:$0xff]
        %v435 = vld [vmem:[%s385 + $0x118] sm:$0xff]
        %v436 = vld [vmem:[%s385 + $0x120] sm:$0xff]
        %v437 = vld [vmem:[%s385 + $0x128] sm:$0xff]
        %v438 = vld [vmem:[%s385 + $0x130] sm:$0xff]
        %v439 = vld [vmem:[%s385 + $0x138] sm:$0xff]
        %v440 = vld [vmem:[%s385 + $0x140] sm:$0xff]
        %v441 = vld [vmem:[%s385 + $0x148] sm:$0xff]
        %v442 = vld [vmem:[%s385 + $0x150] sm:$0xff]
        %v443 = vld [vmem:[%s385 + $0x158] sm:$0xff]
        %v444 = vld [vmem:[%s385 + $0x160] sm:$0xff]
        %v445 = vld [vmem:[%s385 + $0x168] sm:$0xff]
        %v446 = vld [vmem:[%s385 + $0x170] sm:$0xff]
        %v447 = vld [vmem:[%s385 + $0x178] sm:$0xff]
        %v448 = vld [vmem:[%s385 + $0x180] sm:$0xff]
        %v449 = vld [vmem:[%s385 + $0x188] sm:$0xff]
        %v450 = vld [vmem:[%s385 + $0x190] sm:$0xff]
        %v451 = vld [vmem:[%s385 + $0x198] sm:$0xff]
        %v452 = vld [vmem:[%s385 + $0x1a0] sm:$0xff]
        %v453 = vld [vmem:[%s385 + $0x1a8] sm:$0xff]
        %v454 = vld [vmem:[%s385 + $0x1b0] sm:$0xff]
        %v455 = vld [vmem:[%s385 + $0x1b8] sm:$0xff]
        %v456 = vld [vmem:[%s385 + $0x1c0] sm:$0xff]
        %v457 = vld [vmem:[%s385 + $0x1c8] sm:$0xff]
        %v458 = vld [vmem:[%s385 + $0x1d0] sm:$0xff]
        %v459 = vld [vmem:[%s385 + $0x1d8] sm:$0xff]
        %v460 = vld [vmem:[%s385 + $0x1e0] sm:$0xff]
        %v461 = vld [vmem:[%s385 + $0x1e8] sm:$0xff]
        %v462 = vld [vmem:[%s385 + $0x1f0] sm:$0xff]
        %v463 = vld [vmem:[%s385 + $0x1f8] sm:$0xff]
        %v464 = vld [vmem:[%s1] sm:$0xff]
        %v465 = vld [vmem:[%s1 + $0x8] sm:$0xff]
        %v466 = vld [vmem:[%s1 + $0x10] sm:$0xff]
        %v467 = vld [vmem:[%s1 + $0x18] sm:$0xff]
        %v468 = vld [vmem:[%s1 + $0x20] sm:$0xff]
        %v469 = vld [vmem:[%s1 + $0x28] sm:$0xff]
        %v470 = vld [vmem:[%s1 + $0x30] sm:$0xff]
        %v471 = vld [vmem:[%s1 + $0x38] sm:$0xff]
        %v472 = vld [vmem:[%s1 + $0x40] sm:$0xff]
        %v473 = vld [vmem:[%s1 + $0x48] sm:$0xff]
        %v474 = vld [vmem:[%s1 + $0x50] sm:$0xff]
        %v475 = vld [vmem:[%s1 + $0x58] sm:$0xff]
        %v476 = vld [vmem:[%s1 + $0x60] sm:$0xff]
        %v477 = vld [vmem:[%s1 + $0x68] sm:$0xff]
        %v478 = vld [vmem:[%s1 + $0x70] sm:$0xff]
        %v479 = vld [vmem:[%s1 + $0x78] sm:$0xff]
        %v480 = vld [vmem:[%s1 + $0x80] sm:$0xff]
        %v481 = vld [vmem:[%s1 + $0x88] sm:$0xff]
        %v482 = vld [vmem:[%s1 + $0x90] sm:$0xff]
        %v483 = vld [vmem:[%s1 + $0x98] sm:$0xff]
        %v484 = vld [vmem:[%s1 + $0xa0] sm:$0xff]
        %v485 = vld [vmem:[%s1 + $0xa8] sm:$0xff]
        %v486 = vld [vmem:[%s1 + $0xb0] sm:$0xff]
        %v487 = vld [vmem:[%s1 + $0xb8] sm:$0xff]
        %v488 = vld [vmem:[%s1 + $0xc0] sm:$0xff]
        %v489 = vld [vmem:[%s1 + $0xc8] sm:$0xff]
        %v490 = vld [vmem:[%s1 + $0xd0] sm:$0xff]
        %v491 = vld [vmem:[%s1 + $0xd8] sm:$0xff]
        %v492 = vld [vmem:[%s1 + $0xe0] sm:$0xff]
        %v493 = vld [vmem:[%s1 + $0xe8] sm:$0xff]
        %v494 = vld [vmem:[%s1 + $0xf0] sm:$0xff]
        %v495 = vld [vmem:[%s1 + $0xf8] sm:$0xff]
        %v496 = vld [vmem:[%s1 + $0x100] sm:$0xff]
        %v497 = vld [vmem:[%s1 + $0x108] sm:$0xff]
        %v498 = vld [vmem:[%s1 + $0x110] sm:$0xff]
        %v499 = vld [vmem:[%s1 + $0x118] sm:$0xff]
        %v500 = vld [vmem:[%s1 + $0x120] sm:$0xff]
        %v501 = vld [vmem:[%s1 + $0x128] sm:$0xff]
        %v502 = vld [vmem:[%s1 + $0x130] sm:$0xff]
        %v503 = vld [vmem:[%s1 + $0x138] sm:$0xff]
        %v504 = vld [vmem:[%s1 + $0x140] sm:$0xff]
        %v505 = vld [vmem:[%s1 + $0x148] sm:$0xff]
        %v506 = vld [vmem:[%s1 + $0x150] sm:$0xff]
        %v507 = vld [vmem:[%s1 + $0x158] sm:$0xff]
        %v508 = vld [vmem:[%s1 + $0x160] sm:$0xff]
        %v509 = vld [vmem:[%s1 + $0x168] sm:$0xff]
        %v510 = vld [vmem:[%s1 + $0x170] sm:$0xff]
        %v511 = vld [vmem:[%s1 + $0x178] sm:$0xff]
        %v512 = vld [vmem:[%s1 + $0x180] sm:$0xff]
        %v513 = vld [vmem:[%s1 + $0x188] sm:$0xff]
        %v514 = vld [vmem:[%s1 + $0x190] sm:$0xff]
        %v515 = vld [vmem:[%s1 + $0x198] sm:$0xff]
        %v516 = vld [vmem:[%s1 + $0x1a0] sm:$0xff]
        %v517 = vld [vmem:[%s1 + $0x1a8] sm:$0xff]
        %v518 = vld [vmem:[%s1 + $0x1b0] sm:$0xff]
        %v519 = vld [vmem:[%s1 + $0x1b8] sm:$0xff]
        %v520 = vld [vmem:[%s1 + $0x1c0] sm:$0xff]
        %v521 = vld [vmem:[%s1 + $0x1c8] sm:$0xff]
        %v522 = vld [vmem:[%s1 + $0x1d0] sm:$0xff]
        %v523 = vld [vmem:[%s1 + $0x1d8] sm:$0xff]
        %v524 = vld [vmem:[%s1 + $0x1e0] sm:$0xff]
        %v525 = vld [vmem:[%s1 + $0x1e8] sm:$0xff]
        %v526 = vld [vmem:[%s1 + $0x1f0] sm:$0xff]
        %v527 = vld [vmem:[%s1 + $0x1f8] sm:$0xff]
        %v528 = vld [vmem:[%s1 + $0x200] sm:$0xff]
        %v529 = vld [vmem:[%s1 + $0x208] sm:$0xff]
        %v530 = vld [vmem:[%s1 + $0x210] sm:$0xff]
        %v531 = vld [vmem:[%s1 + $0x218] sm:$0xff]
        %v532 = vld [vmem:[%s1 + $0x220] sm:$0xff]
        %v533 = vld [vmem:[%s1 + $0x228] sm:$0xff]
        %v534 = vld [vmem:[%s1 + $0x230] sm:$0xff]
        %v535 = vld [vmem:[%s1 + $0x238] sm:$0xff]
        %v536 = vld [vmem:[%s1 + $0x240] sm:$0xff]
        %v537 = vld [vmem:[%s1 + $0x248] sm:$0xff]
        %v538 = vld [vmem:[%s1 + $0x250] sm:$0xff]
        %v539 = vld [vmem:[%s1 + $0x258] sm:$0xff]
        %v540 = vld [vmem:[%s1 + $0x260] sm:$0xff]
        %v541 = vld [vmem:[%s1 + $0x268] sm:$0xff]
        %v542 = vld [vmem:[%s1 + $0x270] sm:$0xff]
        %v543 = vld [vmem:[%s1 + $0x278] sm:$0xff]
        %v544 = vld [vmem:[%s1 + $0x280] sm:$0xff]
        %v545 = vld [vmem:[%s1 + $0x288] sm:$0xff]
        %v546 = vld [vmem:[%s1 + $0x290] sm:$0xff]
        %v547 = vld [vmem:[%s1 + $0x298] sm:$0xff]
        %v548 = vld [vmem:[%s1 + $0x2a0] sm:$0xff]
        %v549 = vld [vmem:[%s1 + $0x2a8] sm:$0xff]
        %v550 = vld [vmem:[%s1 + $0x2b0] sm:$0xff]
        %v551 = vld [vmem:[%s1 + $0x2b8] sm:$0xff]
        %v552 = vld [vmem:[%s1 + $0x2c0] sm:$0xff]
        %v553 = vld [vmem:[%s1 + $0x2c8] sm:$0xff]
        %v554 = vld [vmem:[%s1 + $0x2d0] sm:$0xff]
        %v555 = vld [vmem:[%s1 + $0x2d8] sm:$0xff]
        %v556 = vld [vmem:[%s1 + $0x2e0] sm:$0xff]
        %v557 = vld [vmem:[%s1 + $0x2e8] sm:$0xff]
        %v558 = vld [vmem:[%s1 + $0x2f0] sm:$0xff]
        %v559 = vld [vmem:[%s1 + $0x2f8] sm:$0xff]
        %v560 = vld [vmem:[%s1 + $0x300] sm:$0xff]
        %v561 = vld [vmem:[%s1 + $0x308] sm:$0xff]
        %v562 = vld [vmem:[%s1 + $0x310] sm:$0xff]
        %v563 = vld [vmem:[%s1 + $0x318] sm:$0xff]
        %v564 = vld [vmem:[%s1 + $0x320] sm:$0xff]
        %v565 = vld [vmem:[%s1 + $0x328] sm:$0xff]
        %v566 = vld [vmem:[%s1 + $0x330] sm:$0xff]
        %v567 = vld [vmem:[%s1 + $0x338] sm:$0xff]
        %v568 = vld [vmem:[%s1 + $0x340] sm:$0xff]
        %v569 = vld [vmem:[%s1 + $0x348] sm:$0xff]
        %v570 = vld [vmem:[%s1 + $0x350] sm:$0xff]
        %v571 = vld [vmem:[%s1 + $0x358] sm:$0xff]
        %v572 = vld [vmem:[%s1 + $0x360] sm:$0xff]
        %v573 = vld [vmem:[%s1 + $0x368] sm:$0xff]
        %v574 = vld [vmem:[%s1 + $0x370] sm:$0xff]
        %v575 = vld [vmem:[%s1 + $0x378] sm:$0xff]
        %v576 = vld [vmem:[%s1 + $0x380] sm:$0xff]
        %v577 = vld [vmem:[%s1 + $0x388] sm:$0xff]
        %v578 = vld [vmem:[%s1 + $0x390] sm:$0xff]
        %v579 = vld [vmem:[%s1 + $0x398] sm:$0xff]
        %v580 = vld [vmem:[%s1 + $0x3a0] sm:$0xff]
        %v581 = vld [vmem:[%s1 + $0x3a8] sm:$0xff]
        %v582 = vld [vmem:[%s1 + $0x3b0] sm:$0xff]
        %v583 = vld [vmem:[%s1 + $0x3b8] sm:$0xff]
        %v584 = vld [vmem:[%s1 + $0x3c0] sm:$0xff]
        %v585 = vld [vmem:[%s1 + $0x3c8] sm:$0xff]
        %v586 = vld [vmem:[%s1 + $0x3d0] sm:$0xff]
        %v587 = vld [vmem:[%s1 + $0x3d8] sm:$0xff]
        %v588 = vld [vmem:[%s1 + $0x3e0] sm:$0xff]
        %v589 = vld [vmem:[%s1 + $0x3e8] sm:$0xff]
        %v590 = vld [vmem:[%s1 + $0x3f0] sm:$0xff]
        %v591 = vld [vmem:[%s1 + $0x3f8] sm:$0xff]
        %v592 = vld [vmem:[%s1 + $0x400] sm:$0xff]
        %v593 = vld [vmem:[%s1 + $0x408] sm:$0xff]
        %v594 = vld [vmem:[%s1 + $0x410] sm:$0xff]
        %v595 = vld [vmem:[%s1 + $0x418] sm:$0xff]
        %v596 = vld [vmem:[%s1 + $0x420] sm:$0xff]
        %v597 = vld [vmem:[%s1 + $0x428] sm:$0xff]
        %v598 = vld [vmem:[%s1 + $0x430] sm:$0xff]
        %v599 = vld [vmem:[%s1 + $0x438] sm:$0xff]
        %v600 = vld [vmem:[%s1 + $0x440] sm:$0xff]
        %v601 = vld [vmem:[%s1 + $0x448] sm:$0xff]
        %v602 = vld [vmem:[%s1 + $0x450] sm:$0xff]
        %v603 = vld [vmem:[%s1 + $0x458] sm:$0xff]
        %v604 = vld [vmem:[%s1 + $0x460] sm:$0xff]
        %v605 = vld [vmem:[%s1 + $0x468] sm:$0xff]
        %v606 = vld [vmem:[%s1 + $0x470] sm:$0xff]
        %v607 = vld [vmem:[%s1 + $0x478] sm:$0xff]
        %v608 = vld [vmem:[%s1 + $0x480] sm:$0xff]
        %v609 = vld [vmem:[%s1 + $0x488] sm:$0xff]
        %v610 = vld [vmem:[%s1 + $0x490] sm:$0xff]
        %v611 = vld [vmem:[%s1 + $0x498] sm:$0xff]
        %v612 = vld [vmem:[%s1 + $0x4a0] sm:$0xff]
        %v613 = vld [vmem:[%s1 + $0x4a8] sm:$0xff]
        %v614 = vld [vmem:[%s1 + $0x4b0] sm:$0xff]
        %v615 = vld [vmem:[%s1 + $0x4b8] sm:$0xff]
        %v616 = vld [vmem:[%s1 + $0x4c0] sm:$0xff]
        %v617 = vld [vmem:[%s1 + $0x4c8] sm:$0xff]
        %v618 = vld [vmem:[%s1 + $0x4d0] sm:$0xff]
        %v619 = vld [vmem:[%s1 + $0x4d8] sm:$0xff]
        %v620 = vld [vmem:[%s1 + $0x4e0] sm:$0xff]
        %v621 = vld [vmem:[%s1 + $0x4e8] sm:$0xff]
        %v622 = vld [vmem:[%s1 + $0x4f0] sm:$0xff]
        %v623 = vld [vmem:[%s1 + $0x4f8] sm:$0xff]
        %v624 = vld [vmem:[%s1 + $0x500] sm:$0xff]
        %v625 = vld [vmem:[%s1 + $0x508] sm:$0xff]
        %v626 = vld [vmem:[%s1 + $0x510] sm:$0xff]
        %v627 = vld [vmem:[%s1 + $0x518] sm:$0xff]
        %v628 = vld [vmem:[%s1 + $0x520] sm:$0xff]
        %v629 = vld [vmem:[%s1 + $0x528] sm:$0xff]
        %v630 = vld [vmem:[%s1 + $0x530] sm:$0xff]
        %v631 = vld [vmem:[%s1 + $0x538] sm:$0xff]
        %v632 = vld [vmem:[%s1 + $0x540] sm:$0xff]
        %v633 = vld [vmem:[%s1 + $0x548] sm:$0xff]
        %v634 = vld [vmem:[%s1 + $0x550] sm:$0xff]
        %v635 = vld [vmem:[%s1 + $0x558] sm:$0xff]
        %v636 = vld [vmem:[%s1 + $0x560] sm:$0xff]
        %v637 = vld [vmem:[%s1 + $0x568] sm:$0xff]
        %v638 = vld [vmem:[%s1 + $0x570] sm:$0xff]
        %v639 = vld [vmem:[%s1 + $0x578] sm:$0xff]
        %v640 = vld [vmem:[%s1 + $0x580] sm:$0xff]
        %v641 = vld [vmem:[%s1 + $0x588] sm:$0xff]
        %v642 = vld [vmem:[%s1 + $0x590] sm:$0xff]
        %v643 = vld [vmem:[%s1 + $0x598] sm:$0xff]
        %v644 = vld [vmem:[%s1 + $0x5a0] sm:$0xff]
        %v645 = vld [vmem:[%s1 + $0x5a8] sm:$0xff]
        %v646 = vld [vmem:[%s1 + $0x5b0] sm:$0xff]
        %v647 = vld [vmem:[%s1 + $0x5b8] sm:$0xff]
        %v648 = vld [vmem:[%s1 + $0x5c0] sm:$0xff]
        %v649 = vld [vmem:[%s1 + $0x5c8] sm:$0xff]
        %v650 = vld [vmem:[%s1 + $0x5d0] sm:$0xff]
        %v651 = vld [vmem:[%s1 + $0x5d8] sm:$0xff]
        %v652 = vld [vmem:[%s1 + $0x5e0] sm:$0xff]
        %v653 = vld [vmem:[%s1 + $0x5e8] sm:$0xff]
        %v654 = vld [vmem:[%s1 + $0x5f0] sm:$0xff]
        %v655 = vld [vmem:[%s1 + $0x5f8] sm:$0xff]
        %v656 = vld [vmem:[%s1 + $0x600] sm:$0xff]
        %v657 = vld [vmem:[%s1 + $0x608] sm:$0xff]
        %v658 = vld [vmem:[%s1 + $0x610] sm:$0xff]
        %v659 = vld [vmem:[%s1 + $0x618] sm:$0xff]
        %v660 = vld [vmem:[%s1 + $0x620] sm:$0xff]
        %v661 = vld [vmem:[%s1 + $0x628] sm:$0xff]
        %v662 = vld [vmem:[%s1 + $0x630] sm:$0xff]
        %v663 = vld [vmem:[%s1 + $0x638] sm:$0xff]
        %v664 = vld [vmem:[%s1 + $0x640] sm:$0xff]
        %v665 = vld [vmem:[%s1 + $0x648] sm:$0xff]
        %v666 = vld [vmem:[%s1 + $0x650] sm:$0xff]
        %v667 = vld [vmem:[%s1 + $0x658] sm:$0xff]
        %v668 = vld [vmem:[%s1 + $0x660] sm:$0xff]
        %v669 = vld [vmem:[%s1 + $0x668] sm:$0xff]
        %v670 = vld [vmem:[%s1 + $0x670] sm:$0xff]
        %v671 = vld [vmem:[%s1 + $0x678] sm:$0xff]
        %v672 = vld [vmem:[%s1 + $0x680] sm:$0xff]
        %v673 = vld [vmem:[%s1 + $0x688] sm:$0xff]
        %v674 = vld [vmem:[%s1 + $0x690] sm:$0xff]
        %v675 = vld [vmem:[%s1 + $0x698] sm:$0xff]
        %v676 = vld [vmem:[%s1 + $0x6a0] sm:$0xff]
        %v677 = vld [vmem:[%s1 + $0x6a8] sm:$0xff]
        %v678 = vld [vmem:[%s1 + $0x6b0] sm:$0xff]
        %v679 = vld [vmem:[%s1 + $0x6b8] sm:$0xff]
        %v680 = vld [vmem:[%s1 + $0x6c0] sm:$0xff]
        %v681 = vld [vmem:[%s1 + $0x6c8] sm:$0xff]
        %v682 = vld [vmem:[%s1 + $0x6d0] sm:$0xff]
        %v683 = vld [vmem:[%s1 + $0x6d8] sm:$0xff]
        %v684 = vld [vmem:[%s1 + $0x6e0] sm:$0xff]
        %v685 = vld [vmem:[%s1 + $0x6e8] sm:$0xff]
        %v686 = vld [vmem:[%s1 + $0x6f0] sm:$0xff]
        %v687 = vld [vmem:[%s1 + $0x6f8] sm:$0xff]
        %v688 = vld [vmem:[%s1 + $0x700] sm:$0xff]
        %v689 = vld [vmem:[%s1 + $0x708] sm:$0xff]
        %v690 = vld [vmem:[%s1 + $0x710] sm:$0xff]
        %v691 = vld [vmem:[%s1 + $0x718] sm:$0xff]
        %v692 = vld [vmem:[%s1 + $0x720] sm:$0xff]
        %v693 = vld [vmem:[%s1 + $0x728] sm:$0xff]
        %v694 = vld [vmem:[%s1 + $0x730] sm:$0xff]
        %v695 = vld [vmem:[%s1 + $0x738] sm:$0xff]
        %v696 = vld [vmem:[%s1 + $0x740] sm:$0xff]
        %v697 = vld [vmem:[%s1 + $0x748] sm:$0xff]
        %v698 = vld [vmem:[%s1 + $0x750] sm:$0xff]
        %v699 = vld [vmem:[%s1 + $0x758] sm:$0xff]
        %v700 = vld [vmem:[%s1 + $0x760] sm:$0xff]
        %v701 = vld [vmem:[%s1 + $0x768] sm:$0xff]
        %v702 = vld [vmem:[%s1 + $0x770] sm:$0xff]
        %v703 = vld [vmem:[%s1 + $0x778] sm:$0xff]
        %v704 = vld [vmem:[%s1 + $0x780] sm:$0xff]
        %v705 = vld [vmem:[%s1 + $0x788] sm:$0xff]
        %v706 = vld [vmem:[%s1 + $0x790] sm:$0xff]
        %v707 = vld [vmem:[%s1 + $0x798] sm:$0xff]
        %v708 = vld [vmem:[%s1 + $0x7a0] sm:$0xff]
        %v709 = vld [vmem:[%s1 + $0x7a8] sm:$0xff]
        %v710 = vld [vmem:[%s1 + $0x7b0] sm:$0xff]
        %v711 = vld [vmem:[%s1 + $0x7b8] sm:$0xff]
        %v712 = vld [vmem:[%s1 + $0x7c0] sm:$0xff]
        %v713 = vld [vmem:[%s1 + $0x7c8] sm:$0xff]
        %v714 = vld [vmem:[%s1 + $0x7d0] sm:$0xff]
        %v715 = vld [vmem:[%s1 + $0x7d8] sm:$0xff]
        %v716 = vld [vmem:[%s1 + $0x7e0] sm:$0xff]
        %v717 = vld [vmem:[%s1 + $0x7e8] sm:$0xff]
        %v718 = vld [vmem:[%s1 + $0x7f0] sm:$0xff]
        %v719 = vld [vmem:[%s1 + $0x7f8] sm:$0xff]
        %v720 = vld [vmem:[%s2] sm:$0xf]
        %v722 = vlaneseq
        %v723 = vshrl.u32 %v722, 7
        %v724 = vsub.s32 0, %v723
        %v725 = vrot.slane %v720, %v724
        %v726 = vlaneseq
        %v727 = vshrl.u32 %v726, 7
        %v728 = vsub.s32 1, %v727
        %v729 = vrot.slane %v720, %v728
        %v730 = vlaneseq
        %v731 = vshrl.u32 %v730, 7
        %v732 = vsub.s32 2, %v731
        %v733 = vrot.slane %v720, %v732
        %v734 = vlaneseq
        %v735 = vshrl.u32 %v734, 7
        %v736 = vsub.s32 3, %v735
        %v737 = vrot.slane %v720, %v736
        %v806 = vunpack.c.l.b16 %v400
        %v807 = vunpack.c.h.b16 %v400
        %v808 = vunpack.c.l.b16 %v401
        %v809 = vunpack.c.h.b16 %v401
        %v810 = vunpack.c.l.b16 %v402
        %v811 = vunpack.c.h.b16 %v402
        %v812 = vunpack.c.l.b16 %v403
        %v813 = vunpack.c.h.b16 %v403
        %v814 = vunpack.c.l.b16 %v404
        %v815 = vunpack.c.h.b16 %v404
        %v816 = vunpack.c.l.b16 %v405
        %v817 = vunpack.c.h.b16 %v405
        %v818 = vunpack.c.l.b16 %v406
        %v819 = vunpack.c.h.b16 %v406
        %v820 = vunpack.c.l.b16 %v407
        %v821 = vunpack.c.h.b16 %v407
        %v822 = vunpack.c.l.b16 %v408
        %v823 = vunpack.c.h.b16 %v408
        %v824 = vunpack.c.l.b16 %v409
        %v825 = vunpack.c.h.b16 %v409
        %v826 = vunpack.c.l.b16 %v410
        %v827 = vunpack.c.h.b16 %v410
        %v828 = vunpack.c.l.b16 %v411
        %v829 = vunpack.c.h.b16 %v411
        %v830 = vunpack.c.l.b16 %v412
        %v831 = vunpack.c.h.b16 %v412
        %v832 = vunpack.c.l.b16 %v413
        %v833 = vunpack.c.h.b16 %v413
        %v834 = vunpack.c.l.b16 %v414
        %v835 = vunpack.c.h.b16 %v414
        %v836 = vunpack.c.l.b16 %v415
        %v837 = vunpack.c.h.b16 %v415
        %v838 = vunpack.c.l.b16 %v416
        %v839 = vunpack.c.h.b16 %v416
        %v840 = vunpack.c.l.b16 %v417
        %v841 = vunpack.c.h.b16 %v417
        %v842 = vunpack.c.l.b16 %v418
        %v843 = vunpack.c.h.b16 %v418
        %v844 = vunpack.c.l.b16 %v419
        %v845 = vunpack.c.h.b16 %v419
        %v846 = vunpack.c.l.b16 %v420
        %v847 = vunpack.c.h.b16 %v420
        %v848 = vunpack.c.l.b16 %v421
        %v849 = vunpack.c.h.b16 %v421
        %v850 = vunpack.c.l.b16 %v422
        %v851 = vunpack.c.h.b16 %v422
        %v852 = vunpack.c.l.b16 %v423
        %v853 = vunpack.c.h.b16 %v423
        %v854 = vunpack.c.l.b16 %v424
        %v855 = vunpack.c.h.b16 %v424
        %v856 = vunpack.c.l.b16 %v425
        %v857 = vunpack.c.h.b16 %v425
        %v858 = vunpack.c.l.b16 %v426
        %v859 = vunpack.c.h.b16 %v426
        %v860 = vunpack.c.l.b16 %v427
        %v861 = vunpack.c.h.b16 %v427
        %v862 = vunpack.c.l.b16 %v428
        %v863 = vunpack.c.h.b16 %v428
        %v864 = vunpack.c.l.b16 %v429
        %v865 = vunpack.c.h.b16 %v429
        %v866 = vunpack.c.l.b16 %v430
        %v867 = vunpack.c.h.b16 %v430
        %v868 = vunpack.c.l.b16 %v431
        %v869 = vunpack.c.h.b16 %v431
        %v870 = vunpack.c.l.b16 %v432
        %v871 = vunpack.c.h.b16 %v432
        %v872 = vunpack.c.l.b16 %v433
        %v873 = vunpack.c.h.b16 %v433
        %v874 = vunpack.c.l.b16 %v434
        %v875 = vunpack.c.h.b16 %v434
        %v876 = vunpack.c.l.b16 %v435
        %v877 = vunpack.c.h.b16 %v435
        %v878 = vunpack.c.l.b16 %v436
        %v879 = vunpack.c.h.b16 %v436
        %v880 = vunpack.c.l.b16 %v437
        %v881 = vunpack.c.h.b16 %v437
        %v882 = vunpack.c.l.b16 %v438
        %v883 = vunpack.c.h.b16 %v438
        %v884 = vunpack.c.l.b16 %v439
        %v885 = vunpack.c.h.b16 %v439
        %v886 = vunpack.c.l.b16 %v440
        %v887 = vunpack.c.h.b16 %v440
        %v888 = vunpack.c.l.b16 %v441
        %v889 = vunpack.c.h.b16 %v441
        %v890 = vunpack.c.l.b16 %v442
        %v891 = vunpack.c.h.b16 %v442
        %v892 = vunpack.c.l.b16 %v443
        %v893 = vunpack.c.h.b16 %v443
        %v894 = vunpack.c.l.b16 %v444
        %v895 = vunpack.c.h.b16 %v444
        %v896 = vunpack.c.l.b16 %v445
        %v897 = vunpack.c.h.b16 %v445
        %v898 = vunpack.c.l.b16 %v446
        %v899 = vunpack.c.h.b16 %v446
        %v900 = vunpack.c.l.b16 %v447
        %v901 = vunpack.c.h.b16 %v447
        %v902 = vunpack.c.l.b16 %v448
        %v903 = vunpack.c.h.b16 %v448
        %v904 = vunpack.c.l.b16 %v449
        %v905 = vunpack.c.h.b16 %v449
        %v906 = vunpack.c.l.b16 %v450
        %v907 = vunpack.c.h.b16 %v450
        %v908 = vunpack.c.l.b16 %v451
        %v909 = vunpack.c.h.b16 %v451
        %v910 = vunpack.c.l.b16 %v452
        %v911 = vunpack.c.h.b16 %v452
        %v912 = vunpack.c.l.b16 %v453
        %v913 = vunpack.c.h.b16 %v453
        %v914 = vunpack.c.l.b16 %v454
        %v915 = vunpack.c.h.b16 %v454
        %v916 = vunpack.c.l.b16 %v455
        %v917 = vunpack.c.h.b16 %v455
        %v918 = vunpack.c.l.b16 %v456
        %v919 = vunpack.c.h.b16 %v456
        %v920 = vunpack.c.l.b16 %v457
        %v921 = vunpack.c.h.b16 %v457
        %v922 = vunpack.c.l.b16 %v458
        %v923 = vunpack.c.h.b16 %v458
        %v924 = vunpack.c.l.b16 %v459
        %v925 = vunpack.c.h.b16 %v459
        %v926 = vunpack.c.l.b16 %v460
        %v927 = vunpack.c.h.b16 %v460
        %v928 = vunpack.c.l.b16 %v461
        %v929 = vunpack.c.h.b16 %v461
        %v930 = vunpack.c.l.b16 %v462
        %v931 = vunpack.c.h.b16 %v462
        %v932 = vunpack.c.l.b16 %v463
        %v933 = vunpack.c.h.b16 %v463
        %v934 = vpack.c.b16 %v814, %v806
        %v935 = vpack.c.b16 %v815, %v807
        %v936 = vpack.c.b16 %v816, %v808
        %v937 = vpack.c.b16 %v817, %v809
        %v938 = vpack.c.b16 %v818, %v810
        %v939 = vpack.c.b16 %v819, %v811
        %v940 = vpack.c.b16 %v820, %v812
        %v941 = vpack.c.b16 %v821, %v813
        %v942 = vpack.c.b16 %v830, %v822
        %v943 = vpack.c.b16 %v831, %v823
        %v944 = vpack.c.b16 %v832, %v824
        %v945 = vpack.c.b16 %v833, %v825
        %v946 = vpack.c.b16 %v834, %v826
        %v947 = vpack.c.b16 %v835, %v827
        %v948 = vpack.c.b16 %v836, %v828
        %v949 = vpack.c.b16 %v837, %v829
        %v950 = vpack.c.b16 %v846, %v838
        %v951 = vpack.c.b16 %v847, %v839
        %v952 = vpack.c.b16 %v848, %v840
        %v953 = vpack.c.b16 %v849, %v841
        %v954 = vpack.c.b16 %v850, %v842
        %v955 = vpack.c.b16 %v851, %v843
        %v956 = vpack.c.b16 %v852, %v844
        %v957 = vpack.c.b16 %v853, %v845
        %v958 = vpack.c.b16 %v862, %v854
        %v959 = vpack.c.b16 %v863, %v855
        %v960 = vpack.c.b16 %v864, %v856
        %v961 = vpack.c.b16 %v865, %v857
        %v962 = vpack.c.b16 %v866, %v858
        %v963 = vpack.c.b16 %v867, %v859
        %v964 = vpack.c.b16 %v868, %v860
        %v965 = vpack.c.b16 %v869, %v861
        %v966 = vpack.c.b16 %v878, %v870
        %v967 = vpack.c.b16 %v879, %v871
        %v968 = vpack.c.b16 %v880, %v872
        %v969 = vpack.c.b16 %v881, %v873
        %v970 = vpack.c.b16 %v882, %v874
        %v971 = vpack.c.b16 %v883, %v875
        %v972 = vpack.c.b16 %v884, %v876
        %v973 = vpack.c.b16 %v885, %v877
        %v974 = vpack.c.b16 %v894, %v886
        %v975 = vpack.c.b16 %v895, %v887
        %v976 = vpack.c.b16 %v896, %v888
        %v977 = vpack.c.b16 %v897, %v889
        %v978 = vpack.c.b16 %v898, %v890
        %v979 = vpack.c.b16 %v899, %v891
        %v980 = vpack.c.b16 %v900, %v892
        %v981 = vpack.c.b16 %v901, %v893
        %v982 = vpack.c.b16 %v910, %v902
        %v983 = vpack.c.b16 %v911, %v903
        %v984 = vpack.c.b16 %v912, %v904
        %v985 = vpack.c.b16 %v913, %v905
        %v986 = vpack.c.b16 %v914, %v906
        %v987 = vpack.c.b16 %v915, %v907
        %v988 = vpack.c.b16 %v916, %v908
        %v989 = vpack.c.b16 %v917, %v909
        %v990 = vpack.c.b16 %v926, %v918
        %v991 = vpack.c.b16 %v927, %v919
        %v992 = vpack.c.b16 %v928, %v920
        %v993 = vpack.c.b16 %v929, %v921
        %v994 = vpack.c.b16 %v930, %v922
        %v995 = vpack.c.b16 %v931, %v923
        %v996 = vpack.c.b16 %v932, %v924
        %v997 = vpack.c.b16 %v933, %v925
        %v1318 = vunpack.c.l.b16 %v464
        %v1319 = vunpack.c.h.b16 %v464
        %v1320 = vunpack.c.l.b16 %v465
        %v1321 = vunpack.c.h.b16 %v465
        %v1322 = vunpack.c.l.b16 %v466
        %v1323 = vunpack.c.h.b16 %v466
        %v1324 = vunpack.c.l.b16 %v467
        %v1325 = vunpack.c.h.b16 %v467
        %v1326 = vunpack.c.l.b16 %v468
        %v1327 = vunpack.c.h.b16 %v468
        %v1328 = vunpack.c.l.b16 %v469
        %v1329 = vunpack.c.h.b16 %v469
        %v1330 = vunpack.c.l.b16 %v470
        %v1331 = vunpack.c.h.b16 %v470
        %v1332 = vunpack.c.l.b16 %v471
        %v1333 = vunpack.c.h.b16 %v471
        %v1334 = vunpack.c.l.b16 %v472
        %v1335 = vunpack.c.h.b16 %v472
        %v1336 = vunpack.c.l.b16 %v473
        %v1337 = vunpack.c.h.b16 %v473
        %v1338 = vunpack.c.l.b16 %v474
        %v1339 = vunpack.c.h.b16 %v474
        %v1340 = vunpack.c.l.b16 %v475
        %v1341 = vunpack.c.h.b16 %v475
        %v1342 = vunpack.c.l.b16 %v476
        %v1343 = vunpack.c.h.b16 %v476
        %v1344 = vunpack.c.l.b16 %v477
        %v1345 = vunpack.c.h.b16 %v477
        %v1346 = vunpack.c.l.b16 %v478
        %v1347 = vunpack.c.h.b16 %v478
        %v1348 = vunpack.c.l.b16 %v479
        %v1349 = vunpack.c.h.b16 %v479
        %v1350 = vunpack.c.l.b16 %v480
        %v1351 = vunpack.c.h.b16 %v480
        %v1352 = vunpack.c.l.b16 %v481
        %v1353 = vunpack.c.h.b16 %v481
        %v1354 = vunpack.c.l.b16 %v482
        %v1355 = vunpack.c.h.b16 %v482
        %v1356 = vunpack.c.l.b16 %v483
        %v1357 = vunpack.c.h.b16 %v483
        %v1358 = vunpack.c.l.b16 %v484
        %v1359 = vunpack.c.h.b16 %v484
        %v1360 = vunpack.c.l.b16 %v485
        %v1361 = vunpack.c.h.b16 %v485
        %v1362 = vunpack.c.l.b16 %v486
        %v1363 = vunpack.c.h.b16 %v486
        %v1364 = vunpack.c.l.b16 %v487
        %v1365 = vunpack.c.h.b16 %v487
        %v1366 = vunpack.c.l.b16 %v488
        %v1367 = vunpack.c.h.b16 %v488
        %v1368 = vunpack.c.l.b16 %v489
        %v1369 = vunpack.c.h.b16 %v489
        %v1370 = vunpack.c.l.b16 %v490
        %v1371 = vunpack.c.h.b16 %v490
        %v1372 = vunpack.c.l.b16 %v491
        %v1373 = vunpack.c.h.b16 %v491
        %v1374 = vunpack.c.l.b16 %v492
        %v1375 = vunpack.c.h.b16 %v492
        %v1376 = vunpack.c.l.b16 %v493
        %v1377 = vunpack.c.h.b16 %v493
        %v1378 = vunpack.c.l.b16 %v494
        %v1379 = vunpack.c.h.b16 %v494
        %v1380 = vunpack.c.l.b16 %v495
        %v1381 = vunpack.c.h.b16 %v495
        %v1382 = vunpack.c.l.b16 %v496
        %v1383 = vunpack.c.h.b16 %v496
        %v1384 = vunpack.c.l.b16 %v497
        %v1385 = vunpack.c.h.b16 %v497
        %v1386 = vunpack.c.l.b16 %v498
        %v1387 = vunpack.c.h.b16 %v498
        %v1388 = vunpack.c.l.b16 %v499
        %v1389 = vunpack.c.h.b16 %v499
        %v1390 = vunpack.c.l.b16 %v500
        %v1391 = vunpack.c.h.b16 %v500
        %v1392 = vunpack.c.l.b16 %v501
        %v1393 = vunpack.c.h.b16 %v501
        %v1394 = vunpack.c.l.b16 %v502
        %v1395 = vunpack.c.h.b16 %v502
        %v1396 = vunpack.c.l.b16 %v503
        %v1397 = vunpack.c.h.b16 %v503
        %v1398 = vunpack.c.l.b16 %v504
        %v1399 = vunpack.c.h.b16 %v504
        %v1400 = vunpack.c.l.b16 %v505
        %v1401 = vunpack.c.h.b16 %v505
        %v1402 = vunpack.c.l.b16 %v506
        %v1403 = vunpack.c.h.b16 %v506
        %v1404 = vunpack.c.l.b16 %v507
        %v1405 = vunpack.c.h.b16 %v507
        %v1406 = vunpack.c.l.b16 %v508
        %v1407 = vunpack.c.h.b16 %v508
        %v1408 = vunpack.c.l.b16 %v509
        %v1409 = vunpack.c.h.b16 %v509
        %v1410 = vunpack.c.l.b16 %v510
        %v1411 = vunpack.c.h.b16 %v510
        %v1412 = vunpack.c.l.b16 %v511
        %v1413 = vunpack.c.h.b16 %v511
        %v1414 = vunpack.c.l.b16 %v512
        %v1415 = vunpack.c.h.b16 %v512
        %v1416 = vunpack.c.l.b16 %v513
        %v1417 = vunpack.c.h.b16 %v513
        %v1418 = vunpack.c.l.b16 %v514
        %v1419 = vunpack.c.h.b16 %v514
        %v1420 = vunpack.c.l.b16 %v515
        %v1421 = vunpack.c.h.b16 %v515
        %v1422 = vunpack.c.l.b16 %v516
        %v1423 = vunpack.c.h.b16 %v516
        %v1424 = vunpack.c.l.b16 %v517
        %v1425 = vunpack.c.h.b16 %v517
        %v1426 = vunpack.c.l.b16 %v518
        %v1427 = vunpack.c.h.b16 %v518
        %v1428 = vunpack.c.l.b16 %v519
        %v1429 = vunpack.c.h.b16 %v519
        %v1430 = vunpack.c.l.b16 %v520
        %v1431 = vunpack.c.h.b16 %v520
        %v1432 = vunpack.c.l.b16 %v521
        %v1433 = vunpack.c.h.b16 %v521
        %v1434 = vunpack.c.l.b16 %v522
        %v1435 = vunpack.c.h.b16 %v522
        %v1436 = vunpack.c.l.b16 %v523
        %v1437 = vunpack.c.h.b16 %v523
        %v1438 = vunpack.c.l.b16 %v524
        %v1439 = vunpack.c.h.b16 %v524
        %v1440 = vunpack.c.l.b16 %v525
        %v1441 = vunpack.c.h.b16 %v525
        %v1442 = vunpack.c.l.b16 %v526
        %v1443 = vunpack.c.h.b16 %v526
        %v1444 = vunpack.c.l.b16 %v527
        %v1445 = vunpack.c.h.b16 %v527
        %v1446 = vunpack.c.l.b16 %v528
        %v1447 = vunpack.c.h.b16 %v528
        %v1448 = vunpack.c.l.b16 %v529
        %v1449 = vunpack.c.h.b16 %v529
        %v1450 = vunpack.c.l.b16 %v530
        %v1451 = vunpack.c.h.b16 %v530
        %v1452 = vunpack.c.l.b16 %v531
        %v1453 = vunpack.c.h.b16 %v531
        %v1454 = vunpack.c.l.b16 %v532
        %v1455 = vunpack.c.h.b16 %v532
        %v1456 = vunpack.c.l.b16 %v533
        %v1457 = vunpack.c.h.b16 %v533
        %v1458 = vunpack.c.l.b16 %v534
        %v1459 = vunpack.c.h.b16 %v534
        %v1460 = vunpack.c.l.b16 %v535
        %v1461 = vunpack.c.h.b16 %v535
        %v1462 = vunpack.c.l.b16 %v536
        %v1463 = vunpack.c.h.b16 %v536
        %v1464 = vunpack.c.l.b16 %v537
        %v1465 = vunpack.c.h.b16 %v537
        %v1466 = vunpack.c.l.b16 %v538
        %v1467 = vunpack.c.h.b16 %v538
        %v1468 = vunpack.c.l.b16 %v539
        %v1469 = vunpack.c.h.b16 %v539
        %v1470 = vunpack.c.l.b16 %v540
        %v1471 = vunpack.c.h.b16 %v540
        %v1472 = vunpack.c.l.b16 %v541
        %v1473 = vunpack.c.h.b16 %v541
        %v1474 = vunpack.c.l.b16 %v542
        %v1475 = vunpack.c.h.b16 %v542
        %v1476 = vunpack.c.l.b16 %v543
        %v1477 = vunpack.c.h.b16 %v543
        %v1478 = vunpack.c.l.b16 %v544
        %v1479 = vunpack.c.h.b16 %v544
        %v1480 = vunpack.c.l.b16 %v545
        %v1481 = vunpack.c.h.b16 %v545
        %v1482 = vunpack.c.l.b16 %v546
        %v1483 = vunpack.c.h.b16 %v546
        %v1484 = vunpack.c.l.b16 %v547
        %v1485 = vunpack.c.h.b16 %v547
        %v1486 = vunpack.c.l.b16 %v548
        %v1487 = vunpack.c.h.b16 %v548
        %v1488 = vunpack.c.l.b16 %v549
        %v1489 = vunpack.c.h.b16 %v549
        %v1490 = vunpack.c.l.b16 %v550
        %v1491 = vunpack.c.h.b16 %v550
        %v1492 = vunpack.c.l.b16 %v551
        %v1493 = vunpack.c.h.b16 %v551
        %v1494 = vunpack.c.l.b16 %v552
        %v1495 = vunpack.c.h.b16 %v552
        %v1496 = vunpack.c.l.b16 %v553
        %v1497 = vunpack.c.h.b16 %v553
        %v1498 = vunpack.c.l.b16 %v554
        %v1499 = vunpack.c.h.b16 %v554
        %v1500 = vunpack.c.l.b16 %v555
        %v1501 = vunpack.c.h.b16 %v555
        %v1502 = vunpack.c.l.b16 %v556
        %v1503 = vunpack.c.h.b16 %v556
        %v1504 = vunpack.c.l.b16 %v557
        %v1505 = vunpack.c.h.b16 %v557
        %v1506 = vunpack.c.l.b16 %v558
        %v1507 = vunpack.c.h.b16 %v558
        %v1508 = vunpack.c.l.b16 %v559
        %v1509 = vunpack.c.h.b16 %v559
        %v1510 = vunpack.c.l.b16 %v560
        %v1511 = vunpack.c.h.b16 %v560
        %v1512 = vunpack.c.l.b16 %v561
        %v1513 = vunpack.c.h.b16 %v561
        %v1514 = vunpack.c.l.b16 %v562
        %v1515 = vunpack.c.h.b16 %v562
        %v1516 = vunpack.c.l.b16 %v563
        %v1517 = vunpack.c.h.b16 %v563
        %v1518 = vunpack.c.l.b16 %v564
        %v1519 = vunpack.c.h.b16 %v564
        %v1520 = vunpack.c.l.b16 %v565
        %v1521 = vunpack.c.h.b16 %v565
        %v1522 = vunpack.c.l.b16 %v566
        %v1523 = vunpack.c.h.b16 %v566
        %v1524 = vunpack.c.l.b16 %v567
        %v1525 = vunpack.c.h.b16 %v567
        %v1526 = vunpack.c.l.b16 %v568
        %v1527 = vunpack.c.h.b16 %v568
        %v1528 = vunpack.c.l.b16 %v569
        %v1529 = vunpack.c.h.b16 %v569
        %v1530 = vunpack.c.l.b16 %v570
        %v1531 = vunpack.c.h.b16 %v570
        %v1532 = vunpack.c.l.b16 %v571
        %v1533 = vunpack.c.h.b16 %v571
        %v1534 = vunpack.c.l.b16 %v572
        %v1535 = vunpack.c.h.b16 %v572
        %v1536 = vunpack.c.l.b16 %v573
        %v1537 = vunpack.c.h.b16 %v573
        %v1538 = vunpack.c.l.b16 %v574
        %v1539 = vunpack.c.h.b16 %v574
        %v1540 = vunpack.c.l.b16 %v575
        %v1541 = vunpack.c.h.b16 %v575
        %v1542 = vunpack.c.l.b16 %v576
        %v1543 = vunpack.c.h.b16 %v576
        %v1544 = vunpack.c.l.b16 %v577
        %v1545 = vunpack.c.h.b16 %v577
        %v1546 = vunpack.c.l.b16 %v578
        %v1547 = vunpack.c.h.b16 %v578
        %v1548 = vunpack.c.l.b16 %v579
        %v1549 = vunpack.c.h.b16 %v579
        %v1550 = vunpack.c.l.b16 %v580
        %v1551 = vunpack.c.h.b16 %v580
        %v1552 = vunpack.c.l.b16 %v581
        %v1553 = vunpack.c.h.b16 %v581
        %v1554 = vunpack.c.l.b16 %v582
        %v1555 = vunpack.c.h.b16 %v582
        %v1556 = vunpack.c.l.b16 %v583
        %v1557 = vunpack.c.h.b16 %v583
        %v1558 = vunpack.c.l.b16 %v584
        %v1559 = vunpack.c.h.b16 %v584
        %v1560 = vunpack.c.l.b16 %v585
        %v1561 = vunpack.c.h.b16 %v585
        %v1562 = vunpack.c.l.b16 %v586
        %v1563 = vunpack.c.h.b16 %v586
        %v1564 = vunpack.c.l.b16 %v587
        %v1565 = vunpack.c.h.b16 %v587
        %v1566 = vunpack.c.l.b16 %v588
        %v1567 = vunpack.c.h.b16 %v588
        %v1568 = vunpack.c.l.b16 %v589
        %v1569 = vunpack.c.h.b16 %v589
        %v1570 = vunpack.c.l.b16 %v590
        %v1571 = vunpack.c.h.b16 %v590
        %v1572 = vunpack.c.l.b16 %v591
        %v1573 = vunpack.c.h.b16 %v591
        %v1574 = vunpack.c.l.b16 %v592
        %v1575 = vunpack.c.h.b16 %v592
        %v1576 = vunpack.c.l.b16 %v593
        %v1577 = vunpack.c.h.b16 %v593
        %v1578 = vunpack.c.l.b16 %v594
        %v1579 = vunpack.c.h.b16 %v594
        %v1580 = vunpack.c.l.b16 %v595
        %v1581 = vunpack.c.h.b16 %v595
        %v1582 = vunpack.c.l.b16 %v596
        %v1583 = vunpack.c.h.b16 %v596
        %v1584 = vunpack.c.l.b16 %v597
        %v1585 = vunpack.c.h.b16 %v597
        %v1586 = vunpack.c.l.b16 %v598
        %v1587 = vunpack.c.h.b16 %v598
        %v1588 = vunpack.c.l.b16 %v599
        %v1589 = vunpack.c.h.b16 %v599
        %v1590 = vunpack.c.l.b16 %v600
        %v1591 = vunpack.c.h.b16 %v600
        %v1592 = vunpack.c.l.b16 %v601
        %v1593 = vunpack.c.h.b16 %v601
        %v1594 = vunpack.c.l.b16 %v602
        %v1595 = vunpack.c.h.b16 %v602
        %v1596 = vunpack.c.l.b16 %v603
        %v1597 = vunpack.c.h.b16 %v603
        %v1598 = vunpack.c.l.b16 %v604
        %v1599 = vunpack.c.h.b16 %v604
        %v1600 = vunpack.c.l.b16 %v605
        %v1601 = vunpack.c.h.b16 %v605
        %v1602 = vunpack.c.l.b16 %v606
        %v1603 = vunpack.c.h.b16 %v606
        %v1604 = vunpack.c.l.b16 %v607
        %v1605 = vunpack.c.h.b16 %v607
        %v1606 = vunpack.c.l.b16 %v608
        %v1607 = vunpack.c.h.b16 %v608
        %v1608 = vunpack.c.l.b16 %v609
        %v1609 = vunpack.c.h.b16 %v609
        %v1610 = vunpack.c.l.b16 %v610
        %v1611 = vunpack.c.h.b16 %v610
        %v1612 = vunpack.c.l.b16 %v611
        %v1613 = vunpack.c.h.b16 %v611
        %v1614 = vunpack.c.l.b16 %v612
        %v1615 = vunpack.c.h.b16 %v612
        %v1616 = vunpack.c.l.b16 %v613
        %v1617 = vunpack.c.h.b16 %v613
        %v1618 = vunpack.c.l.b16 %v614
        %v1619 = vunpack.c.h.b16 %v614
        %v1620 = vunpack.c.l.b16 %v615
        %v1621 = vunpack.c.h.b16 %v615
        %v1622 = vunpack.c.l.b16 %v616
        %v1623 = vunpack.c.h.b16 %v616
        %v1624 = vunpack.c.l.b16 %v617
        %v1625 = vunpack.c.h.b16 %v617
        %v1626 = vunpack.c.l.b16 %v618
        %v1627 = vunpack.c.h.b16 %v618
        %v1628 = vunpack.c.l.b16 %v619
        %v1629 = vunpack.c.h.b16 %v619
        %v1630 = vunpack.c.l.b16 %v620
        %v1631 = vunpack.c.h.b16 %v620
        %v1632 = vunpack.c.l.b16 %v621
        %v1633 = vunpack.c.h.b16 %v621
        %v1634 = vunpack.c.l.b16 %v622
        %v1635 = vunpack.c.h.b16 %v622
        %v1636 = vunpack.c.l.b16 %v623
        %v1637 = vunpack.c.h.b16 %v623
        %v1638 = vunpack.c.l.b16 %v624
        %v1639 = vunpack.c.h.b16 %v624
        %v1640 = vunpack.c.l.b16 %v625
        %v1641 = vunpack.c.h.b16 %v625
        %v1642 = vunpack.c.l.b16 %v626
        %v1643 = vunpack.c.h.b16 %v626
        %v1644 = vunpack.c.l.b16 %v627
        %v1645 = vunpack.c.h.b16 %v627
        %v1646 = vunpack.c.l.b16 %v628
        %v1647 = vunpack.c.h.b16 %v628
        %v1648 = vunpack.c.l.b16 %v629
        %v1649 = vunpack.c.h.b16 %v629
        %v1650 = vunpack.c.l.b16 %v630
        %v1651 = vunpack.c.h.b16 %v630
        %v1652 = vunpack.c.l.b16 %v631
        %v1653 = vunpack.c.h.b16 %v631
        %v1654 = vunpack.c.l.b16 %v632
        %v1655 = vunpack.c.h.b16 %v632
        %v1656 = vunpack.c.l.b16 %v633
        %v1657 = vunpack.c.h.b16 %v633
        %v1658 = vunpack.c.l.b16 %v634
        %v1659 = vunpack.c.h.b16 %v634
        %v1660 = vunpack.c.l.b16 %v635
        %v1661 = vunpack.c.h.b16 %v635
        %v1662 = vunpack.c.l.b16 %v636
        %v1663 = vunpack.c.h.b16 %v636
        %v1664 = vunpack.c.l.b16 %v637
        %v1665 = vunpack.c.h.b16 %v637
        %v1666 = vunpack.c.l.b16 %v638
        %v1667 = vunpack.c.h.b16 %v638
        %v1668 = vunpack.c.l.b16 %v639
        %v1669 = vunpack.c.h.b16 %v639
        %v1670 = vunpack.c.l.b16 %v640
        %v1671 = vunpack.c.h.b16 %v640
        %v1672 = vunpack.c.l.b16 %v641
        %v1673 = vunpack.c.h.b16 %v641
        %v1674 = vunpack.c.l.b16 %v642
        %v1675 = vunpack.c.h.b16 %v642
        %v1676 = vunpack.c.l.b16 %v643
        %v1677 = vunpack.c.h.b16 %v643
        %v1678 = vunpack.c.l.b16 %v644
        %v1679 = vunpack.c.h.b16 %v644
        %v1680 = vunpack.c.l.b16 %v645
        %v1681 = vunpack.c.h.b16 %v645
        %v1682 = vunpack.c.l.b16 %v646
        %v1683 = vunpack.c.h.b16 %v646
        %v1684 = vunpack.c.l.b16 %v647
        %v1685 = vunpack.c.h.b16 %v647
        %v1686 = vunpack.c.l.b16 %v648
        %v1687 = vunpack.c.h.b16 %v648
        %v1688 = vunpack.c.l.b16 %v649
        %v1689 = vunpack.c.h.b16 %v649
        %v1690 = vunpack.c.l.b16 %v650
        %v1691 = vunpack.c.h.b16 %v650
        %v1692 = vunpack.c.l.b16 %v651
        %v1693 = vunpack.c.h.b16 %v651
        %v1694 = vunpack.c.l.b16 %v652
        %v1695 = vunpack.c.h.b16 %v652
        %v1696 = vunpack.c.l.b16 %v653
        %v1697 = vunpack.c.h.b16 %v653
        %v1698 = vunpack.c.l.b16 %v654
        %v1699 = vunpack.c.h.b16 %v654
        %v1700 = vunpack.c.l.b16 %v655
        %v1701 = vunpack.c.h.b16 %v655
        %v1702 = vunpack.c.l.b16 %v656
        %v1703 = vunpack.c.h.b16 %v656
        %v1704 = vunpack.c.l.b16 %v657
        %v1705 = vunpack.c.h.b16 %v657
        %v1706 = vunpack.c.l.b16 %v658
        %v1707 = vunpack.c.h.b16 %v658
        %v1708 = vunpack.c.l.b16 %v659
        %v1709 = vunpack.c.h.b16 %v659
        %v1710 = vunpack.c.l.b16 %v660
        %v1711 = vunpack.c.h.b16 %v660
        %v1712 = vunpack.c.l.b16 %v661
        %v1713 = vunpack.c.h.b16 %v661
        %v1714 = vunpack.c.l.b16 %v662
        %v1715 = vunpack.c.h.b16 %v662
        %v1716 = vunpack.c.l.b16 %v663
        %v1717 = vunpack.c.h.b16 %v663
        %v1718 = vunpack.c.l.b16 %v664
        %v1719 = vunpack.c.h.b16 %v664
        %v1720 = vunpack.c.l.b16 %v665
        %v1721 = vunpack.c.h.b16 %v665
        %v1722 = vunpack.c.l.b16 %v666
        %v1723 = vunpack.c.h.b16 %v666
        %v1724 = vunpack.c.l.b16 %v667
        %v1725 = vunpack.c.h.b16 %v667
        %v1726 = vunpack.c.l.b16 %v668
        %v1727 = vunpack.c.h.b16 %v668
        %v1728 = vunpack.c.l.b16 %v669
        %v1729 = vunpack.c.h.b16 %v669
        %v1730 = vunpack.c.l.b16 %v670
        %v1731 = vunpack.c.h.b16 %v670
        %v1732 = vunpack.c.l.b16 %v671
        %v1733 = vunpack.c.h.b16 %v671
        %v1734 = vunpack.c.l.b16 %v672
        %v1735 = vunpack.c.h.b16 %v672
        %v1736 = vunpack.c.l.b16 %v673
        %v1737 = vunpack.c.h.b16 %v673
        %v1738 = vunpack.c.l.b16 %v674
        %v1739 = vunpack.c.h.b16 %v674
        %v1740 = vunpack.c.l.b16 %v675
        %v1741 = vunpack.c.h.b16 %v675
        %v1742 = vunpack.c.l.b16 %v676
        %v1743 = vunpack.c.h.b16 %v676
        %v1744 = vunpack.c.l.b16 %v677
        %v1745 = vunpack.c.h.b16 %v677
        %v1746 = vunpack.c.l.b16 %v678
        %v1747 = vunpack.c.h.b16 %v678
        %v1748 = vunpack.c.l.b16 %v679
        %v1749 = vunpack.c.h.b16 %v679
        %v1750 = vunpack.c.l.b16 %v680
        %v1751 = vunpack.c.h.b16 %v680
        %v1752 = vunpack.c.l.b16 %v681
        %v1753 = vunpack.c.h.b16 %v681
        %v1754 = vunpack.c.l.b16 %v682
        %v1755 = vunpack.c.h.b16 %v682
        %v1756 = vunpack.c.l.b16 %v683
        %v1757 = vunpack.c.h.b16 %v683
        %v1758 = vunpack.c.l.b16 %v684
        %v1759 = vunpack.c.h.b16 %v684
        %v1760 = vunpack.c.l.b16 %v685
        %v1761 = vunpack.c.h.b16 %v685
        %v1762 = vunpack.c.l.b16 %v686
        %v1763 = vunpack.c.h.b16 %v686
        %v1764 = vunpack.c.l.b16 %v687
        %v1765 = vunpack.c.h.b16 %v687
        %v1766 = vunpack.c.l.b16 %v688
        %v1767 = vunpack.c.h.b16 %v688
        %v1768 = vunpack.c.l.b16 %v689
        %v1769 = vunpack.c.h.b16 %v689
        %v1770 = vunpack.c.l.b16 %v690
        %v1771 = vunpack.c.h.b16 %v690
        %v1772 = vunpack.c.l.b16 %v691
        %v1773 = vunpack.c.h.b16 %v691
        %v1774 = vunpack.c.l.b16 %v692
        %v1775 = vunpack.c.h.b16 %v692
        %v1776 = vunpack.c.l.b16 %v693
        %v1777 = vunpack.c.h.b16 %v693
        %v1778 = vunpack.c.l.b16 %v694
        %v1779 = vunpack.c.h.b16 %v694
        %v1780 = vunpack.c.l.b16 %v695
        %v1781 = vunpack.c.h.b16 %v695
        %v1782 = vunpack.c.l.b16 %v696
        %v1783 = vunpack.c.h.b16 %v696
        %v1784 = vunpack.c.l.b16 %v697
        %v1785 = vunpack.c.h.b16 %v697
        %v1786 = vunpack.c.l.b16 %v698
        %v1787 = vunpack.c.h.b16 %v698
        %v1788 = vunpack.c.l.b16 %v699
        %v1789 = vunpack.c.h.b16 %v699
        %v1790 = vunpack.c.l.b16 %v700
        %v1791 = vunpack.c.h.b16 %v700
        %v1792 = vunpack.c.l.b16 %v701
        %v1793 = vunpack.c.h.b16 %v701
        %v1794 = vunpack.c.l.b16 %v702
        %v1795 = vunpack.c.h.b16 %v702
        %v1796 = vunpack.c.l.b16 %v703
        %v1797 = vunpack.c.h.b16 %v703
        %v1798 = vunpack.c.l.b16 %v704
        %v1799 = vunpack.c.h.b16 %v704
        %v1800 = vunpack.c.l.b16 %v705
        %v1801 = vunpack.c.h.b16 %v705
        %v1802 = vunpack.c.l.b16 %v706
        %v1803 = vunpack.c.h.b16 %v706
        %v1804 = vunpack.c.l.b16 %v707
        %v1805 = vunpack.c.h.b16 %v707
        %v1806 = vunpack.c.l.b16 %v708
        %v1807 = vunpack.c.h.b16 %v708
        %v1808 = vunpack.c.l.b16 %v709
        %v1809 = vunpack.c.h.b16 %v709
        %v1810 = vunpack.c.l.b16 %v710
        %v1811 = vunpack.c.h.b16 %v710
        %v1812 = vunpack.c.l.b16 %v711
        %v1813 = vunpack.c.h.b16 %v711
        %v1814 = vunpack.c.l.b16 %v712
        %v1815 = vunpack.c.h.b16 %v712
        %v1816 = vunpack.c.l.b16 %v713
        %v1817 = vunpack.c.h.b16 %v713
        %v1818 = vunpack.c.l.b16 %v714
        %v1819 = vunpack.c.h.b16 %v714
        %v1820 = vunpack.c.l.b16 %v715
        %v1821 = vunpack.c.h.b16 %v715
        %v1822 = vunpack.c.l.b16 %v716
        %v1823 = vunpack.c.h.b16 %v716
        %v1824 = vunpack.c.l.b16 %v717
        %v1825 = vunpack.c.h.b16 %v717
        %v1826 = vunpack.c.l.b16 %v718
        %v1827 = vunpack.c.h.b16 %v718
        %v1828 = vunpack.c.l.b16 %v719
        %v1829 = vunpack.c.h.b16 %v719
        %v1830 = vpack.c.b16 %v1322, %v1318
        %v1831 = vpack.c.b16 %v1323, %v1319
        %v1832 = vpack.c.b16 %v1324, %v1320
        %v1833 = vpack.c.b16 %v1325, %v1321
        %v1834 = vpack.c.b16 %v1330, %v1326
        %v1835 = vpack.c.b16 %v1331, %v1327
        %v1836 = vpack.c.b16 %v1332, %v1328
        %v1837 = vpack.c.b16 %v1333, %v1329
        %v1838 = vpack.c.b16 %v1338, %v1334
        %v1839 = vpack.c.b16 %v1339, %v1335
        %v1840 = vpack.c.b16 %v1340, %v1336
        %v1841 = vpack.c.b16 %v1341, %v1337
        %v1842 = vpack.c.b16 %v1346, %v1342
        %v1843 = vpack.c.b16 %v1347, %v1343
        %v1844 = vpack.c.b16 %v1348, %v1344
        %v1845 = vpack.c.b16 %v1349, %v1345
        %v1846 = vpack.c.b16 %v1354, %v1350
        %v1847 = vpack.c.b16 %v1355, %v1351
        %v1848 = vpack.c.b16 %v1356, %v1352
        %v1849 = vpack.c.b16 %v1357, %v1353
        %v1850 = vpack.c.b16 %v1362, %v1358
        %v1851 = vpack.c.b16 %v1363, %v1359
        %v1852 = vpack.c.b16 %v1364, %v1360
        %v1853 = vpack.c.b16 %v1365, %v1361
        %v1854 = vpack.c.b16 %v1370, %v1366
        %v1855 = vpack.c.b16 %v1371, %v1367
        %v1856 = vpack.c.b16 %v1372, %v1368
        %v1857 = vpack.c.b16 %v1373, %v1369
        %v1858 = vpack.c.b16 %v1378, %v1374
        %v1859 = vpack.c.b16 %v1379, %v1375
        %v1860 = vpack.c.b16 %v1380, %v1376
        %v1861 = vpack.c.b16 %v1381, %v1377
        %v1862 = vpack.c.b16 %v1386, %v1382
        %v1863 = vpack.c.b16 %v1387, %v1383
        %v1864 = vpack.c.b16 %v1388, %v1384
        %v1865 = vpack.c.b16 %v1389, %v1385
        %v1866 = vpack.c.b16 %v1394, %v1390
        %v1867 = vpack.c.b16 %v1395, %v1391
        %v1868 = vpack.c.b16 %v1396, %v1392
        %v1869 = vpack.c.b16 %v1397, %v1393
        %v1870 = vpack.c.b16 %v1402, %v1398
        %v1871 = vpack.c.b16 %v1403, %v1399
        %v1872 = vpack.c.b16 %v1404, %v1400
        %v1873 = vpack.c.b16 %v1405, %v1401
        %v1874 = vpack.c.b16 %v1410, %v1406
        %v1875 = vpack.c.b16 %v1411, %v1407
        %v1876 = vpack.c.b16 %v1412, %v1408
        %v1877 = vpack.c.b16 %v1413, %v1409
        %v1878 = vpack.c.b16 %v1418, %v1414
        %v1879 = vpack.c.b16 %v1419, %v1415
        %v1880 = vpack.c.b16 %v1420, %v1416
        %v1881 = vpack.c.b16 %v1421, %v1417
        %v1882 = vpack.c.b16 %v1426, %v1422
        %v1883 = vpack.c.b16 %v1427, %v1423
        %v1884 = vpack.c.b16 %v1428, %v1424
        %v1885 = vpack.c.b16 %v1429, %v1425
        %v1886 = vpack.c.b16 %v1434, %v1430
        %v1887 = vpack.c.b16 %v1435, %v1431
        %v1888 = vpack.c.b16 %v1436, %v1432
        %v1889 = vpack.c.b16 %v1437, %v1433
        %v1890 = vpack.c.b16 %v1442, %v1438
        %v1891 = vpack.c.b16 %v1443, %v1439
        %v1892 = vpack.c.b16 %v1444, %v1440
        %v1893 = vpack.c.b16 %v1445, %v1441
        %v1894 = vpack.c.b16 %v1450, %v1446
        %v1895 = vpack.c.b16 %v1451, %v1447
        %v1896 = vpack.c.b16 %v1452, %v1448
        %v1897 = vpack.c.b16 %v1453, %v1449
        %v1898 = vpack.c.b16 %v1458, %v1454
        %v1899 = vpack.c.b16 %v1459, %v1455
        %v1900 = vpack.c.b16 %v1460, %v1456
        %v1901 = vpack.c.b16 %v1461, %v1457
        %v1902 = vpack.c.b16 %v1466, %v1462
        %v1903 = vpack.c.b16 %v1467, %v1463
        %v1904 = vpack.c.b16 %v1468, %v1464
        %v1905 = vpack.c.b16 %v1469, %v1465
        %v1906 = vpack.c.b16 %v1474, %v1470
        %v1907 = vpack.c.b16 %v1475, %v1471
        %v1908 = vpack.c.b16 %v1476, %v1472
        %v1909 = vpack.c.b16 %v1477, %v1473
        %v1910 = vpack.c.b16 %v1482, %v1478
        %v1911 = vpack.c.b16 %v1483, %v1479
        %v1912 = vpack.c.b16 %v1484, %v1480
        %v1913 = vpack.c.b16 %v1485, %v1481
        %v1914 = vpack.c.b16 %v1490, %v1486
        %v1915 = vpack.c.b16 %v1491, %v1487
        %v1916 = vpack.c.b16 %v1492, %v1488
        %v1917 = vpack.c.b16 %v1493, %v1489
        %v1918 = vpack.c.b16 %v1498, %v1494
        %v1919 = vpack.c.b16 %v1499, %v1495
        %v1920 = vpack.c.b16 %v1500, %v1496
        %v1921 = vpack.c.b16 %v1501, %v1497
        %v1922 = vpack.c.b16 %v1506, %v1502
        %v1923 = vpack.c.b16 %v1507, %v1503
        %v1924 = vpack.c.b16 %v1508, %v1504
        %v1925 = vpack.c.b16 %v1509, %v1505
        %v1926 = vpack.c.b16 %v1514, %v1510
        %v1927 = vpack.c.b16 %v1515, %v1511
        %v1928 = vpack.c.b16 %v1516, %v1512
        %v1929 = vpack.c.b16 %v1517, %v1513
        %v1930 = vpack.c.b16 %v1522, %v1518
        %v1931 = vpack.c.b16 %v1523, %v1519
        %v1932 = vpack.c.b16 %v1524, %v1520
        %v1933 = vpack.c.b16 %v1525, %v1521
        %v1934 = vpack.c.b16 %v1530, %v1526
        %v1935 = vpack.c.b16 %v1531, %v1527
        %v1936 = vpack.c.b16 %v1532, %v1528
        %v1937 = vpack.c.b16 %v1533, %v1529
        %v1938 = vpack.c.b16 %v1538, %v1534
        %v1939 = vpack.c.b16 %v1539, %v1535
        %v1940 = vpack.c.b16 %v1540, %v1536
        %v1941 = vpack.c.b16 %v1541, %v1537
        %v1942 = vpack.c.b16 %v1546, %v1542
        %v1943 = vpack.c.b16 %v1547, %v1543
        %v1944 = vpack.c.b16 %v1548, %v1544
        %v1945 = vpack.c.b16 %v1549, %v1545
        %v1946 = vpack.c.b16 %v1554, %v1550
        %v1947 = vpack.c.b16 %v1555, %v1551
        %v1948 = vpack.c.b16 %v1556, %v1552
        %v1949 = vpack.c.b16 %v1557, %v1553
        %v1950 = vpack.c.b16 %v1562, %v1558
        %v1951 = vpack.c.b16 %v1563, %v1559
        %v1952 = vpack.c.b16 %v1564, %v1560
        %v1953 = vpack.c.b16 %v1565, %v1561
        %v1954 = vpack.c.b16 %v1570, %v1566
        %v1955 = vpack.c.b16 %v1571, %v1567
        %v1956 = vpack.c.b16 %v1572, %v1568
        %v1957 = vpack.c.b16 %v1573, %v1569
        %v1958 = vpack.c.b16 %v1578, %v1574
        %v1959 = vpack.c.b16 %v1579, %v1575
        %v1960 = vpack.c.b16 %v1580, %v1576
        %v1961 = vpack.c.b16 %v1581, %v1577
        %v1962 = vpack.c.b16 %v1586, %v1582
        %v1963 = vpack.c.b16 %v1587, %v1583
        %v1964 = vpack.c.b16 %v1588, %v1584
        %v1965 = vpack.c.b16 %v1589, %v1585
        %v1966 = vpack.c.b16 %v1594, %v1590
        %v1967 = vpack.c.b16 %v1595, %v1591
        %v1968 = vpack.c.b16 %v1596, %v1592
        %v1969 = vpack.c.b16 %v1597, %v1593
        %v1970 = vpack.c.b16 %v1602, %v1598
        %v1971 = vpack.c.b16 %v1603, %v1599
        %v1972 = vpack.c.b16 %v1604, %v1600
        %v1973 = vpack.c.b16 %v1605, %v1601
        %v1974 = vpack.c.b16 %v1610, %v1606
        %v1975 = vpack.c.b16 %v1611, %v1607
        %v1976 = vpack.c.b16 %v1612, %v1608
        %v1977 = vpack.c.b16 %v1613, %v1609
        %v1978 = vpack.c.b16 %v1618, %v1614
        %v1979 = vpack.c.b16 %v1619, %v1615
        %v1980 = vpack.c.b16 %v1620, %v1616
        %v1981 = vpack.c.b16 %v1621, %v1617
        %v1982 = vpack.c.b16 %v1626, %v1622
        %v1983 = vpack.c.b16 %v1627, %v1623
        %v1984 = vpack.c.b16 %v1628, %v1624
        %v1985 = vpack.c.b16 %v1629, %v1625
        %v1986 = vpack.c.b16 %v1634, %v1630
        %v1987 = vpack.c.b16 %v1635, %v1631
        %v1988 = vpack.c.b16 %v1636, %v1632
        %v1989 = vpack.c.b16 %v1637, %v1633
        %v1990 = vpack.c.b16 %v1642, %v1638
        %v1991 = vpack.c.b16 %v1643, %v1639
        %v1992 = vpack.c.b16 %v1644, %v1640
        %v1993 = vpack.c.b16 %v1645, %v1641
        %v1994 = vpack.c.b16 %v1650, %v1646
        %v1995 = vpack.c.b16 %v1651, %v1647
        %v1996 = vpack.c.b16 %v1652, %v1648
        %v1997 = vpack.c.b16 %v1653, %v1649
        %v1998 = vpack.c.b16 %v1658, %v1654
        %v1999 = vpack.c.b16 %v1659, %v1655
        %v2000 = vpack.c.b16 %v1660, %v1656
        %v2001 = vpack.c.b16 %v1661, %v1657
        %v2002 = vpack.c.b16 %v1666, %v1662
        %v2003 = vpack.c.b16 %v1667, %v1663
        %v2004 = vpack.c.b16 %v1668, %v1664
        %v2005 = vpack.c.b16 %v1669, %v1665
        %v2006 = vpack.c.b16 %v1674, %v1670
        %v2007 = vpack.c.b16 %v1675, %v1671
        %v2008 = vpack.c.b16 %v1676, %v1672
        %v2009 = vpack.c.b16 %v1677, %v1673
        %v2010 = vpack.c.b16 %v1682, %v1678
        %v2011 = vpack.c.b16 %v1683, %v1679
        %v2012 = vpack.c.b16 %v1684, %v1680
        %v2013 = vpack.c.b16 %v1685, %v1681
        %v2014 = vpack.c.b16 %v1690, %v1686
        %v2015 = vpack.c.b16 %v1691, %v1687
        %v2016 = vpack.c.b16 %v1692, %v1688
        %v2017 = vpack.c.b16 %v1693, %v1689
        %v2018 = vpack.c.b16 %v1698, %v1694
        %v2019 = vpack.c.b16 %v1699, %v1695
        %v2020 = vpack.c.b16 %v1700, %v1696
        %v2021 = vpack.c.b16 %v1701, %v1697
        %v2022 = vpack.c.b16 %v1706, %v1702
        %v2023 = vpack.c.b16 %v1707, %v1703
        %v2024 = vpack.c.b16 %v1708, %v1704
        %v2025 = vpack.c.b16 %v1709, %v1705
        %v2026 = vpack.c.b16 %v1714, %v1710
        %v2027 = vpack.c.b16 %v1715, %v1711
        %v2028 = vpack.c.b16 %v1716, %v1712
        %v2029 = vpack.c.b16 %v1717, %v1713
        %v2030 = vpack.c.b16 %v1722, %v1718
        %v2031 = vpack.c.b16 %v1723, %v1719
        %v2032 = vpack.c.b16 %v1724, %v1720
        %v2033 = vpack.c.b16 %v1725, %v1721
        %v2034 = vpack.c.b16 %v1730, %v1726
        %v2035 = vpack.c.b16 %v1731, %v1727
        %v2036 = vpack.c.b16 %v1732, %v1728
        %v2037 = vpack.c.b16 %v1733, %v1729
        %v2038 = vpack.c.b16 %v1738, %v1734
        %v2039 = vpack.c.b16 %v1739, %v1735
        %v2040 = vpack.c.b16 %v1740, %v1736
        %v2041 = vpack.c.b16 %v1741, %v1737
        %v2042 = vpack.c.b16 %v1746, %v1742
        %v2043 = vpack.c.b16 %v1747, %v1743
        %v2044 = vpack.c.b16 %v1748, %v1744
        %v2045 = vpack.c.b16 %v1749, %v1745
        %v2046 = vpack.c.b16 %v1754, %v1750
        %v2047 = vpack.c.b16 %v1755, %v1751
        %v2048 = vpack.c.b16 %v1756, %v1752
        %v2049 = vpack.c.b16 %v1757, %v1753
        %v2050 = vpack.c.b16 %v1762, %v1758
        %v2051 = vpack.c.b16 %v1763, %v1759
        %v2052 = vpack.c.b16 %v1764, %v1760
        %v2053 = vpack.c.b16 %v1765, %v1761
        %v2054 = vpack.c.b16 %v1770, %v1766
        %v2055 = vpack.c.b16 %v1771, %v1767
        %v2056 = vpack.c.b16 %v1772, %v1768
        %v2057 = vpack.c.b16 %v1773, %v1769
        %v2058 = vpack.c.b16 %v1778, %v1774
        %v2059 = vpack.c.b16 %v1779, %v1775
        %v2060 = vpack.c.b16 %v1780, %v1776
        %v2061 = vpack.c.b16 %v1781, %v1777
        %v2062 = vpack.c.b16 %v1786, %v1782
        %v2063 = vpack.c.b16 %v1787, %v1783
        %v2064 = vpack.c.b16 %v1788, %v1784
        %v2065 = vpack.c.b16 %v1789, %v1785
        %v2066 = vpack.c.b16 %v1794, %v1790
        %v2067 = vpack.c.b16 %v1795, %v1791
        %v2068 = vpack.c.b16 %v1796, %v1792
        %v2069 = vpack.c.b16 %v1797, %v1793
        %v2070 = vpack.c.b16 %v1802, %v1798
        %v2071 = vpack.c.b16 %v1803, %v1799
        %v2072 = vpack.c.b16 %v1804, %v1800
        %v2073 = vpack.c.b16 %v1805, %v1801
        %v2074 = vpack.c.b16 %v1810, %v1806
        %v2075 = vpack.c.b16 %v1811, %v1807
        %v2076 = vpack.c.b16 %v1812, %v1808
        %v2077 = vpack.c.b16 %v1813, %v1809
        %v2078 = vpack.c.b16 %v1818, %v1814
        %v2079 = vpack.c.b16 %v1819, %v1815
        %v2080 = vpack.c.b16 %v1820, %v1816
        %v2081 = vpack.c.b16 %v1821, %v1817
        %v2082 = vpack.c.b16 %v1826, %v1822
        %v2083 = vpack.c.b16 %v1827, %v1823
        %v2084 = vpack.c.b16 %v1828, %v1824
        %v2085 = vpack.c.b16 %v1829, %v1825
        %2342 = vmatprep.subr.bf16.mxu0 %v1831
        %2343 = vmatpush1.bf16.msra.mxu0 %v1830
        %2344 = vmatprep.subr.bf16.mxu0 %v1835
        %2345 = vmatpush1.bf16.msra.mxu0 %v1834
        %2346 = vmatprep.subr.bf16.mxu0 %v1839
        %2347 = vmatpush1.bf16.msra.mxu0 %v1838
        %2348 = vmatprep.subr.bf16.mxu0 %v1843
        %2349 = vmatpush1.bf16.msra.mxu0 %v1842
        %2350 = vmatprep.subr.bf16.mxu0 %v1847
        %2351 = vmatpush1.bf16.msra.mxu0 %v1846
        %2352 = vmatprep.subr.bf16.mxu0 %v1851
        %2353 = vmatpush1.bf16.msra.mxu0 %v1850
        %2354 = vmatprep.subr.bf16.mxu0 %v1855
        %2355 = vmatpush1.bf16.msra.mxu0 %v1854
        %2356 = vmatprep.subr.bf16.mxu0 %v1859
        %2357 = vmatpush1.bf16.msra.mxu0 %v1858
        %2358 = vmatprep.subr.bf16.mxu0 %v1863
        %2359 = vmatpush1.bf16.msra.mxu0 %v1862
        %2360 = vmatprep.subr.bf16.mxu0 %v1867
        %2361 = vmatpush1.bf16.msra.mxu0 %v1866
        %2362 = vmatprep.subr.bf16.mxu0 %v1871
        %2363 = vmatpush1.bf16.msra.mxu0 %v1870
        %2364 = vmatprep.subr.bf16.mxu0 %v1875
        %2365 = vmatpush1.bf16.msra.mxu0 %v1874
        %2366 = vmatprep.subr.bf16.mxu0 %v1879
        %2367 = vmatpush1.bf16.msra.mxu0 %v1878
        %2368 = vmatprep.subr.bf16.mxu0 %v1883
        %2369 = vmatpush1.bf16.msra.mxu0 %v1882
        %2370 = vmatprep.subr.bf16.mxu0 %v1887
        %2371 = vmatpush1.bf16.msra.mxu0 %v1886
        %2372 = vmatprep.subr.bf16.mxu0 %v1891
        %2373 = vmatpush1.bf16.msra.mxu0 %v1890
        %2374 = vmatprep.mubr.bf16.mxu0 %v935
        %2375 = vmatmul.mubr.bf16.gmra.mrb[0].mxu0 %v934
        %v2376 = vpop.f32.mrb[0].mxu0
        %v2377 = vadd.f32 %v725, %v2376
        %v2378 = vpop.f32.mrb[0].mxu0
        %v2379 = vadd.f32 %v729, %v2378
        %v2380 = vpop.f32.mrb[0].mxu0
        %v2381 = vadd.f32 %v725, %v2380
        %v2382 = vpop.f32.mrb[0].mxu0
        %v2383 = vadd.f32 %v729, %v2382
        %2384 = vmatprep.mubr.bf16.mxu0 %v943
        %2385 = vmatmul.mubr.bf16.gmra.mrb[0].mxu0 %v942
        %v2386 = vpop.f32.mrb[0].mxu0
        %v2387 = vadd.f32 %v725, %v2386
        %v2388 = vpop.f32.mrb[0].mxu0
        %v2389 = vadd.f32 %v729, %v2388
        %v2390 = vpop.f32.mrb[0].mxu0
        %v2391 = vadd.f32 %v725, %v2390
        %v2392 = vpop.f32.mrb[0].mxu0
        %v2393 = vadd.f32 %v729, %v2392
        %2394 = vmatprep.mubr.bf16.mxu0 %v951
        %2395 = vmatmul.mubr.bf16.gmra.mrb[0].mxu0 %v950
        %v2396 = vpop.f32.mrb[0].mxu0
        %v2397 = vadd.f32 %v725, %v2396
        %v2398 = vpop.f32.mrb[0].mxu0
        %v2399 = vadd.f32 %v729, %v2398
        %v2400 = vpop.f32.mrb[0].mxu0
        %v2401 = vadd.f32 %v725, %v2400
        %v2402 = vpop.f32.mrb[0].mxu0
        %v2403 = vadd.f32 %v729, %v2402
        %2404 = vmatprep.mubr.bf16.mxu0 %v959
        %2405 = vmatmul.mubr.bf16.gmra.mrb[0].mxu0 %v958
        %v2406 = vpop.f32.mrb[0].mxu0
        %v2407 = vadd.f32 %v725, %v2406
        %v2408 = vpop.f32.mrb[0].mxu0
        %v2409 = vadd.f32 %v729, %v2408
        %v2410 = vpop.f32.mrb[0].mxu0
        %v2411 = vadd.f32 %v725, %v2410
        %v2412 = vpop.f32.mrb[0].mxu0
        %v2413 = vadd.f32 %v729, %v2412
        %2414 = vmatprep.mubr.bf16.mxu0 %v967
        %2415 = vmatmul.mubr.bf16.gmra.mrb[0].mxu0 %v966
        %v2416 = vpop.f32.mrb[0].mxu0
        %v2417 = vadd.f32 %v725, %v2416
        %v2418 = vpop.f32.mrb[0].mxu0
        %v2419 = vadd.f32 %v729, %v2418
        %v2420 = vpop.f32.mrb[0].mxu0
        %v2421 = vadd.f32 %v725, %v2420
        %v2422 = vpop.f32.mrb[0].mxu0
        %v2423 = vadd.f32 %v729, %v2422
        %2424 = vmatprep.mubr.bf16.mxu0 %v975
        %2425 = vmatmul.mubr.bf16.gmra.mrb[0].mxu0 %v974
        %v2426 = vpop.f32.mrb[0].mxu0
        %v2427 = vadd.f32 %v725, %v2426
        %v2428 = vpop.f32.mrb[0].mxu0
        %v2429 = vadd.f32 %v729, %v2428
        %v2430 = vpop.f32.mrb[0].mxu0
        %v2431 = vadd.f32 %v725, %v2430
        %v2432 = vpop.f32.mrb[0].mxu0
        %v2433 = vadd.f32 %v729, %v2432
        %2434 = vmatprep.mubr.bf16.mxu0 %v983
        %2435 = vmatmul.mubr.bf16.gmra.mrb[0].mxu0 %v982
        %v2436 = vpop.f32.mrb[0].mxu0
        %v2437 = vadd.f32 %v725, %v2436
        %v2438 = vpop.f32.mrb[0].mxu0
        %v2439 = vadd.f32 %v729, %v2438
        %v2440 = vpop.f32.mrb[0].mxu0
        %v2441 = vadd.f32 %v725, %v2440
        %v2442 = vpop.f32.mrb[0].mxu0
        %v2443 = vadd.f32 %v729, %v2442
        %2444 = vmatprep.mubr.bf16.mxu0 %v991
        %2445 = vmatmul.mubr.bf16.gmra.mrb[0].mxu0 %v990
        %v2446 = vpop.f32.mrb[0].mxu0
        %v2447 = vadd.f32 %v725, %v2446
        %v2448 = vpop.f32.mrb[0].mxu0
        %v2449 = vadd.f32 %v729, %v2448
        %v2450 = vpop.f32.mrb[0].mxu0
        %v2451 = vadd.f32 %v725, %v2450
        %v2452 = vpop.f32.mrb[0].mxu0
        %v2453 = vadd.f32 %v729, %v2452
        %2454 = vdwg.mxu0
        %2455 = vmatprep.subr.bf16.mxu0 %v1895
        %2456 = vmatpush1.bf16.msra.mxu0 %v1894
        %2457 = vmatprep.subr.bf16.mxu0 %v1899
        %2458 = vmatpush1.bf16.msra.mxu0 %v1898
        %2459 = vmatprep.subr.bf16.mxu0 %v1903
        %2460 = vmatpush1.bf16.msra.mxu0 %v1902
        %2461 = vmatprep.subr.bf16.mxu0 %v1907
        %2462 = vmatpush1.bf16.msra.mxu0 %v1906
        %2463 = vmatprep.subr.bf16.mxu0 %v1911
        %2464 = vmatpush1.bf16.msra.mxu0 %v1910
        %2465 = vmatprep.subr.bf16.mxu0 %v1915
        %2466 = vmatpush1.bf16.msra.mxu0 %v1914
        %2467 = vmatprep.subr.bf16.mxu0 %v1919
        %2468 = vmatpush1.bf16.msra.mxu0 %v1918
        %2469 = vmatprep.subr.bf16.mxu0 %v1923
        %2470 = vmatpush1.bf16.msra.mxu0 %v1922
        %2471 = vmatprep.subr.bf16.mxu0 %v1927
        %2472 = vmatpush1.bf16.msra.mxu0 %v1926
        %2473 = vmatprep.subr.bf16.mxu0 %v1931
        %2474 = vmatpush1.bf16.msra.mxu0 %v1930
        %2475 = vmatprep.subr.bf16.mxu0 %v1935
        %2476 = vmatpush1.bf16.msra.mxu0 %v1934
        %2477 = vmatprep.subr.bf16.mxu0 %v1939
        %2478 = vmatpush1.bf16.msra.mxu0 %v1938
        %2479 = vmatprep.subr.bf16.mxu0 %v1943
        %2480 = vmatpush1.bf16.msra.mxu0 %v1942
        %2481 = vmatprep.subr.bf16.mxu0 %v1947
        %2482 = vmatpush1.bf16.msra.mxu0 %v1946
        %2483 = vmatprep.subr.bf16.mxu0 %v1951
        %2484 = vmatpush1.bf16.msra.mxu0 %v1950
        %2485 = vmatprep.subr.bf16.mxu0 %v1955
        %2486 = vmatpush1.bf16.msra.mxu0 %v1954
        %2487 = vmatprep.mubr.bf16.mxu0 %v937
        %2488 = vmatmul.mubr.bf16.gmra.mrb[0].mxu0 %v936
        %v2489 = vpop.f32.mrb[0].mxu0
        %v2490 = vadd.f32 %v2377, %v2489
        %v2491 = vpop.f32.mrb[0].mxu0
        %v2492 = vadd.f32 %v2379, %v2491
        %v2493 = vpop.f32.mrb[0].mxu0
        %v2494 = vadd.f32 %v2381, %v2493
        %v2495 = vpop.f32.mrb[0].mxu0
        %v2496 = vadd.f32 %v2383, %v2495
        %2497 = vmatprep.mubr.bf16.mxu0 %v945
        %2498 = vmatmul.mubr.bf16.gmra.mrb[0].mxu0 %v944
        %v2499 = vpop.f32.mrb[0].mxu0
        %v2500 = vadd.f32 %v2387, %v2499
        %v2501 = vpop.f32.mrb[0].mxu0
        %v2502 = vadd.f32 %v2389, %v2501
        %v2503 = vpop.f32.mrb[0].mxu0
        %v2504 = vadd.f32 %v2391, %v2503
        %v2505 = vpop.f32.mrb[0].mxu0
        %v2506 = vadd.f32 %v2393, %v2505
        %2507 = vmatprep.mubr.bf16.mxu0 %v953
        %2508 = vmatmul.mubr.bf16.gmra.mrb[0].mxu0 %v952
        %v2509 = vpop.f32.mrb[0].mxu0
        %v2510 = vadd.f32 %v2397, %v2509
        %v2511 = vpop.f32.mrb[0].mxu0
        %v2512 = vadd.f32 %v2399, %v2511
        %v2513 = vpop.f32.mrb[0].mxu0
        %v2514 = vadd.f32 %v2401, %v2513
        %v2515 = vpop.f32.mrb[0].mxu0
        %v2516 = vadd.f32 %v2403, %v2515
        %2517 = vmatprep.mubr.bf16.mxu0 %v961
        %2518 = vmatmul.mubr.bf16.gmra.mrb[0].mxu0 %v960
        %v2519 = vpop.f32.mrb[0].mxu0
        %v2520 = vadd.f32 %v2407, %v2519
        %v2521 = vpop.f32.mrb[0].mxu0
        %v2522 = vadd.f32 %v2409, %v2521
        %v2523 = vpop.f32.mrb[0].mxu0
        %v2524 = vadd.f32 %v2411, %v2523
        %v2525 = vpop.f32.mrb[0].mxu0
        %v2526 = vadd.f32 %v2413, %v2525
        %2527 = vmatprep.mubr.bf16.mxu0 %v969
        %2528 = vmatmul.mubr.bf16.gmra.mrb[0].mxu0 %v968
        %v2529 = vpop.f32.mrb[0].mxu0
        %v2530 = vadd.f32 %v2417, %v2529
        %v2531 = vpop.f32.mrb[0].mxu0
        %v2532 = vadd.f32 %v2419, %v2531
        %v2533 = vpop.f32.mrb[0].mxu0
        %v2534 = vadd.f32 %v2421, %v2533
        %v2535 = vpop.f32.mrb[0].mxu0
        %v2536 = vadd.f32 %v2423, %v2535
        %2537 = vmatprep.mubr.bf16.mxu0 %v977
        %2538 = vmatmul.mubr.bf16.gmra.mrb[0].mxu0 %v976
        %v2539 = vpop.f32.mrb[0].mxu0
        %v2540 = vadd.f32 %v2427, %v2539
        %v2541 = vpop.f32.mrb[0].mxu0
        %v2542 = vadd.f32 %v2429, %v2541
        %v2543 = vpop.f32.mrb[0].mxu0
        %v2544 = vadd.f32 %v2431, %v2543
        %v2545 = vpop.f32.mrb[0].mxu0
        %v2546 = vadd.f32 %v2433, %v2545
        %2547 = vmatprep.mubr.bf16.mxu0 %v985
        %2548 = vmatmul.mubr.bf16.gmra.mrb[0].mxu0 %v984
        %v2549 = vpop.f32.mrb[0].mxu0
        %v2550 = vadd.f32 %v2437, %v2549
        %v2551 = vpop.f32.mrb[0].mxu0
        %v2552 = vadd.f32 %v2439, %v2551
        %v2553 = vpop.f32.mrb[0].mxu0
        %v2554 = vadd.f32 %v2441, %v2553
        %v2555 = vpop.f32.mrb[0].mxu0
        %v2556 = vadd.f32 %v2443, %v2555
        %2557 = vmatprep.mubr.bf16.mxu0 %v993
        %2558 = vmatmul.mubr.bf16.gmra.mrb[0].mxu0 %v992
        %v2559 = vpop.f32.mrb[0].mxu0
        %v2560 = vadd.f32 %v2447, %v2559
        %v2561 = vpop.f32.mrb[0].mxu0
        %v2562 = vadd.f32 %v2449, %v2561
        %v2563 = vpop.f32.mrb[0].mxu0
        %v2564 = vadd.f32 %v2451, %v2563
        %v2565 = vpop.f32.mrb[0].mxu0
        %v2566 = vadd.f32 %v2453, %v2565
        %2567 = vdwg.mxu0
        %2568 = vmatprep.subr.bf16.mxu0 %v1959
        %2569 = vmatpush1.bf16.msra.mxu0 %v1958
        %2570 = vmatprep.subr.bf16.mxu0 %v1963
        %2571 = vmatpush1.bf16.msra.mxu0 %v1962
        %2572 = vmatprep.subr.bf16.mxu0 %v1967
        %2573 = vmatpush1.bf16.msra.mxu0 %v1966
        %2574 = vmatprep.subr.bf16.mxu0 %v1971
        %2575 = vmatpush1.bf16.msra.mxu0 %v1970
        %2576 = vmatprep.subr.bf16.mxu0 %v1975
        %2577 = vmatpush1.bf16.msra.mxu0 %v1974
        %2578 = vmatprep.subr.bf16.mxu0 %v1979
        %2579 = vmatpush1.bf16.msra.mxu0 %v1978
        %2580 = vmatprep.subr.bf16.mxu0 %v1983
        %2581 = vmatpush1.bf16.msra.mxu0 %v1982
        %2582 = vmatprep.subr.bf16.mxu0 %v1987
        %2583 = vmatpush1.bf16.msra.mxu0 %v1986
        %2584 = vmatprep.subr.bf16.mxu0 %v1991
        %2585 = vmatpush1.bf16.msra.mxu0 %v1990
        %2586 = vmatprep.subr.bf16.mxu0 %v1995
        %2587 = vmatpush1.bf16.msra.mxu0 %v1994
        %2588 = vmatprep.subr.bf16.mxu0 %v1999
        %2589 = vmatpush1.bf16.msra.mxu0 %v1998
        %2590 = vmatprep.subr.bf16.mxu0 %v2003
        %2591 = vmatpush1.bf16.msra.mxu0 %v2002
        %2592 = vmatprep.subr.bf16.mxu0 %v2007
        %2593 = vmatpush1.bf16.msra.mxu0 %v2006
        %2594 = vmatprep.subr.bf16.mxu0 %v2011
        %2595 = vmatpush1.bf16.msra.mxu0 %v2010
        %2596 = vmatprep.subr.bf16.mxu0 %v2015
        %2597 = vmatpush1.bf16.msra.mxu0 %v2014
        %2598 = vmatprep.subr.bf16.mxu0 %v2019
        %2599 = vmatpush1.bf16.msra.mxu0 %v2018
        %2600 = vmatprep.mubr.bf16.mxu0 %v939
        %2601 = vmatmul.mubr.bf16.gmra.mrb[0].mxu0 %v938
        %v2602 = vpop.f32.mrb[0].mxu0
        %v2603 = vadd.f32 %v2490, %v2602
        %v2604 = vpop.f32.mrb[0].mxu0
        %v2605 = vadd.f32 %v2492, %v2604
        %v2606 = vpop.f32.mrb[0].mxu0
        %v2607 = vadd.f32 %v2494, %v2606
        %v2608 = vpop.f32.mrb[0].mxu0
        %v2609 = vadd.f32 %v2496, %v2608
        %2610 = vmatprep.mubr.bf16.mxu0 %v947
        %2611 = vmatmul.mubr.bf16.gmra.mrb[0].mxu0 %v946
        %v2612 = vpop.f32.mrb[0].mxu0
        %v2613 = vadd.f32 %v2500, %v2612
        %v2614 = vpop.f32.mrb[0].mxu0
        %v2615 = vadd.f32 %v2502, %v2614
        %v2616 = vpop.f32.mrb[0].mxu0
        %v2617 = vadd.f32 %v2504, %v2616
        %v2618 = vpop.f32.mrb[0].mxu0
        %v2619 = vadd.f32 %v2506, %v2618
        %2620 = vmatprep.mubr.bf16.mxu0 %v955
        %2621 = vmatmul.mubr.bf16.gmra.mrb[0].mxu0 %v954
        %v2622 = vpop.f32.mrb[0].mxu0
        %v2623 = vadd.f32 %v2510, %v2622
        %v2624 = vpop.f32.mrb[0].mxu0
        %v2625 = vadd.f32 %v2512, %v2624
        %v2626 = vpop.f32.mrb[0].mxu0
        %v2627 = vadd.f32 %v2514, %v2626
        %v2628 = vpop.f32.mrb[0].mxu0
        %v2629 = vadd.f32 %v2516, %v2628
        %2630 = vmatprep.mubr.bf16.mxu0 %v963
        %2631 = vmatmul.mubr.bf16.gmra.mrb[0].mxu0 %v962
        %v2632 = vpop.f32.mrb[0].mxu0
        %v2633 = vadd.f32 %v2520, %v2632
        %v2634 = vpop.f32.mrb[0].mxu0
        %v2635 = vadd.f32 %v2522, %v2634
        %v2636 = vpop.f32.mrb[0].mxu0
        %v2637 = vadd.f32 %v2524, %v2636
        %v2638 = vpop.f32.mrb[0].mxu0
        %v2639 = vadd.f32 %v2526, %v2638
        %2640 = vmatprep.mubr.bf16.mxu0 %v971
        %2641 = vmatmul.mubr.bf16.gmra.mrb[0].mxu0 %v970
        %v2642 = vpop.f32.mrb[0].mxu0
        %v2643 = vadd.f32 %v2530, %v2642
        %v2644 = vpop.f32.mrb[0].mxu0
        %v2645 = vadd.f32 %v2532, %v2644
        %v2646 = vpop.f32.mrb[0].mxu0
        %v2647 = vadd.f32 %v2534, %v2646
        %v2648 = vpop.f32.mrb[0].mxu0
        %v2649 = vadd.f32 %v2536, %v2648
        %2650 = vmatprep.mubr.bf16.mxu0 %v979
        %2651 = vmatmul.mubr.bf16.gmra.mrb[0].mxu0 %v978
        %v2652 = vpop.f32.mrb[0].mxu0
        %v2653 = vadd.f32 %v2540, %v2652
        %v2654 = vpop.f32.mrb[0].mxu0
        %v2655 = vadd.f32 %v2542, %v2654
        %v2656 = vpop.f32.mrb[0].mxu0
        %v2657 = vadd.f32 %v2544, %v2656
        %v2658 = vpop.f32.mrb[0].mxu0
        %v2659 = vadd.f32 %v2546, %v2658
        %2660 = vmatprep.mubr.bf16.mxu0 %v987
        %2661 = vmatmul.mubr.bf16.gmra.mrb[0].mxu0 %v986
        %v2662 = vpop.f32.mrb[0].mxu0
        %v2663 = vadd.f32 %v2550, %v2662
        %v2664 = vpop.f32.mrb[0].mxu0
        %v2665 = vadd.f32 %v2552, %v2664
        %v2666 = vpop.f32.mrb[0].mxu0
        %v2667 = vadd.f32 %v2554, %v2666
        %v2668 = vpop.f32.mrb[0].mxu0
        %v2669 = vadd.f32 %v2556, %v2668
        %2670 = vmatprep.mubr.bf16.mxu0 %v995
        %2671 = vmatmul.mubr.bf16.gmra.mrb[0].mxu0 %v994
        %v2672 = vpop.f32.mrb[0].mxu0
        %v2673 = vadd.f32 %v2560, %v2672
        %v2674 = vpop.f32.mrb[0].mxu0
        %v2675 = vadd.f32 %v2562, %v2674
        %v2676 = vpop.f32.mrb[0].mxu0
        %v2677 = vadd.f32 %v2564, %v2676
        %v2678 = vpop.f32.mrb[0].mxu0
        %v2679 = vadd.f32 %v2566, %v2678
        %2680 = vdwg.mxu0
        %2681 = vmatprep.subr.bf16.mxu0 %v2023
        %2682 = vmatpush1.bf16.msra.mxu0 %v2022
        %2683 = vmatprep.subr.bf16.mxu0 %v2027
        %2684 = vmatpush1.bf16.msra.mxu0 %v2026
        %2685 = vmatprep.subr.bf16.mxu0 %v2031
        %2686 = vmatpush1.bf16.msra.mxu0 %v2030
        %2687 = vmatprep.subr.bf16.mxu0 %v2035
        %2688 = vmatpush1.bf16.msra.mxu0 %v2034
        %2689 = vmatprep.subr.bf16.mxu0 %v2039
        %2690 = vmatpush1.bf16.msra.mxu0 %v2038
        %2691 = vmatprep.subr.bf16.mxu0 %v2043
        %2692 = vmatpush1.bf16.msra.mxu0 %v2042
        %2693 = vmatprep.subr.bf16.mxu0 %v2047
        %2694 = vmatpush1.bf16.msra.mxu0 %v2046
        %2695 = vmatprep.subr.bf16.mxu0 %v2051
        %2696 = vmatpush1.bf16.msra.mxu0 %v2050
        %2697 = vmatprep.subr.bf16.mxu0 %v2055
        %2698 = vmatpush1.bf16.msra.mxu0 %v2054
        %2699 = vmatprep.subr.bf16.mxu0 %v2059
        %2700 = vmatpush1.bf16.msra.mxu0 %v2058
        %2701 = vmatprep.subr.bf16.mxu0 %v2063
        %2702 = vmatpush1.bf16.msra.mxu0 %v2062
        %2703 = vmatprep.subr.bf16.mxu0 %v2067
        %2704 = vmatpush1.bf16.msra.mxu0 %v2066
        %2705 = vmatprep.subr.bf16.mxu0 %v2071
        %2706 = vmatpush1.bf16.msra.mxu0 %v2070
        %2707 = vmatprep.subr.bf16.mxu0 %v2075
        %2708 = vmatpush1.bf16.msra.mxu0 %v2074
        %2709 = vmatprep.subr.bf16.mxu0 %v2079
        %2710 = vmatpush1.bf16.msra.mxu0 %v2078
        %2711 = vmatprep.subr.bf16.mxu0 %v2083
        %2712 = vmatpush1.bf16.msra.mxu0 %v2082
        %2713 = vmatprep.mubr.bf16.mxu0 %v941
        %2714 = vmatmul.mubr.bf16.gmra.mrb[0].mxu0 %v940
        %v2715 = vpop.f32.mrb[0].mxu0
        %v2716 = vadd.f32 %v2603, %v2715
        %v2717 = vpop.f32.mrb[0].mxu0
        %v2718 = vadd.f32 %v2605, %v2717
        %v2719 = vpop.f32.mrb[0].mxu0
        %v2720 = vadd.f32 %v2607, %v2719
        %v2721 = vpop.f32.mrb[0].mxu0
        %v2722 = vadd.f32 %v2609, %v2721
        %2723 = vmatprep.mubr.bf16.mxu0 %v949
        %2724 = vmatmul.mubr.bf16.gmra.mrb[0].mxu0 %v948
        %v2725 = vpop.f32.mrb[0].mxu0
        %v2726 = vadd.f32 %v2613, %v2725
        %v2727 = vpop.f32.mrb[0].mxu0
        %v2728 = vadd.f32 %v2615, %v2727
        %v2729 = vpop.f32.mrb[0].mxu0
        %v2730 = vadd.f32 %v2617, %v2729
        %v2731 = vpop.f32.mrb[0].mxu0
        %v2732 = vadd.f32 %v2619, %v2731
        %2733 = vmatprep.mubr.bf16.mxu0 %v957
        %2734 = vmatmul.mubr.bf16.gmra.mrb[0].mxu0 %v956
        %v2735 = vpop.f32.mrb[0].mxu0
        %v2736 = vadd.f32 %v2623, %v2735
        %v2737 = vpop.f32.mrb[0].mxu0
        %v2738 = vadd.f32 %v2625, %v2737
        %v2739 = vpop.f32.mrb[0].mxu0
        %v2740 = vadd.f32 %v2627, %v2739
        %v2741 = vpop.f32.mrb[0].mxu0
        %v2742 = vadd.f32 %v2629, %v2741
        %2743 = vmatprep.mubr.bf16.mxu0 %v965
        %2744 = vmatmul.mubr.bf16.gmra.mrb[0].mxu0 %v964
        %v2745 = vpop.f32.mrb[0].mxu0
        %v2746 = vadd.f32 %v2633, %v2745
        %v2747 = vpop.f32.mrb[0].mxu0
        %v2748 = vadd.f32 %v2635, %v2747
        %v2749 = vpop.f32.mrb[0].mxu0
        %v2750 = vadd.f32 %v2637, %v2749
        %v2751 = vpop.f32.mrb[0].mxu0
        %v2752 = vadd.f32 %v2639, %v2751
        %2753 = vmatprep.mubr.bf16.mxu0 %v973
        %2754 = vmatmul.mubr.bf16.gmra.mrb[0].mxu0 %v972
        %v2755 = vpop.f32.mrb[0].mxu0
        %v2756 = vadd.f32 %v2643, %v2755
        %v2757 = vpop.f32.mrb[0].mxu0
        %v2758 = vadd.f32 %v2645, %v2757
        %v2759 = vpop.f32.mrb[0].mxu0
        %v2760 = vadd.f32 %v2647, %v2759
        %v2761 = vpop.f32.mrb[0].mxu0
        %v2762 = vadd.f32 %v2649, %v2761
        %2763 = vmatprep.mubr.bf16.mxu0 %v981
        %2764 = vmatmul.mubr.bf16.gmra.mrb[0].mxu0 %v980
        %v2765 = vpop.f32.mrb[0].mxu0
        %v2766 = vadd.f32 %v2653, %v2765
        %v2767 = vpop.f32.mrb[0].mxu0
        %v2768 = vadd.f32 %v2655, %v2767
        %v2769 = vpop.f32.mrb[0].mxu0
        %v2770 = vadd.f32 %v2657, %v2769
        %v2771 = vpop.f32.mrb[0].mxu0
        %v2772 = vadd.f32 %v2659, %v2771
        %2773 = vmatprep.mubr.bf16.mxu0 %v989
        %2774 = vmatmul.mubr.bf16.gmra.mrb[0].mxu0 %v988
        %v2775 = vpop.f32.mrb[0].mxu0
        %v2776 = vadd.f32 %v2663, %v2775
        %v2777 = vpop.f32.mrb[0].mxu0
        %v2778 = vadd.f32 %v2665, %v2777
        %v2779 = vpop.f32.mrb[0].mxu0
        %v2780 = vadd.f32 %v2667, %v2779
        %v2781 = vpop.f32.mrb[0].mxu0
        %v2782 = vadd.f32 %v2669, %v2781
        %2783 = vmatprep.mubr.bf16.mxu0 %v997
        %2784 = vmatmul.mubr.bf16.gmra.mrb[0].mxu0 %v996
        %v2785 = vpop.f32.mrb[0].mxu0
        %v2786 = vadd.f32 %v2673, %v2785
        %v2787 = vpop.f32.mrb[0].mxu0
        %v2788 = vadd.f32 %v2675, %v2787
        %v2789 = vpop.f32.mrb[0].mxu0
        %v2790 = vadd.f32 %v2677, %v2789
        %v2791 = vpop.f32.mrb[0].mxu0
        %v2792 = vadd.f32 %v2679, %v2791
        %2793 = vdwg.mxu0
        %2794 = vmatprep.subr.bf16.mxu0 %v1833
        %2795 = vmatpush1.bf16.msra.mxu0 %v1832
        %2796 = vmatprep.subr.bf16.mxu0 %v1837
        %2797 = vmatpush1.bf16.msra.mxu0 %v1836
        %2798 = vmatprep.subr.bf16.mxu0 %v1841
        %2799 = vmatpush1.bf16.msra.mxu0 %v1840
        %2800 = vmatprep.subr.bf16.mxu0 %v1845
        %2801 = vmatpush1.bf16.msra.mxu0 %v1844
        %2802 = vmatprep.subr.bf16.mxu0 %v1849
        %2803 = vmatpush1.bf16.msra.mxu0 %v1848
        %2804 = vmatprep.subr.bf16.mxu0 %v1853
        %2805 = vmatpush1.bf16.msra.mxu0 %v1852
        %2806 = vmatprep.subr.bf16.mxu0 %v1857
        %2807 = vmatpush1.bf16.msra.mxu0 %v1856
        %2808 = vmatprep.subr.bf16.mxu0 %v1861
        %2809 = vmatpush1.bf16.msra.mxu0 %v1860
        %2810 = vmatprep.subr.bf16.mxu0 %v1865
        %2811 = vmatpush1.bf16.msra.mxu0 %v1864
        %2812 = vmatprep.subr.bf16.mxu0 %v1869
        %2813 = vmatpush1.bf16.msra.mxu0 %v1868
        %2814 = vmatprep.subr.bf16.mxu0 %v1873
        %2815 = vmatpush1.bf16.msra.mxu0 %v1872
        %2816 = vmatprep.subr.bf16.mxu0 %v1877
        %2817 = vmatpush1.bf16.msra.mxu0 %v1876
        %2818 = vmatprep.subr.bf16.mxu0 %v1881
        %2819 = vmatpush1.bf16.msra.mxu0 %v1880
        %2820 = vmatprep.subr.bf16.mxu0 %v1885
        %2821 = vmatpush1.bf16.msra.mxu0 %v1884
        %2822 = vmatprep.subr.bf16.mxu0 %v1889
        %2823 = vmatpush1.bf16.msra.mxu0 %v1888
        %2824 = vmatprep.subr.bf16.mxu0 %v1893
        %2825 = vmatpush1.bf16.msra.mxu0 %v1892
        %2826 = vmatprep.mubr.bf16.mxu0 %v935
        %2827 = vmatmul.mubr.bf16.gmra.mrb[0].mxu0 %v934
        %v2828 = vpop.f32.mrb[0].mxu0
        %v2829 = vadd.f32 %v733, %v2828
        %v2830 = vpop.f32.mrb[0].mxu0
        %v2831 = vadd.f32 %v737, %v2830
        %v2832 = vpop.f32.mrb[0].mxu0
        %v2833 = vadd.f32 %v733, %v2832
        %v2834 = vpop.f32.mrb[0].mxu0
        %v2835 = vadd.f32 %v737, %v2834
        %2836 = vmatprep.mubr.bf16.mxu0 %v943
        %2837 = vmatmul.mubr.bf16.gmra.mrb[0].mxu0 %v942
        %v2838 = vpop.f32.mrb[0].mxu0
        %v2839 = vadd.f32 %v733, %v2838
        %v2840 = vpop.f32.mrb[0].mxu0
        %v2841 = vadd.f32 %v737, %v2840
        %v2842 = vpop.f32.mrb[0].mxu0
        %v2843 = vadd.f32 %v733, %v2842
        %v2844 = vpop.f32.mrb[0].mxu0
        %v2845 = vadd.f32 %v737, %v2844
        %2846 = vmatprep.mubr.bf16.mxu0 %v951
        %2847 = vmatmul.mubr.bf16.gmra.mrb[0].mxu0 %v950
        %v2848 = vpop.f32.mrb[0].mxu0
        %v2849 = vadd.f32 %v733, %v2848
        %v2850 = vpop.f32.mrb[0].mxu0
        %v2851 = vadd.f32 %v737, %v2850
        %v2852 = vpop.f32.mrb[0].mxu0
        %v2853 = vadd.f32 %v733, %v2852
        %v2854 = vpop.f32.mrb[0].mxu0
        %v2855 = vadd.f32 %v737, %v2854
        %2856 = vmatprep.mubr.bf16.mxu0 %v959
        %2857 = vmatmul.mubr.bf16.gmra.mrb[0].mxu0 %v958
        %v2858 = vpop.f32.mrb[0].mxu0
        %v2859 = vadd.f32 %v733, %v2858
        %v2860 = vpop.f32.mrb[0].mxu0
        %v2861 = vadd.f32 %v737, %v2860
        %v2862 = vpop.f32.mrb[0].mxu0
        %v2863 = vadd.f32 %v733, %v2862
        %v2864 = vpop.f32.mrb[0].mxu0
        %v2865 = vadd.f32 %v737, %v2864
        %2866 = vmatprep.mubr.bf16.mxu0 %v967
        %2867 = vmatmul.mubr.bf16.gmra.mrb[0].mxu0 %v966
        %v2868 = vpop.f32.mrb[0].mxu0
        %v2869 = vadd.f32 %v733, %v2868
        %v2870 = vpop.f32.mrb[0].mxu0
        %v2871 = vadd.f32 %v737, %v2870
        %v2872 = vpop.f32.mrb[0].mxu0
        %v2873 = vadd.f32 %v733, %v2872
        %v2874 = vpop.f32.mrb[0].mxu0
        %v2875 = vadd.f32 %v737, %v2874
        %2876 = vmatprep.mubr.bf16.mxu0 %v975
        %2877 = vmatmul.mubr.bf16.gmra.mrb[0].mxu0 %v974
        %v2878 = vpop.f32.mrb[0].mxu0
        %v2879 = vadd.f32 %v733, %v2878
        %v2880 = vpop.f32.mrb[0].mxu0
        %v2881 = vadd.f32 %v737, %v2880
        %v2882 = vpop.f32.mrb[0].mxu0
        %v2883 = vadd.f32 %v733, %v2882
        %v2884 = vpop.f32.mrb[0].mxu0
        %v2885 = vadd.f32 %v737, %v2884
        %2886 = vmatprep.mubr.bf16.mxu0 %v983
        %2887 = vmatmul.mubr.bf16.gmra.mrb[0].mxu0 %v982
        %v2888 = vpop.f32.mrb[0].mxu0
        %v2889 = vadd.f32 %v733, %v2888
        %v2890 = vpop.f32.mrb[0].mxu0
        %v2891 = vadd.f32 %v737, %v2890
        %v2892 = vpop.f32.mrb[0].mxu0
        %v2893 = vadd.f32 %v733, %v2892
        %v2894 = vpop.f32.mrb[0].mxu0
        %v2895 = vadd.f32 %v737, %v2894
        %2896 = vmatprep.mubr.bf16.mxu0 %v991
        %2897 = vmatmul.mubr.bf16.gmra.mrb[0].mxu0 %v990
        %v2898 = vpop.f32.mrb[0].mxu0
        %v2899 = vadd.f32 %v733, %v2898
        %v2900 = vpop.f32.mrb[0].mxu0
        %v2901 = vadd.f32 %v737, %v2900
        %v2902 = vpop.f32.mrb[0].mxu0
        %v2903 = vadd.f32 %v733, %v2902
        %v2904 = vpop.f32.mrb[0].mxu0
        %v2905 = vadd.f32 %v737, %v2904
        %2906 = vdwg.mxu0
        %2907 = vmatprep.subr.bf16.mxu0 %v1897
        %2908 = vmatpush1.bf16.msra.mxu0 %v1896
        %2909 = vmatprep.subr.bf16.mxu0 %v1901
        %2910 = vmatpush1.bf16.msra.mxu0 %v1900
        %2911 = vmatprep.subr.bf16.mxu0 %v1905
        %2912 = vmatpush1.bf16.msra.mxu0 %v1904
        %2913 = vmatprep.subr.bf16.mxu0 %v1909
        %2914 = vmatpush1.bf16.msra.mxu0 %v1908
        %2915 = vmatprep.subr.bf16.mxu0 %v1913
        %2916 = vmatpush1.bf16.msra.mxu0 %v1912
        %2917 = vmatprep.subr.bf16.mxu0 %v1917
        %2918 = vmatpush1.bf16.msra.mxu0 %v1916
        %2919 = vmatprep.subr.bf16.mxu0 %v1921
        %2920 = vmatpush1.bf16.msra.mxu0 %v1920
        %2921 = vmatprep.subr.bf16.mxu0 %v1925
        %2922 = vmatpush1.bf16.msra.mxu0 %v1924
        %2923 = vmatprep.subr.bf16.mxu0 %v1929
        %2924 = vmatpush1.bf16.msra.mxu0 %v1928
        %2925 = vmatprep.subr.bf16.mxu0 %v1933
        %2926 = vmatpush1.bf16.msra.mxu0 %v1932
        %2927 = vmatprep.subr.bf16.mxu0 %v1937
        %2928 = vmatpush1.bf16.msra.mxu0 %v1936
        %2929 = vmatprep.subr.bf16.mxu0 %v1941
        %2930 = vmatpush1.bf16.msra.mxu0 %v1940
        %2931 = vmatprep.subr.bf16.mxu0 %v1945
        %2932 = vmatpush1.bf16.msra.mxu0 %v1944
        %2933 = vmatprep.subr.bf16.mxu0 %v1949
        %2934 = vmatpush1.bf16.msra.mxu0 %v1948
        %2935 = vmatprep.subr.bf16.mxu0 %v1953
        %2936 = vmatpush1.bf16.msra.mxu0 %v1952
        %2937 = vmatprep.subr.bf16.mxu0 %v1957
        %2938 = vmatpush1.bf16.msra.mxu0 %v1956
        %2939 = vmatprep.mubr.bf16.mxu0 %v937
        %2940 = vmatmul.mubr.bf16.gmra.mrb[0].mxu0 %v936
        %v2941 = vpop.f32.mrb[0].mxu0
        %v2942 = vadd.f32 %v2829, %v2941
        %v2943 = vpop.f32.mrb[0].mxu0
        %v2944 = vadd.f32 %v2831, %v2943
        %v2945 = vpop.f32.mrb[0].mxu0
        %v2946 = vadd.f32 %v2833, %v2945
        %v2947 = vpop.f32.mrb[0].mxu0
        %v2948 = vadd.f32 %v2835, %v2947
        %2949 = vmatprep.mubr.bf16.mxu0 %v945
        %2950 = vmatmul.mubr.bf16.gmra.mrb[0].mxu0 %v944
        %v2951 = vpop.f32.mrb[0].mxu0
        %v2952 = vadd.f32 %v2839, %v2951
        %v2953 = vpop.f32.mrb[0].mxu0
        %v2954 = vadd.f32 %v2841, %v2953
        %v2955 = vpop.f32.mrb[0].mxu0
        %v2956 = vadd.f32 %v2843, %v2955
        %v2957 = vpop.f32.mrb[0].mxu0
        %v2958 = vadd.f32 %v2845, %v2957
        %2959 = vmatprep.mubr.bf16.mxu0 %v953
        %2960 = vmatmul.mubr.bf16.gmra.mrb[0].mxu0 %v952
        %v2961 = vpop.f32.mrb[0].mxu0
        %v2962 = vadd.f32 %v2849, %v2961
        %v2963 = vpop.f32.mrb[0].mxu0
        %v2964 = vadd.f32 %v2851, %v2963
        %v2965 = vpop.f32.mrb[0].mxu0
        %v2966 = vadd.f32 %v2853, %v2965
        %v2967 = vpop.f32.mrb[0].mxu0
        %v2968 = vadd.f32 %v2855, %v2967
        %2969 = vmatprep.mubr.bf16.mxu0 %v961
        %2970 = vmatmul.mubr.bf16.gmra.mrb[0].mxu0 %v960
        %v2971 = vpop.f32.mrb[0].mxu0
        %v2972 = vadd.f32 %v2859, %v2971
        %v2973 = vpop.f32.mrb[0].mxu0
        %v2974 = vadd.f32 %v2861, %v2973
        %v2975 = vpop.f32.mrb[0].mxu0
        %v2976 = vadd.f32 %v2863, %v2975
        %v2977 = vpop.f32.mrb[0].mxu0
        %v2978 = vadd.f32 %v2865, %v2977
        %2979 = vmatprep.mubr.bf16.mxu0 %v969
        %2980 = vmatmul.mubr.bf16.gmra.mrb[0].mxu0 %v968
        %v2981 = vpop.f32.mrb[0].mxu0
        %v2982 = vadd.f32 %v2869, %v2981
        %v2983 = vpop.f32.mrb[0].mxu0
        %v2984 = vadd.f32 %v2871, %v2983
        %v2985 = vpop.f32.mrb[0].mxu0
        %v2986 = vadd.f32 %v2873, %v2985
        %v2987 = vpop.f32.mrb[0].mxu0
        %v2988 = vadd.f32 %v2875, %v2987
        %2989 = vmatprep.mubr.bf16.mxu0 %v977
        %2990 = vmatmul.mubr.bf16.gmra.mrb[0].mxu0 %v976
        %v2991 = vpop.f32.mrb[0].mxu0
        %v2992 = vadd.f32 %v2879, %v2991
        %v2993 = vpop.f32.mrb[0].mxu0
        %v2994 = vadd.f32 %v2881, %v2993
        %v2995 = vpop.f32.mrb[0].mxu0
        %v2996 = vadd.f32 %v2883, %v2995
        %v2997 = vpop.f32.mrb[0].mxu0
        %v2998 = vadd.f32 %v2885, %v2997
        %2999 = vmatprep.mubr.bf16.mxu0 %v985
        %3000 = vmatmul.mubr.bf16.gmra.mrb[0].mxu0 %v984
        %v3001 = vpop.f32.mrb[0].mxu0
        %v3002 = vadd.f32 %v2889, %v3001
        %v3003 = vpop.f32.mrb[0].mxu0
        %v3004 = vadd.f32 %v2891, %v3003
        %v3005 = vpop.f32.mrb[0].mxu0
        %v3006 = vadd.f32 %v2893, %v3005
        %v3007 = vpop.f32.mrb[0].mxu0
        %v3008 = vadd.f32 %v2895, %v3007
        %3009 = vmatprep.mubr.bf16.mxu0 %v993
        %3010 = vmatmul.mubr.bf16.gmra.mrb[0].mxu0 %v992
        %v3011 = vpop.f32.mrb[0].mxu0
        %v3012 = vadd.f32 %v2899, %v3011
        %v3013 = vpop.f32.mrb[0].mxu0
        %v3014 = vadd.f32 %v2901, %v3013
        %v3015 = vpop.f32.mrb[0].mxu0
        %v3016 = vadd.f32 %v2903, %v3015
        %v3017 = vpop.f32.mrb[0].mxu0
        %v3018 = vadd.f32 %v2905, %v3017
        %3019 = vdwg.mxu0
        %3020 = vmatprep.subr.bf16.mxu0 %v1961
        %3021 = vmatpush1.bf16.msra.mxu0 %v1960
        %3022 = vmatprep.subr.bf16.mxu0 %v1965
        %3023 = vmatpush1.bf16.msra.mxu0 %v1964
        %3024 = vmatprep.subr.bf16.mxu0 %v1969
        %3025 = vmatpush1.bf16.msra.mxu0 %v1968
        %3026 = vmatprep.subr.bf16.mxu0 %v1973
        %3027 = vmatpush1.bf16.msra.mxu0 %v1972
        %3028 = vmatprep.subr.bf16.mxu0 %v1977
        %3029 = vmatpush1.bf16.msra.mxu0 %v1976
        %3030 = vmatprep.subr.bf16.mxu0 %v1981
        %3031 = vmatpush1.bf16.msra.mxu0 %v1980
        %3032 = vmatprep.subr.bf16.mxu0 %v1985
        %3033 = vmatpush1.bf16.msra.mxu0 %v1984
        %3034 = vmatprep.subr.bf16.mxu0 %v1989
        %3035 = vmatpush1.bf16.msra.mxu0 %v1988
        %3036 = vmatprep.subr.bf16.mxu0 %v1993
        %3037 = vmatpush1.bf16.msra.mxu0 %v1992
        %3038 = vmatprep.subr.bf16.mxu0 %v1997
        %3039 = vmatpush1.bf16.msra.mxu0 %v1996
        %3040 = vmatprep.subr.bf16.mxu0 %v2001
        %3041 = vmatpush1.bf16.msra.mxu0 %v2000
        %3042 = vmatprep.subr.bf16.mxu0 %v2005
        %3043 = vmatpush1.bf16.msra.mxu0 %v2004
        %3044 = vmatprep.subr.bf16.mxu0 %v2009
        %3045 = vmatpush1.bf16.msra.mxu0 %v2008
        %3046 = vmatprep.subr.bf16.mxu0 %v2013
        %3047 = vmatpush1.bf16.msra.mxu0 %v2012
        %3048 = vmatprep.subr.bf16.mxu0 %v2017
        %3049 = vmatpush1.bf16.msra.mxu0 %v2016
        %3050 = vmatprep.subr.bf16.mxu0 %v2021
        %3051 = vmatpush1.bf16.msra.mxu0 %v2020
        %3052 = vmatprep.mubr.bf16.mxu0 %v939
        %3053 = vmatmul.mubr.bf16.gmra.mrb[0].mxu0 %v938
        %v3054 = vpop.f32.mrb[0].mxu0
        %v3055 = vadd.f32 %v2942, %v3054
        %v3056 = vpop.f32.mrb[0].mxu0
        %v3057 = vadd.f32 %v2944, %v3056
        %v3058 = vpop.f32.mrb[0].mxu0
        %v3059 = vadd.f32 %v2946, %v3058
        %v3060 = vpop.f32.mrb[0].mxu0
        %v3061 = vadd.f32 %v2948, %v3060
        %3062 = vmatprep.mubr.bf16.mxu0 %v947
        %3063 = vmatmul.mubr.bf16.gmra.mrb[0].mxu0 %v946
        %v3064 = vpop.f32.mrb[0].mxu0
        %v3065 = vadd.f32 %v2952, %v3064
        %v3066 = vpop.f32.mrb[0].mxu0
        %v3067 = vadd.f32 %v2954, %v3066
        %v3068 = vpop.f32.mrb[0].mxu0
        %v3069 = vadd.f32 %v2956, %v3068
        %v3070 = vpop.f32.mrb[0].mxu0
        %v3071 = vadd.f32 %v2958, %v3070
        %3072 = vmatprep.mubr.bf16.mxu0 %v955
        %3073 = vmatmul.mubr.bf16.gmra.mrb[0].mxu0 %v954
        %v3074 = vpop.f32.mrb[0].mxu0
        %v3075 = vadd.f32 %v2962, %v3074
        %v3076 = vpop.f32.mrb[0].mxu0
        %v3077 = vadd.f32 %v2964, %v3076
        %v3078 = vpop.f32.mrb[0].mxu0
        %v3079 = vadd.f32 %v2966, %v3078
        %v3080 = vpop.f32.mrb[0].mxu0
        %v3081 = vadd.f32 %v2968, %v3080
        %3082 = vmatprep.mubr.bf16.mxu0 %v963
        %3083 = vmatmul.mubr.bf16.gmra.mrb[0].mxu0 %v962
        %v3084 = vpop.f32.mrb[0].mxu0
        %v3085 = vadd.f32 %v2972, %v3084
        %v3086 = vpop.f32.mrb[0].mxu0
        %v3087 = vadd.f32 %v2974, %v3086
        %v3088 = vpop.f32.mrb[0].mxu0
        %v3089 = vadd.f32 %v2976, %v3088
        %v3090 = vpop.f32.mrb[0].mxu0
        %v3091 = vadd.f32 %v2978, %v3090
        %3092 = vmatprep.mubr.bf16.mxu0 %v971
        %3093 = vmatmul.mubr.bf16.gmra.mrb[0].mxu0 %v970
        %v3094 = vpop.f32.mrb[0].mxu0
        %v3095 = vadd.f32 %v2982, %v3094
        %v3096 = vpop.f32.mrb[0].mxu0
        %v3097 = vadd.f32 %v2984, %v3096
        %v3098 = vpop.f32.mrb[0].mxu0
        %v3099 = vadd.f32 %v2986, %v3098
        %v3100 = vpop.f32.mrb[0].mxu0
        %v3101 = vadd.f32 %v2988, %v3100
        %3102 = vmatprep.mubr.bf16.mxu0 %v979
        %3103 = vmatmul.mubr.bf16.gmra.mrb[0].mxu0 %v978
        %v3104 = vpop.f32.mrb[0].mxu0
        %v3105 = vadd.f32 %v2992, %v3104
        %v3106 = vpop.f32.mrb[0].mxu0
        %v3107 = vadd.f32 %v2994, %v3106
        %v3108 = vpop.f32.mrb[0].mxu0
        %v3109 = vadd.f32 %v2996, %v3108
        %v3110 = vpop.f32.mrb[0].mxu0
        %v3111 = vadd.f32 %v2998, %v3110
        %3112 = vmatprep.mubr.bf16.mxu0 %v987
        %3113 = vmatmul.mubr.bf16.gmra.mrb[0].mxu0 %v986
        %v3114 = vpop.f32.mrb[0].mxu0
        %v3115 = vadd.f32 %v3002, %v3114
        %v3116 = vpop.f32.mrb[0].mxu0
        %v3117 = vadd.f32 %v3004, %v3116
        %v3118 = vpop.f32.mrb[0].mxu0
        %v3119 = vadd.f32 %v3006, %v3118
        %v3120 = vpop.f32.mrb[0].mxu0
        %v3121 = vadd.f32 %v3008, %v3120
        %3122 = vmatprep.mubr.bf16.mxu0 %v995
        %3123 = vmatmul.mubr.bf16.gmra.mrb[0].mxu0 %v994
        %v3124 = vpop.f32.mrb[0].mxu0
        %v3125 = vadd.f32 %v3012, %v3124
        %v3126 = vpop.f32.mrb[0].mxu0
        %v3127 = vadd.f32 %v3014, %v3126
        %v3128 = vpop.f32.mrb[0].mxu0
        %v3129 = vadd.f32 %v3016, %v3128
        %v3130 = vpop.f32.mrb[0].mxu0
        %v3131 = vadd.f32 %v3018, %v3130
        %3132 = vdwg.mxu0
        %3133 = vmatprep.subr.bf16.mxu0 %v2025
        %3134 = vmatpush1.bf16.msra.mxu0 %v2024
        %3135 = vmatprep.subr.bf16.mxu0 %v2029
        %3136 = vmatpush1.bf16.msra.mxu0 %v2028
        %3137 = vmatprep.subr.bf16.mxu0 %v2033
        %3138 = vmatpush1.bf16.msra.mxu0 %v2032
        %3139 = vmatprep.subr.bf16.mxu0 %v2037
        %3140 = vmatpush1.bf16.msra.mxu0 %v2036
        %3141 = vmatprep.subr.bf16.mxu0 %v2041
        %3142 = vmatpush1.bf16.msra.mxu0 %v2040
        %3143 = vmatprep.subr.bf16.mxu0 %v2045
        %3144 = vmatpush1.bf16.msra.mxu0 %v2044
        %3145 = vmatprep.subr.bf16.mxu0 %v2049
        %3146 = vmatpush1.bf16.msra.mxu0 %v2048
        %3147 = vmatprep.subr.bf16.mxu0 %v2053
        %3148 = vmatpush1.bf16.msra.mxu0 %v2052
        %3149 = vmatprep.subr.bf16.mxu0 %v2057
        %3150 = vmatpush1.bf16.msra.mxu0 %v2056
        %3151 = vmatprep.subr.bf16.mxu0 %v2061
        %3152 = vmatpush1.bf16.msra.mxu0 %v2060
        %3153 = vmatprep.subr.bf16.mxu0 %v2065
        %3154 = vmatpush1.bf16.msra.mxu0 %v2064
        %3155 = vmatprep.subr.bf16.mxu0 %v2069
        %3156 = vmatpush1.bf16.msra.mxu0 %v2068
        %3157 = vmatprep.subr.bf16.mxu0 %v2073
        %3158 = vmatpush1.bf16.msra.mxu0 %v2072
        %3159 = vmatprep.subr.bf16.mxu0 %v2077
        %3160 = vmatpush1.bf16.msra.mxu0 %v2076
        %3161 = vmatprep.subr.bf16.mxu0 %v2081
        %3162 = vmatpush1.bf16.msra.mxu0 %v2080
        %3163 = vmatprep.subr.bf16.mxu0 %v2085
        %3164 = vmatpush1.bf16.msra.mxu0 %v2084
        %3165 = vmatprep.mubr.bf16.mxu0 %v941
        %3166 = vmatmul.mubr.bf16.gmra.mrb[0].mxu0 %v940
        %v3167 = vpop.f32.mrb[0].mxu0
        %v3168 = vadd.f32 %v3055, %v3167
        %v3169 = vpop.f32.mrb[0].mxu0
        %v3170 = vadd.f32 %v3057, %v3169
        %v3171 = vpop.f32.mrb[0].mxu0
        %v3172 = vadd.f32 %v3059, %v3171
        %v3173 = vpop.f32.mrb[0].mxu0
        %v3174 = vadd.f32 %v3061, %v3173
        %3175 = vmatprep.mubr.bf16.mxu0 %v949
        %3176 = vmatmul.mubr.bf16.gmra.mrb[0].mxu0 %v948
        %v3177 = vpop.f32.mrb[0].mxu0
        %v3178 = vadd.f32 %v3065, %v3177
        %v3179 = vpop.f32.mrb[0].mxu0
        %v3180 = vadd.f32 %v3067, %v3179
        %v3181 = vpop.f32.mrb[0].mxu0
        %v3182 = vadd.f32 %v3069, %v3181
        %v3183 = vpop.f32.mrb[0].mxu0
        %v3184 = vadd.f32 %v3071, %v3183
        %3185 = vmatprep.mubr.bf16.mxu0 %v957
        %3186 = vmatmul.mubr.bf16.gmra.mrb[0].mxu0 %v956
        %v3187 = vpop.f32.mrb[0].mxu0
        %v3188 = vadd.f32 %v3075, %v3187
        %v3189 = vpop.f32.mrb[0].mxu0
        %v3190 = vadd.f32 %v3077, %v3189
        %v3191 = vpop.f32.mrb[0].mxu0
        %v3192 = vadd.f32 %v3079, %v3191
        %v3193 = vpop.f32.mrb[0].mxu0
        %v3194 = vadd.f32 %v3081, %v3193
        %3195 = vmatprep.mubr.bf16.mxu0 %v965
        %3196 = vmatmul.mubr.bf16.gmra.mrb[0].mxu0 %v964
        %v3197 = vpop.f32.mrb[0].mxu0
        %v3198 = vadd.f32 %v3085, %v3197
        %v3199 = vpop.f32.mrb[0].mxu0
        %v3200 = vadd.f32 %v3087, %v3199
        %v3201 = vpop.f32.mrb[0].mxu0
        %v3202 = vadd.f32 %v3089, %v3201
        %v3203 = vpop.f32.mrb[0].mxu0
        %v3204 = vadd.f32 %v3091, %v3203
        %3205 = vmatprep.mubr.bf16.mxu0 %v973
        %3206 = vmatmul.mubr.bf16.gmra.mrb[0].mxu0 %v972
        %v3207 = vpop.f32.mrb[0].mxu0
        %v3208 = vadd.f32 %v3095, %v3207
        %v3209 = vpop.f32.mrb[0].mxu0
        %v3210 = vadd.f32 %v3097, %v3209
        %v3211 = vpop.f32.mrb[0].mxu0
        %v3212 = vadd.f32 %v3099, %v3211
        %v3213 = vpop.f32.mrb[0].mxu0
        %v3214 = vadd.f32 %v3101, %v3213
        %3215 = vmatprep.mubr.bf16.mxu0 %v981
        %3216 = vmatmul.mubr.bf16.gmra.mrb[0].mxu0 %v980
        %v3217 = vpop.f32.mrb[0].mxu0
        %v3218 = vadd.f32 %v3105, %v3217
        %v3219 = vpop.f32.mrb[0].mxu0
        %v3220 = vadd.f32 %v3107, %v3219
        %v3221 = vpop.f32.mrb[0].mxu0
        %v3222 = vadd.f32 %v3109, %v3221
        %v3223 = vpop.f32.mrb[0].mxu0
        %v3224 = vadd.f32 %v3111, %v3223
        %3225 = vmatprep.mubr.bf16.mxu0 %v989
        %3226 = vmatmul.mubr.bf16.gmra.mrb[0].mxu0 %v988
        %v3227 = vpop.f32.mrb[0].mxu0
        %v3228 = vadd.f32 %v3115, %v3227
        %v3229 = vpop.f32.mrb[0].mxu0
        %v3230 = vadd.f32 %v3117, %v3229
        %v3231 = vpop.f32.mrb[0].mxu0
        %v3232 = vadd.f32 %v3119, %v3231
        %v3233 = vpop.f32.mrb[0].mxu0
        %v3234 = vadd.f32 %v3121, %v3233
        %3235 = vmatprep.mubr.bf16.mxu0 %v997
        %3236 = vmatmul.mubr.bf16.gmra.mrb[0].mxu0 %v996
        %v3237 = vpop.f32.mrb[0].mxu0
        %v3238 = vadd.f32 %v3125, %v3237
        %v3239 = vpop.f32.mrb[0].mxu0
        %v3240 = vadd.f32 %v3127, %v3239
        %v3241 = vpop.f32.mrb[0].mxu0
        %v3242 = vadd.f32 %v3129, %v3241
        %v3243 = vpop.f32.mrb[0].mxu0
        %v3244 = vadd.f32 %v3131, %v3243
        %3245 = vdwg.mxu0
        %v3246 = vmax.f32 %v2716, 0.0
        %v3247 = vmax.f32 %v2718, 0.0
        %v3248 = vmax.f32 %v3168, 0.0
        %v3249 = vmax.f32 %v3170, 0.0
        %v3250 = vmax.f32 %v2720, 0.0
        %v3251 = vmax.f32 %v2722, 0.0
        %v3252 = vmax.f32 %v3172, 0.0
        %v3253 = vmax.f32 %v3174, 0.0
        %v3254 = vmax.f32 %v2726, 0.0
        %v3255 = vmax.f32 %v2728, 0.0
        %v3256 = vmax.f32 %v3178, 0.0
        %v3257 = vmax.f32 %v3180, 0.0
        %v3258 = vmax.f32 %v2730, 0.0
        %v3259 = vmax.f32 %v2732, 0.0
        %v3260 = vmax.f32 %v3182, 0.0
        %v3261 = vmax.f32 %v3184, 0.0
        %v3262 = vmax.f32 %v2736, 0.0
        %v3263 = vmax.f32 %v2738, 0.0
        %v3264 = vmax.f32 %v3188, 0.0
        %v3265 = vmax.f32 %v3190, 0.0
        %v3266 = vmax.f32 %v2740, 0.0
        %v3267 = vmax.f32 %v2742, 0.0
        %v3268 = vmax.f32 %v3192, 0.0
        %v3269 = vmax.f32 %v3194, 0.0
        %v3270 = vmax.f32 %v2746, 0.0
        %v3271 = vmax.f32 %v2748, 0.0
        %v3272 = vmax.f32 %v3198, 0.0
        %v3273 = vmax.f32 %v3200, 0.0
        %v3274 = vmax.f32 %v2750, 0.0
        %v3275 = vmax.f32 %v2752, 0.0
        %v3276 = vmax.f32 %v3202, 0.0
        %v3277 = vmax.f32 %v3204, 0.0
        %v3278 = vmax.f32 %v2756, 0.0
        %v3279 = vmax.f32 %v2758, 0.0
        %v3280 = vmax.f32 %v3208, 0.0
        %v3281 = vmax.f32 %v3210, 0.0
        %v3282 = vmax.f32 %v2760, 0.0
        %v3283 = vmax.f32 %v2762, 0.0
        %v3284 = vmax.f32 %v3212, 0.0
        %v3285 = vmax.f32 %v3214, 0.0
        %v3286 = vmax.f32 %v2766, 0.0
        %v3287 = vmax.f32 %v2768, 0.0
        %v3288 = vmax.f32 %v3218, 0.0
        %v3289 = vmax.f32 %v3220, 0.0
        %v3290 = vmax.f32 %v2770, 0.0
        %v3291 = vmax.f32 %v2772, 0.0
        %v3292 = vmax.f32 %v3222, 0.0
        %v3293 = vmax.f32 %v3224, 0.0
        %v3294 = vmax.f32 %v2776, 0.0
        %v3295 = vmax.f32 %v2778, 0.0
        %v3296 = vmax.f32 %v3228, 0.0
        %v3297 = vmax.f32 %v3230, 0.0
        %v3298 = vmax.f32 %v2780, 0.0
        %v3299 = vmax.f32 %v2782, 0.0
        %v3300 = vmax.f32 %v3232, 0.0
        %v3301 = vmax.f32 %v3234, 0.0
        %v3302 = vmax.f32 %v2786, 0.0
        %v3303 = vmax.f32 %v2788, 0.0
        %v3304 = vmax.f32 %v3238, 0.0
        %v3305 = vmax.f32 %v3240, 0.0
        %v3306 = vmax.f32 %v2790, 0.0
        %v3307 = vmax.f32 %v2792, 0.0
        %v3308 = vmax.f32 %v3242, 0.0
        %v3309 = vmax.f32 %v3244, 0.0
        %v3310 = vpack.c.bf16 %v3250, %v3246
        %v3311 = vpack.c.bf16 %v3251, %v3247
        %v3312 = vpack.c.bf16 %v3252, %v3248
        %v3313 = vpack.c.bf16 %v3253, %v3249
        %v3314 = vpack.c.bf16 %v3258, %v3254
        %v3315 = vpack.c.bf16 %v3259, %v3255
        %v3316 = vpack.c.bf16 %v3260, %v3256
        %v3317 = vpack.c.bf16 %v3261, %v3257
        %v3318 = vpack.c.bf16 %v3266, %v3262
        %v3319 = vpack.c.bf16 %v3267, %v3263
        %v3320 = vpack.c.bf16 %v3268, %v3264
        %v3321 = vpack.c.bf16 %v3269, %v3265
        %v3322 = vpack.c.bf16 %v3274, %v3270
        %v3323 = vpack.c.bf16 %v3275, %v3271
        %v3324 = vpack.c.bf16 %v3276, %v3272
        %v3325 = vpack.c.bf16 %v3277, %v3273
        %v3326 = vpack.c.bf16 %v3282, %v3278
        %v3327 = vpack.c.bf16 %v3283, %v3279
        %v3328 = vpack.c.bf16 %v3284, %v3280
        %v3329 = vpack.c.bf16 %v3285, %v3281
        %v3330 = vpack.c.bf16 %v3290, %v3286
        %v3331 = vpack.c.bf16 %v3291, %v3287
        %v3332 = vpack.c.bf16 %v3292, %v3288
        %v3333 = vpack.c.bf16 %v3293, %v3289
        %v3334 = vpack.c.bf16 %v3298, %v3294
        %v3335 = vpack.c.bf16 %v3299, %v3295
        %v3336 = vpack.c.bf16 %v3300, %v3296
        %v3337 = vpack.c.bf16 %v3301, %v3297
        %v3338 = vpack.c.bf16 %v3306, %v3302
        %v3339 = vpack.c.bf16 %v3307, %v3303
        %v3340 = vpack.c.bf16 %v3308, %v3304
        %v3341 = vpack.c.bf16 %v3309, %v3305
        %v3342 = vld [vmem:[%s3] sm:$0xff]
        %v3343 = vld [vmem:[%s3 + $0x8] sm:$0xff]
        %v3344 = vld [vmem:[%s3 + $0x10] sm:$0xff]
        %v3345 = vld [vmem:[%s3 + $0x18] sm:$0xff]
        %v3346 = vld [vmem:[%s3 + $0x20] sm:$0xff]
        %v3347 = vld [vmem:[%s3 + $0x28] sm:$0xff]
        %v3348 = vld [vmem:[%s3 + $0x30] sm:$0xff]
        %v3349 = vld [vmem:[%s3 + $0x38] sm:$0xff]
        %v3350 = vld [vmem:[%s3 + $0x40] sm:$0xff]
        %v3351 = vld [vmem:[%s3 + $0x48] sm:$0xff]
        %v3352 = vld [vmem:[%s3 + $0x50] sm:$0xff]
        %v3353 = vld [vmem:[%s3 + $0x58] sm:$0xff]
        %v3354 = vld [vmem:[%s3 + $0x60] sm:$0xff]
        %v3355 = vld [vmem:[%s3 + $0x68] sm:$0xff]
        %v3356 = vld [vmem:[%s3 + $0x70] sm:$0xff]
        %v3357 = vld [vmem:[%s3 + $0x78] sm:$0xff]
        %v3358 = vld [vmem:[%s3 + $0x80] sm:$0xff]
        %v3359 = vld [vmem:[%s3 + $0x88] sm:$0xff]
        %v3360 = vld [vmem:[%s3 + $0x90] sm:$0xff]
        %v3361 = vld [vmem:[%s3 + $0x98] sm:$0xff]
        %v3362 = vld [vmem:[%s3 + $0xa0] sm:$0xff]
        %v3363 = vld [vmem:[%s3 + $0xa8] sm:$0xff]
        %v3364 = vld [vmem:[%s3 + $0xb0] sm:$0xff]
        %v3365 = vld [vmem:[%s3 + $0xb8] sm:$0xff]
        %v3366 = vld [vmem:[%s3 + $0xc0] sm:$0xff]
        %v3367 = vld [vmem:[%s3 + $0xc8] sm:$0xff]
        %v3368 = vld [vmem:[%s3 + $0xd0] sm:$0xff]
        %v3369 = vld [vmem:[%s3 + $0xd8] sm:$0xff]
        %v3370 = vld [vmem:[%s3 + $0xe0] sm:$0xff]
        %v3371 = vld [vmem:[%s3 + $0xe8] sm:$0xff]
        %v3372 = vld [vmem:[%s3 + $0xf0] sm:$0xff]
        %v3373 = vld [vmem:[%s3 + $0xf8] sm:$0xff]
        %v3374 = vld [vmem:[%s3 + $0x100] sm:$0xff]
        %v3375 = vld [vmem:[%s3 + $0x108] sm:$0xff]
        %v3376 = vld [vmem:[%s3 + $0x110] sm:$0xff]
        %v3377 = vld [vmem:[%s3 + $0x118] sm:$0xff]
        %v3378 = vld [vmem:[%s3 + $0x120] sm:$0xff]
        %v3379 = vld [vmem:[%s3 + $0x128] sm:$0xff]
        %v3380 = vld [vmem:[%s3 + $0x130] sm:$0xff]
        %v3381 = vld [vmem:[%s3 + $0x138] sm:$0xff]
        %v3382 = vld [vmem:[%s3 + $0x140] sm:$0xff]
        %v3383 = vld [vmem:[%s3 + $0x148] sm:$0xff]
        %v3384 = vld [vmem:[%s3 + $0x150] sm:$0xff]
        %v3385 = vld [vmem:[%s3 + $0x158] sm:$0xff]
        %v3386 = vld [vmem:[%s3 + $0x160] sm:$0xff]
        %v3387 = vld [vmem:[%s3 + $0x168] sm:$0xff]
        %v3388 = vld [vmem:[%s3 + $0x170] sm:$0xff]
        %v3389 = vld [vmem:[%s3 + $0x178] sm:$0xff]
        %v3390 = vld [vmem:[%s3 + $0x180] sm:$0xff]
        %v3391 = vld [vmem:[%s3 + $0x188] sm:$0xff]
        %v3392 = vld [vmem:[%s3 + $0x190] sm:$0xff]
        %v3393 = vld [vmem:[%s3 + $0x198] sm:$0xff]
        %v3394 = vld [vmem:[%s3 + $0x1a0] sm:$0xff]
        %v3395 = vld [vmem:[%s3 + $0x1a8] sm:$0xff]
        %v3396 = vld [vmem:[%s3 + $0x1b0] sm:$0xff]
        %v3397 = vld [vmem:[%s3 + $0x1b8] sm:$0xff]
        %v3398 = vld [vmem:[%s3 + $0x1c0] sm:$0xff]
        %v3399 = vld [vmem:[%s3 + $0x1c8] sm:$0xff]
        %v3400 = vld [vmem:[%s3 + $0x1d0] sm:$0xff]
        %v3401 = vld [vmem:[%s3 + $0x1d8] sm:$0xff]
        %v3402 = vld [vmem:[%s3 + $0x1e0] sm:$0xff]
        %v3403 = vld [vmem:[%s3 + $0x1e8] sm:$0xff]
        %v3404 = vld [vmem:[%s3 + $0x1f0] sm:$0xff]
        %v3405 = vld [vmem:[%s3 + $0x1f8] sm:$0xff]
        %v3406 = vld [vmem:[%s3 + $0x200] sm:$0xff]
        %v3407 = vld [vmem:[%s3 + $0x208] sm:$0xff]
        %v3408 = vld [vmem:[%s3 + $0x210] sm:$0xff]
        %v3409 = vld [vmem:[%s3 + $0x218] sm:$0xff]
        %v3410 = vld [vmem:[%s3 + $0x220] sm:$0xff]
        %v3411 = vld [vmem:[%s3 + $0x228] sm:$0xff]
        %v3412 = vld [vmem:[%s3 + $0x230] sm:$0xff]
        %v3413 = vld [vmem:[%s3 + $0x238] sm:$0xff]
        %v3414 = vld [vmem:[%s3 + $0x240] sm:$0xff]
        %v3415 = vld [vmem:[%s3 + $0x248] sm:$0xff]
        %v3416 = vld [vmem:[%s3 + $0x250] sm:$0xff]
        %v3417 = vld [vmem:[%s3 + $0x258] sm:$0xff]
        %v3418 = vld [vmem:[%s3 + $0x260] sm:$0xff]
        %v3419 = vld [vmem:[%s3 + $0x268] sm:$0xff]
        %v3420 = vld [vmem:[%s3 + $0x270] sm:$0xff]
        %v3421 = vld [vmem:[%s3 + $0x278] sm:$0xff]
        %v3422 = vld [vmem:[%s3 + $0x280] sm:$0xff]
        %v3423 = vld [vmem:[%s3 + $0x288] sm:$0xff]
        %v3424 = vld [vmem:[%s3 + $0x290] sm:$0xff]
        %v3425 = vld [vmem:[%s3 + $0x298] sm:$0xff]
        %v3426 = vld [vmem:[%s3 + $0x2a0] sm:$0xff]
        %v3427 = vld [vmem:[%s3 + $0x2a8] sm:$0xff]
        %v3428 = vld [vmem:[%s3 + $0x2b0] sm:$0xff]
        %v3429 = vld [vmem:[%s3 + $0x2b8] sm:$0xff]
        %v3430 = vld [vmem:[%s3 + $0x2c0] sm:$0xff]
        %v3431 = vld [vmem:[%s3 + $0x2c8] sm:$0xff]
        %v3432 = vld [vmem:[%s3 + $0x2d0] sm:$0xff]
        %v3433 = vld [vmem:[%s3 + $0x2d8] sm:$0xff]
        %v3434 = vld [vmem:[%s3 + $0x2e0] sm:$0xff]
        %v3435 = vld [vmem:[%s3 + $0x2e8] sm:$0xff]
        %v3436 = vld [vmem:[%s3 + $0x2f0] sm:$0xff]
        %v3437 = vld [vmem:[%s3 + $0x2f8] sm:$0xff]
        %v3438 = vld [vmem:[%s3 + $0x300] sm:$0xff]
        %v3439 = vld [vmem:[%s3 + $0x308] sm:$0xff]
        %v3440 = vld [vmem:[%s3 + $0x310] sm:$0xff]
        %v3441 = vld [vmem:[%s3 + $0x318] sm:$0xff]
        %v3442 = vld [vmem:[%s3 + $0x320] sm:$0xff]
        %v3443 = vld [vmem:[%s3 + $0x328] sm:$0xff]
        %v3444 = vld [vmem:[%s3 + $0x330] sm:$0xff]
        %v3445 = vld [vmem:[%s3 + $0x338] sm:$0xff]
        %v3446 = vld [vmem:[%s3 + $0x340] sm:$0xff]
        %v3447 = vld [vmem:[%s3 + $0x348] sm:$0xff]
        %v3448 = vld [vmem:[%s3 + $0x350] sm:$0xff]
        %v3449 = vld [vmem:[%s3 + $0x358] sm:$0xff]
        %v3450 = vld [vmem:[%s3 + $0x360] sm:$0xff]
        %v3451 = vld [vmem:[%s3 + $0x368] sm:$0xff]
        %v3452 = vld [vmem:[%s3 + $0x370] sm:$0xff]
        %v3453 = vld [vmem:[%s3 + $0x378] sm:$0xff]
        %v3454 = vld [vmem:[%s3 + $0x380] sm:$0xff]
        %v3455 = vld [vmem:[%s3 + $0x388] sm:$0xff]
        %v3456 = vld [vmem:[%s3 + $0x390] sm:$0xff]
        %v3457 = vld [vmem:[%s3 + $0x398] sm:$0xff]
        %v3458 = vld [vmem:[%s3 + $0x3a0] sm:$0xff]
        %v3459 = vld [vmem:[%s3 + $0x3a8] sm:$0xff]
        %v3460 = vld [vmem:[%s3 + $0x3b0] sm:$0xff]
        %v3461 = vld [vmem:[%s3 + $0x3b8] sm:$0xff]
        %v3462 = vld [vmem:[%s3 + $0x3c0] sm:$0xff]
        %v3463 = vld [vmem:[%s3 + $0x3c8] sm:$0xff]
        %v3464 = vld [vmem:[%s3 + $0x3d0] sm:$0xff]
        %v3465 = vld [vmem:[%s3 + $0x3d8] sm:$0xff]
        %v3466 = vld [vmem:[%s3 + $0x3e0] sm:$0xff]
        %v3467 = vld [vmem:[%s3 + $0x3e8] sm:$0xff]
        %v3468 = vld [vmem:[%s3 + $0x3f0] sm:$0xff]
        %v3469 = vld [vmem:[%s3 + $0x3f8] sm:$0xff]
        %v3470 = vld [vmem:[%s4] sm:$0xf]
        %v3472 = vlaneseq
        %v3473 = vshrl.u32 %v3472, 7
        %v3474 = vsub.s32 0, %v3473
        %v3475 = vrot.slane %v3470, %v3474
        %v3476 = vlaneseq
        %v3477 = vshrl.u32 %v3476, 7
        %v3478 = vsub.s32 1, %v3477
        %v3479 = vrot.slane %v3470, %v3478
        %v3480 = vlaneseq
        %v3481 = vshrl.u32 %v3480, 7
        %v3482 = vsub.s32 2, %v3481
        %v3483 = vrot.slane %v3470, %v3482
        %v3484 = vlaneseq
        %v3485 = vshrl.u32 %v3484, 7
        %v3486 = vsub.s32 3, %v3485
        %v3487 = vrot.slane %v3470, %v3486
        %v3620 = vunpack.c.l.b16 %v3342
        %v3621 = vunpack.c.h.b16 %v3342
        %v3622 = vunpack.c.l.b16 %v3343
        %v3623 = vunpack.c.h.b16 %v3343
        %v3624 = vunpack.c.l.b16 %v3344
        %v3625 = vunpack.c.h.b16 %v3344
        %v3626 = vunpack.c.l.b16 %v3345
        %v3627 = vunpack.c.h.b16 %v3345
        %v3628 = vunpack.c.l.b16 %v3346
        %v3629 = vunpack.c.h.b16 %v3346
        %v3630 = vunpack.c.l.b16 %v3347
        %v3631 = vunpack.c.h.b16 %v3347
        %v3632 = vunpack.c.l.b16 %v3348
        %v3633 = vunpack.c.h.b16 %v3348
        %v3634 = vunpack.c.l.b16 %v3349
        %v3635 = vunpack.c.h.b16 %v3349
        %v3636 = vunpack.c.l.b16 %v3350
        %v3637 = vunpack.c.h.b16 %v3350
        %v3638 = vunpack.c.l.b16 %v3351
        %v3639 = vunpack.c.h.b16 %v3351
        %v3640 = vunpack.c.l.b16 %v3352
        %v3641 = vunpack.c.h.b16 %v3352
        %v3642 = vunpack.c.l.b16 %v3353
        %v3643 = vunpack.c.h.b16 %v3353
        %v3644 = vunpack.c.l.b16 %v3354
        %v3645 = vunpack.c.h.b16 %v3354
        %v3646 = vunpack.c.l.b16 %v3355
        %v3647 = vunpack.c.h.b16 %v3355
        %v3648 = vunpack.c.l.b16 %v3356
        %v3649 = vunpack.c.h.b16 %v3356
        %v3650 = vunpack.c.l.b16 %v3357
        %v3651 = vunpack.c.h.b16 %v3357
        %v3652 = vunpack.c.l.b16 %v3358
        %v3653 = vunpack.c.h.b16 %v3358
        %v3654 = vunpack.c.l.b16 %v3359
        %v3655 = vunpack.c.h.b16 %v3359
        %v3656 = vunpack.c.l.b16 %v3360
        %v3657 = vunpack.c.h.b16 %v3360
        %v3658 = vunpack.c.l.b16 %v3361
        %v3659 = vunpack.c.h.b16 %v3361
        %v3660 = vunpack.c.l.b16 %v3362
        %v3661 = vunpack.c.h.b16 %v3362
        %v3662 = vunpack.c.l.b16 %v3363
        %v3663 = vunpack.c.h.b16 %v3363
        %v3664 = vunpack.c.l.b16 %v3364
        %v3665 = vunpack.c.h.b16 %v3364
        %v3666 = vunpack.c.l.b16 %v3365
        %v3667 = vunpack.c.h.b16 %v3365
        %v3668 = vunpack.c.l.b16 %v3366
        %v3669 = vunpack.c.h.b16 %v3366
        %v3670 = vunpack.c.l.b16 %v3367
        %v3671 = vunpack.c.h.b16 %v3367
        %v3672 = vunpack.c.l.b16 %v3368
        %v3673 = vunpack.c.h.b16 %v3368
        %v3674 = vunpack.c.l.b16 %v3369
        %v3675 = vunpack.c.h.b16 %v3369
        %v3676 = vunpack.c.l.b16 %v3370
        %v3677 = vunpack.c.h.b16 %v3370
        %v3678 = vunpack.c.l.b16 %v3371
        %v3679 = vunpack.c.h.b16 %v3371
        %v3680 = vunpack.c.l.b16 %v3372
        %v3681 = vunpack.c.h.b16 %v3372
        %v3682 = vunpack.c.l.b16 %v3373
        %v3683 = vunpack.c.h.b16 %v3373
        %v3684 = vunpack.c.l.b16 %v3374
        %v3685 = vunpack.c.h.b16 %v3374
        %v3686 = vunpack.c.l.b16 %v3375
        %v3687 = vunpack.c.h.b16 %v3375
        %v3688 = vunpack.c.l.b16 %v3376
        %v3689 = vunpack.c.h.b16 %v3376
        %v3690 = vunpack.c.l.b16 %v3377
        %v3691 = vunpack.c.h.b16 %v3377
        %v3692 = vunpack.c.l.b16 %v3378
        %v3693 = vunpack.c.h.b16 %v3378
        %v3694 = vunpack.c.l.b16 %v3379
        %v3695 = vunpack.c.h.b16 %v3379
        %v3696 = vunpack.c.l.b16 %v3380
        %v3697 = vunpack.c.h.b16 %v3380
        %v3698 = vunpack.c.l.b16 %v3381
        %v3699 = vunpack.c.h.b16 %v3381
        %v3700 = vunpack.c.l.b16 %v3382
        %v3701 = vunpack.c.h.b16 %v3382
        %v3702 = vunpack.c.l.b16 %v3383
        %v3703 = vunpack.c.h.b16 %v3383
        %v3704 = vunpack.c.l.b16 %v3384
        %v3705 = vunpack.c.h.b16 %v3384
        %v3706 = vunpack.c.l.b16 %v3385
        %v3707 = vunpack.c.h.b16 %v3385
        %v3708 = vunpack.c.l.b16 %v3386
        %v3709 = vunpack.c.h.b16 %v3386
        %v3710 = vunpack.c.l.b16 %v3387
        %v3711 = vunpack.c.h.b16 %v3387
        %v3712 = vunpack.c.l.b16 %v3388
        %v3713 = vunpack.c.h.b16 %v3388
        %v3714 = vunpack.c.l.b16 %v3389
        %v3715 = vunpack.c.h.b16 %v3389
        %v3716 = vunpack.c.l.b16 %v3390
        %v3717 = vunpack.c.h.b16 %v3390
        %v3718 = vunpack.c.l.b16 %v3391
        %v3719 = vunpack.c.h.b16 %v3391
        %v3720 = vunpack.c.l.b16 %v3392
        %v3721 = vunpack.c.h.b16 %v3392
        %v3722 = vunpack.c.l.b16 %v3393
        %v3723 = vunpack.c.h.b16 %v3393
        %v3724 = vunpack.c.l.b16 %v3394
        %v3725 = vunpack.c.h.b16 %v3394
        %v3726 = vunpack.c.l.b16 %v3395
        %v3727 = vunpack.c.h.b16 %v3395
        %v3728 = vunpack.c.l.b16 %v3396
        %v3729 = vunpack.c.h.b16 %v3396
        %v3730 = vunpack.c.l.b16 %v3397
        %v3731 = vunpack.c.h.b16 %v3397
        %v3732 = vunpack.c.l.b16 %v3398
        %v3733 = vunpack.c.h.b16 %v3398
        %v3734 = vunpack.c.l.b16 %v3399
        %v3735 = vunpack.c.h.b16 %v3399
        %v3736 = vunpack.c.l.b16 %v3400
        %v3737 = vunpack.c.h.b16 %v3400
        %v3738 = vunpack.c.l.b16 %v3401
        %v3739 = vunpack.c.h.b16 %v3401
        %v3740 = vunpack.c.l.b16 %v3402
        %v3741 = vunpack.c.h.b16 %v3402
        %v3742 = vunpack.c.l.b16 %v3403
        %v3743 = vunpack.c.h.b16 %v3403
        %v3744 = vunpack.c.l.b16 %v3404
        %v3745 = vunpack.c.h.b16 %v3404
        %v3746 = vunpack.c.l.b16 %v3405
        %v3747 = vunpack.c.h.b16 %v3405
        %v3748 = vunpack.c.l.b16 %v3406
        %v3749 = vunpack.c.h.b16 %v3406
        %v3750 = vunpack.c.l.b16 %v3407
        %v3751 = vunpack.c.h.b16 %v3407
        %v3752 = vunpack.c.l.b16 %v3408
        %v3753 = vunpack.c.h.b16 %v3408
        %v3754 = vunpack.c.l.b16 %v3409
        %v3755 = vunpack.c.h.b16 %v3409
        %v3756 = vunpack.c.l.b16 %v3410
        %v3757 = vunpack.c.h.b16 %v3410
        %v3758 = vunpack.c.l.b16 %v3411
        %v3759 = vunpack.c.h.b16 %v3411
        %v3760 = vunpack.c.l.b16 %v3412
        %v3761 = vunpack.c.h.b16 %v3412
        %v3762 = vunpack.c.l.b16 %v3413
        %v3763 = vunpack.c.h.b16 %v3413
        %v3764 = vunpack.c.l.b16 %v3414
        %v3765 = vunpack.c.h.b16 %v3414
        %v3766 = vunpack.c.l.b16 %v3415
        %v3767 = vunpack.c.h.b16 %v3415
        %v3768 = vunpack.c.l.b16 %v3416
        %v3769 = vunpack.c.h.b16 %v3416
        %v3770 = vunpack.c.l.b16 %v3417
        %v3771 = vunpack.c.h.b16 %v3417
        %v3772 = vunpack.c.l.b16 %v3418
        %v3773 = vunpack.c.h.b16 %v3418
        %v3774 = vunpack.c.l.b16 %v3419
        %v3775 = vunpack.c.h.b16 %v3419
        %v3776 = vunpack.c.l.b16 %v3420
        %v3777 = vunpack.c.h.b16 %v3420
        %v3778 = vunpack.c.l.b16 %v3421
        %v3779 = vunpack.c.h.b16 %v3421
        %v3780 = vunpack.c.l.b16 %v3422
        %v3781 = vunpack.c.h.b16 %v3422
        %v3782 = vunpack.c.l.b16 %v3423
        %v3783 = vunpack.c.h.b16 %v3423
        %v3784 = vunpack.c.l.b16 %v3424
        %v3785 = vunpack.c.h.b16 %v3424
        %v3786 = vunpack.c.l.b16 %v3425
        %v3787 = vunpack.c.h.b16 %v3425
        %v3788 = vunpack.c.l.b16 %v3426
        %v3789 = vunpack.c.h.b16 %v3426
        %v3790 = vunpack.c.l.b16 %v3427
        %v3791 = vunpack.c.h.b16 %v3427
        %v3792 = vunpack.c.l.b16 %v3428
        %v3793 = vunpack.c.h.b16 %v3428
        %v3794 = vunpack.c.l.b16 %v3429
        %v3795 = vunpack.c.h.b16 %v3429
        %v3796 = vunpack.c.l.b16 %v3430
        %v3797 = vunpack.c.h.b16 %v3430
        %v3798 = vunpack.c.l.b16 %v3431
        %v3799 = vunpack.c.h.b16 %v3431
        %v3800 = vunpack.c.l.b16 %v3432
        %v3801 = vunpack.c.h.b16 %v3432
        %v3802 = vunpack.c.l.b16 %v3433
        %v3803 = vunpack.c.h.b16 %v3433
        %v3804 = vunpack.c.l.b16 %v3434
        %v3805 = vunpack.c.h.b16 %v3434
        %v3806 = vunpack.c.l.b16 %v3435
        %v3807 = vunpack.c.h.b16 %v3435
        %v3808 = vunpack.c.l.b16 %v3436
        %v3809 = vunpack.c.h.b16 %v3436
        %v3810 = vunpack.c.l.b16 %v3437
        %v3811 = vunpack.c.h.b16 %v3437
        %v3812 = vunpack.c.l.b16 %v3438
        %v3813 = vunpack.c.h.b16 %v3438
        %v3814 = vunpack.c.l.b16 %v3439
        %v3815 = vunpack.c.h.b16 %v3439
        %v3816 = vunpack.c.l.b16 %v3440
        %v3817 = vunpack.c.h.b16 %v3440
        %v3818 = vunpack.c.l.b16 %v3441
        %v3819 = vunpack.c.h.b16 %v3441
        %v3820 = vunpack.c.l.b16 %v3442
        %v3821 = vunpack.c.h.b16 %v3442
        %v3822 = vunpack.c.l.b16 %v3443
        %v3823 = vunpack.c.h.b16 %v3443
        %v3824 = vunpack.c.l.b16 %v3444
        %v3825 = vunpack.c.h.b16 %v3444
        %v3826 = vunpack.c.l.b16 %v3445
        %v3827 = vunpack.c.h.b16 %v3445
        %v3828 = vunpack.c.l.b16 %v3446
        %v3829 = vunpack.c.h.b16 %v3446
        %v3830 = vunpack.c.l.b16 %v3447
        %v3831 = vunpack.c.h.b16 %v3447
        %v3832 = vunpack.c.l.b16 %v3448
        %v3833 = vunpack.c.h.b16 %v3448
        %v3834 = vunpack.c.l.b16 %v3449
        %v3835 = vunpack.c.h.b16 %v3449
        %v3836 = vunpack.c.l.b16 %v3450
        %v3837 = vunpack.c.h.b16 %v3450
        %v3838 = vunpack.c.l.b16 %v3451
        %v3839 = vunpack.c.h.b16 %v3451
        %v3840 = vunpack.c.l.b16 %v3452
        %v3841 = vunpack.c.h.b16 %v3452
        %v3842 = vunpack.c.l.b16 %v3453
        %v3843 = vunpack.c.h.b16 %v3453
        %v3844 = vunpack.c.l.b16 %v3454
        %v3845 = vunpack.c.h.b16 %v3454
        %v3846 = vunpack.c.l.b16 %v3455
        %v3847 = vunpack.c.h.b16 %v3455
        %v3848 = vunpack.c.l.b16 %v3456
        %v3849 = vunpack.c.h.b16 %v3456
        %v3850 = vunpack.c.l.b16 %v3457
        %v3851 = vunpack.c.h.b16 %v3457
        %v3852 = vunpack.c.l.b16 %v3458
        %v3853 = vunpack.c.h.b16 %v3458
        %v3854 = vunpack.c.l.b16 %v3459
        %v3855 = vunpack.c.h.b16 %v3459
        %v3856 = vunpack.c.l.b16 %v3460
        %v3857 = vunpack.c.h.b16 %v3460
        %v3858 = vunpack.c.l.b16 %v3461
        %v3859 = vunpack.c.h.b16 %v3461
        %v3860 = vunpack.c.l.b16 %v3462
        %v3861 = vunpack.c.h.b16 %v3462
        %v3862 = vunpack.c.l.b16 %v3463
        %v3863 = vunpack.c.h.b16 %v3463
        %v3864 = vunpack.c.l.b16 %v3464
        %v3865 = vunpack.c.h.b16 %v3464
        %v3866 = vunpack.c.l.b16 %v3465
        %v3867 = vunpack.c.h.b16 %v3465
        %v3868 = vunpack.c.l.b16 %v3466
        %v3869 = vunpack.c.h.b16 %v3466
        %v3870 = vunpack.c.l.b16 %v3467
        %v3871 = vunpack.c.h.b16 %v3467
        %v3872 = vunpack.c.l.b16 %v3468
        %v3873 = vunpack.c.h.b16 %v3468
        %v3874 = vunpack.c.l.b16 %v3469
        %v3875 = vunpack.c.h.b16 %v3469
        %v3876 = vpack.c.b16 %v3624, %v3620
        %v3877 = vpack.c.b16 %v3625, %v3621
        %v3878 = vpack.c.b16 %v3626, %v3622
        %v3879 = vpack.c.b16 %v3627, %v3623
        %v3880 = vpack.c.b16 %v3632, %v3628
        %v3881 = vpack.c.b16 %v3633, %v3629
        %v3882 = vpack.c.b16 %v3634, %v3630
        %v3883 = vpack.c.b16 %v3635, %v3631
        %v3884 = vpack.c.b16 %v3640, %v3636
        %v3885 = vpack.c.b16 %v3641, %v3637
        %v3886 = vpack.c.b16 %v3642, %v3638
        %v3887 = vpack.c.b16 %v3643, %v3639
        %v3888 = vpack.c.b16 %v3648, %v3644
        %v3889 = vpack.c.b16 %v3649, %v3645
        %v3890 = vpack.c.b16 %v3650, %v3646
        %v3891 = vpack.c.b16 %v3651, %v3647
        %v3892 = vpack.c.b16 %v3656, %v3652
        %v3893 = vpack.c.b16 %v3657, %v3653
        %v3894 = vpack.c.b16 %v3658, %v3654
        %v3895 = vpack.c.b16 %v3659, %v3655
        %v3896 = vpack.c.b16 %v3664, %v3660
        %v3897 = vpack.c.b16 %v3665, %v3661
        %v3898 = vpack.c.b16 %v3666, %v3662
        %v3899 = vpack.c.b16 %v3667, %v3663
        %v3900 = vpack.c.b16 %v3672, %v3668
        %v3901 = vpack.c.b16 %v3673, %v3669
        %v3902 = vpack.c.b16 %v3674, %v3670
        %v3903 = vpack.c.b16 %v3675, %v3671
        %v3904 = vpack.c.b16 %v3680, %v3676
        %v3905 = vpack.c.b16 %v3681, %v3677
        %v3906 = vpack.c.b16 %v3682, %v3678
        %v3907 = vpack.c.b16 %v3683, %v3679
        %v3908 = vpack.c.b16 %v3688, %v3684
        %v3909 = vpack.c.b16 %v3689, %v3685
        %v3910 = vpack.c.b16 %v3690, %v3686
        %v3911 = vpack.c.b16 %v3691, %v3687
        %v3912 = vpack.c.b16 %v3696, %v3692
        %v3913 = vpack.c.b16 %v3697, %v3693
        %v3914 = vpack.c.b16 %v3698, %v3694
        %v3915 = vpack.c.b16 %v3699, %v3695
        %v3916 = vpack.c.b16 %v3704, %v3700
        %v3917 = vpack.c.b16 %v3705, %v3701
        %v3918 = vpack.c.b16 %v3706, %v3702
        %v3919 = vpack.c.b16 %v3707, %v3703
        %v3920 = vpack.c.b16 %v3712, %v3708
        %v3921 = vpack.c.b16 %v3713, %v3709
        %v3922 = vpack.c.b16 %v3714, %v3710
        %v3923 = vpack.c.b16 %v3715, %v3711
        %v3924 = vpack.c.b16 %v3720, %v3716
        %v3925 = vpack.c.b16 %v3721, %v3717
        %v3926 = vpack.c.b16 %v3722, %v3718
        %v3927 = vpack.c.b16 %v3723, %v3719
        %v3928 = vpack.c.b16 %v3728, %v3724
        %v3929 = vpack.c.b16 %v3729, %v3725
        %v3930 = vpack.c.b16 %v3730, %v3726
        %v3931 = vpack.c.b16 %v3731, %v3727
        %v3932 = vpack.c.b16 %v3736, %v3732
        %v3933 = vpack.c.b16 %v3737, %v3733
        %v3934 = vpack.c.b16 %v3738, %v3734
        %v3935 = vpack.c.b16 %v3739, %v3735
        %v3936 = vpack.c.b16 %v3744, %v3740
        %v3937 = vpack.c.b16 %v3745, %v3741
        %v3938 = vpack.c.b16 %v3746, %v3742
        %v3939 = vpack.c.b16 %v3747, %v3743
        %v3940 = vpack.c.b16 %v3752, %v3748
        %v3941 = vpack.c.b16 %v3753, %v3749
        %v3942 = vpack.c.b16 %v3754, %v3750
        %v3943 = vpack.c.b16 %v3755, %v3751
        %v3944 = vpack.c.b16 %v3760, %v3756
        %v3945 = vpack.c.b16 %v3761, %v3757
        %v3946 = vpack.c.b16 %v3762, %v3758
        %v3947 = vpack.c.b16 %v3763, %v3759
        %v3948 = vpack.c.b16 %v3768, %v3764
        %v3949 = vpack.c.b16 %v3769, %v3765
        %v3950 = vpack.c.b16 %v3770, %v3766
        %v3951 = vpack.c.b16 %v3771, %v3767
        %v3952 = vpack.c.b16 %v3776, %v3772
        %v3953 = vpack.c.b16 %v3777, %v3773
        %v3954 = vpack.c.b16 %v3778, %v3774
        %v3955 = vpack.c.b16 %v3779, %v3775
        %v3956 = vpack.c.b16 %v3784, %v3780
        %v3957 = vpack.c.b16 %v3785, %v3781
        %v3958 = vpack.c.b16 %v3786, %v3782
        %v3959 = vpack.c.b16 %v3787, %v3783
        %v3960 = vpack.c.b16 %v3792, %v3788
        %v3961 = vpack.c.b16 %v3793, %v3789
        %v3962 = vpack.c.b16 %v3794, %v3790
        %v3963 = vpack.c.b16 %v3795, %v3791
        %v3964 = vpack.c.b16 %v3800, %v3796
        %v3965 = vpack.c.b16 %v3801, %v3797
        %v3966 = vpack.c.b16 %v3802, %v3798
        %v3967 = vpack.c.b16 %v3803, %v3799
        %v3968 = vpack.c.b16 %v3808, %v3804
        %v3969 = vpack.c.b16 %v3809, %v3805
        %v3970 = vpack.c.b16 %v3810, %v3806
        %v3971 = vpack.c.b16 %v3811, %v3807
        %v3972 = vpack.c.b16 %v3816, %v3812
        %v3973 = vpack.c.b16 %v3817, %v3813
        %v3974 = vpack.c.b16 %v3818, %v3814
        %v3975 = vpack.c.b16 %v3819, %v3815
        %v3976 = vpack.c.b16 %v3824, %v3820
        %v3977 = vpack.c.b16 %v3825, %v3821
        %v3978 = vpack.c.b16 %v3826, %v3822
        %v3979 = vpack.c.b16 %v3827, %v3823
        %v3980 = vpack.c.b16 %v3832, %v3828
        %v3981 = vpack.c.b16 %v3833, %v3829
        %v3982 = vpack.c.b16 %v3834, %v3830
        %v3983 = vpack.c.b16 %v3835, %v3831
        %v3984 = vpack.c.b16 %v3840, %v3836
        %v3985 = vpack.c.b16 %v3841, %v3837
        %v3986 = vpack.c.b16 %v3842, %v3838
        %v3987 = vpack.c.b16 %v3843, %v3839
        %v3988 = vpack.c.b16 %v3848, %v3844
        %v3989 = vpack.c.b16 %v3849, %v3845
        %v3990 = vpack.c.b16 %v3850, %v3846
        %v3991 = vpack.c.b16 %v3851, %v3847
        %v3992 = vpack.c.b16 %v3856, %v3852
        %v3993 = vpack.c.b16 %v3857, %v3853
        %v3994 = vpack.c.b16 %v3858, %v3854
        %v3995 = vpack.c.b16 %v3859, %v3855
        %v3996 = vpack.c.b16 %v3864, %v3860
        %v3997 = vpack.c.b16 %v3865, %v3861
        %v3998 = vpack.c.b16 %v3866, %v3862
        %v3999 = vpack.c.b16 %v3867, %v3863
        %v4000 = vpack.c.b16 %v3872, %v3868
        %v4001 = vpack.c.b16 %v3873, %v3869
        %v4002 = vpack.c.b16 %v3874, %v3870
        %v4003 = vpack.c.b16 %v3875, %v3871
        %4132 = vmatprep.subr.bf16.mxu0 %v3877
        %4133 = vmatpush1.bf16.msra.mxu0 %v3876
        %4134 = vmatprep.subr.bf16.mxu0 %v3881
        %4135 = vmatpush1.bf16.msra.mxu0 %v3880
        %4136 = vmatprep.subr.bf16.mxu0 %v3885
        %4137 = vmatpush1.bf16.msra.mxu0 %v3884
        %4138 = vmatprep.subr.bf16.mxu0 %v3889
        %4139 = vmatpush1.bf16.msra.mxu0 %v3888
        %4140 = vmatprep.subr.bf16.mxu0 %v3893
        %4141 = vmatpush1.bf16.msra.mxu0 %v3892
        %4142 = vmatprep.subr.bf16.mxu0 %v3897
        %4143 = vmatpush1.bf16.msra.mxu0 %v3896
        %4144 = vmatprep.subr.bf16.mxu0 %v3901
        %4145 = vmatpush1.bf16.msra.mxu0 %v3900
        %4146 = vmatprep.subr.bf16.mxu0 %v3905
        %4147 = vmatpush1.bf16.msra.mxu0 %v3904
        %4148 = vmatprep.subr.bf16.mxu0 %v3909
        %4149 = vmatpush1.bf16.msra.mxu0 %v3908
        %4150 = vmatprep.subr.bf16.mxu0 %v3913
        %4151 = vmatpush1.bf16.msra.mxu0 %v3912
        %4152 = vmatprep.subr.bf16.mxu0 %v3917
        %4153 = vmatpush1.bf16.msra.mxu0 %v3916
        %4154 = vmatprep.subr.bf16.mxu0 %v3921
        %4155 = vmatpush1.bf16.msra.mxu0 %v3920
        %4156 = vmatprep.subr.bf16.mxu0 %v3925
        %4157 = vmatpush1.bf16.msra.mxu0 %v3924
        %4158 = vmatprep.subr.bf16.mxu0 %v3929
        %4159 = vmatpush1.bf16.msra.mxu0 %v3928
        %4160 = vmatprep.subr.bf16.mxu0 %v3933
        %4161 = vmatpush1.bf16.msra.mxu0 %v3932
        %4162 = vmatprep.subr.bf16.mxu0 %v3937
        %4163 = vmatpush1.bf16.msra.mxu0 %v3936
        %4164 = vmatprep.mubr.bf16.mxu0 %v3311
        %4165 = vmatmul.mubr.bf16.gmra.mrb[0].mxu0 %v3310
        %v4166 = vpop.f32.mrb[0].mxu0
        %v4167 = vadd.f32 %v3475, %v4166
        %v4168 = vpop.f32.mrb[0].mxu0
        %v4169 = vadd.f32 %v3479, %v4168
        %v4170 = vpop.f32.mrb[0].mxu0
        %v4171 = vadd.f32 %v3475, %v4170
        %v4172 = vpop.f32.mrb[0].mxu0
        %v4173 = vadd.f32 %v3479, %v4172
        %4174 = vmatprep.mubr.bf16.mxu0 %v3315
        %4175 = vmatmul.mubr.bf16.gmra.mrb[0].mxu0 %v3314
        %v4176 = vpop.f32.mrb[0].mxu0
        %v4177 = vadd.f32 %v3475, %v4176
        %v4178 = vpop.f32.mrb[0].mxu0
        %v4179 = vadd.f32 %v3479, %v4178
        %v4180 = vpop.f32.mrb[0].mxu0
        %v4181 = vadd.f32 %v3475, %v4180
        %v4182 = vpop.f32.mrb[0].mxu0
        %v4183 = vadd.f32 %v3479, %v4182
        %4184 = vmatprep.mubr.bf16.mxu0 %v3319
        %4185 = vmatmul.mubr.bf16.gmra.mrb[0].mxu0 %v3318
        %v4186 = vpop.f32.mrb[0].mxu0
        %v4187 = vadd.f32 %v3475, %v4186
        %v4188 = vpop.f32.mrb[0].mxu0
        %v4189 = vadd.f32 %v3479, %v4188
        %v4190 = vpop.f32.mrb[0].mxu0
        %v4191 = vadd.f32 %v3475, %v4190
        %v4192 = vpop.f32.mrb[0].mxu0
        %v4193 = vadd.f32 %v3479, %v4192
        %4194 = vmatprep.mubr.bf16.mxu0 %v3323
        %4195 = vmatmul.mubr.bf16.gmra.mrb[0].mxu0 %v3322
        %v4196 = vpop.f32.mrb[0].mxu0
        %v4197 = vadd.f32 %v3475, %v4196
        %v4198 = vpop.f32.mrb[0].mxu0
        %v4199 = vadd.f32 %v3479, %v4198
        %v4200 = vpop.f32.mrb[0].mxu0
        %v4201 = vadd.f32 %v3475, %v4200
        %v4202 = vpop.f32.mrb[0].mxu0
        %v4203 = vadd.f32 %v3479, %v4202
        %4204 = vmatprep.mubr.bf16.mxu0 %v3327
        %4205 = vmatmul.mubr.bf16.gmra.mrb[0].mxu0 %v3326
        %v4206 = vpop.f32.mrb[0].mxu0
        %v4207 = vadd.f32 %v3475, %v4206
        %v4208 = vpop.f32.mrb[0].mxu0
        %v4209 = vadd.f32 %v3479, %v4208
        %v4210 = vpop.f32.mrb[0].mxu0
        %v4211 = vadd.f32 %v3475, %v4210
        %v4212 = vpop.f32.mrb[0].mxu0
        %v4213 = vadd.f32 %v3479, %v4212
        %4214 = vmatprep.mubr.bf16.mxu0 %v3331
        %4215 = vmatmul.mubr.bf16.gmra.mrb[0].mxu0 %v3330
        %v4216 = vpop.f32.mrb[0].mxu0
        %v4217 = vadd.f32 %v3475, %v4216
        %v4218 = vpop.f32.mrb[0].mxu0
        %v4219 = vadd.f32 %v3479, %v4218
        %v4220 = vpop.f32.mrb[0].mxu0
        %v4221 = vadd.f32 %v3475, %v4220
        %v4222 = vpop.f32.mrb[0].mxu0
        %v4223 = vadd.f32 %v3479, %v4222
        %4224 = vmatprep.mubr.bf16.mxu0 %v3335
        %4225 = vmatmul.mubr.bf16.gmra.mrb[0].mxu0 %v3334
        %v4226 = vpop.f32.mrb[0].mxu0
        %v4227 = vadd.f32 %v3475, %v4226
        %v4228 = vpop.f32.mrb[0].mxu0
        %v4229 = vadd.f32 %v3479, %v4228
        %v4230 = vpop.f32.mrb[0].mxu0
        %v4231 = vadd.f32 %v3475, %v4230
        %v4232 = vpop.f32.mrb[0].mxu0
        %v4233 = vadd.f32 %v3479, %v4232
        %4234 = vmatprep.mubr.bf16.mxu0 %v3339
        %4235 = vmatmul.mubr.bf16.gmra.mrb[0].mxu0 %v3338
        %v4236 = vpop.f32.mrb[0].mxu0
        %v4237 = vadd.f32 %v3475, %v4236
        %v4238 = vpop.f32.mrb[0].mxu0
        %v4239 = vadd.f32 %v3479, %v4238
        %v4240 = vpop.f32.mrb[0].mxu0
        %v4241 = vadd.f32 %v3475, %v4240
        %v4242 = vpop.f32.mrb[0].mxu0
        %v4243 = vadd.f32 %v3479, %v4242
        %4244 = vdwg.mxu0
        %4245 = vmatprep.subr.bf16.mxu0 %v3941
        %4246 = vmatpush1.bf16.msra.mxu0 %v3940
        %4247 = vmatprep.subr.bf16.mxu0 %v3945
        %4248 = vmatpush1.bf16.msra.mxu0 %v3944
        %4249 = vmatprep.subr.bf16.mxu0 %v3949
        %4250 = vmatpush1.bf16.msra.mxu0 %v3948
        %4251 = vmatprep.subr.bf16.mxu0 %v3953
        %4252 = vmatpush1.bf16.msra.mxu0 %v3952
        %4253 = vmatprep.subr.bf16.mxu0 %v3957
        %4254 = vmatpush1.bf16.msra.mxu0 %v3956
        %4255 = vmatprep.subr.bf16.mxu0 %v3961
        %4256 = vmatpush1.bf16.msra.mxu0 %v3960
        %4257 = vmatprep.subr.bf16.mxu0 %v3965
        %4258 = vmatpush1.bf16.msra.mxu0 %v3964
        %4259 = vmatprep.subr.bf16.mxu0 %v3969
        %4260 = vmatpush1.bf16.msra.mxu0 %v3968
        %4261 = vmatprep.subr.bf16.mxu0 %v3973
        %4262 = vmatpush1.bf16.msra.mxu0 %v3972
        %4263 = vmatprep.subr.bf16.mxu0 %v3977
        %4264 = vmatpush1.bf16.msra.mxu0 %v3976
        %4265 = vmatprep.subr.bf16.mxu0 %v3981
        %4266 = vmatpush1.bf16.msra.mxu0 %v3980
        %4267 = vmatprep.subr.bf16.mxu0 %v3985
        %4268 = vmatpush1.bf16.msra.mxu0 %v3984
        %4269 = vmatprep.subr.bf16.mxu0 %v3989
        %4270 = vmatpush1.bf16.msra.mxu0 %v3988
        %4271 = vmatprep.subr.bf16.mxu0 %v3993
        %4272 = vmatpush1.bf16.msra.mxu0 %v3992
        %4273 = vmatprep.subr.bf16.mxu0 %v3997
        %4274 = vmatpush1.bf16.msra.mxu0 %v3996
        %4275 = vmatprep.subr.bf16.mxu0 %v4001
        %4276 = vmatpush1.bf16.msra.mxu0 %v4000
        %4277 = vmatprep.mubr.bf16.mxu0 %v3313
        %4278 = vmatmul.mubr.bf16.gmra.mrb[0].mxu0 %v3312
        %v4279 = vpop.f32.mrb[0].mxu0
        %v4280 = vadd.f32 %v4167, %v4279
        %v4281 = vpop.f32.mrb[0].mxu0
        %v4282 = vadd.f32 %v4169, %v4281
        %v4283 = vpop.f32.mrb[0].mxu0
        %v4284 = vadd.f32 %v4171, %v4283
        %v4285 = vpop.f32.mrb[0].mxu0
        %v4286 = vadd.f32 %v4173, %v4285
        %4287 = vmatprep.mubr.bf16.mxu0 %v3317
        %4288 = vmatmul.mubr.bf16.gmra.mrb[0].mxu0 %v3316
        %v4289 = vpop.f32.mrb[0].mxu0
        %v4290 = vadd.f32 %v4177, %v4289
        %v4291 = vpop.f32.mrb[0].mxu0
        %v4292 = vadd.f32 %v4179, %v4291
        %v4293 = vpop.f32.mrb[0].mxu0
        %v4294 = vadd.f32 %v4181, %v4293
        %v4295 = vpop.f32.mrb[0].mxu0
        %v4296 = vadd.f32 %v4183, %v4295
        %4297 = vmatprep.mubr.bf16.mxu0 %v3321
        %4298 = vmatmul.mubr.bf16.gmra.mrb[0].mxu0 %v3320
        %v4299 = vpop.f32.mrb[0].mxu0
        %v4300 = vadd.f32 %v4187, %v4299
        %v4301 = vpop.f32.mrb[0].mxu0
        %v4302 = vadd.f32 %v4189, %v4301
        %v4303 = vpop.f32.mrb[0].mxu0
        %v4304 = vadd.f32 %v4191, %v4303
        %v4305 = vpop.f32.mrb[0].mxu0
        %v4306 = vadd.f32 %v4193, %v4305
        %4307 = vmatprep.mubr.bf16.mxu0 %v3325
        %4308 = vmatmul.mubr.bf16.gmra.mrb[0].mxu0 %v3324
        %v4309 = vpop.f32.mrb[0].mxu0
        %v4310 = vadd.f32 %v4197, %v4309
        %v4311 = vpop.f32.mrb[0].mxu0
        %v4312 = vadd.f32 %v4199, %v4311
        %v4313 = vpop.f32.mrb[0].mxu0
        %v4314 = vadd.f32 %v4201, %v4313
        %v4315 = vpop.f32.mrb[0].mxu0
        %v4316 = vadd.f32 %v4203, %v4315
        %4317 = vmatprep.mubr.bf16.mxu0 %v3329
        %4318 = vmatmul.mubr.bf16.gmra.mrb[0].mxu0 %v3328
        %v4319 = vpop.f32.mrb[0].mxu0
        %v4320 = vadd.f32 %v4207, %v4319
        %v4321 = vpop.f32.mrb[0].mxu0
        %v4322 = vadd.f32 %v4209, %v4321
        %v4323 = vpop.f32.mrb[0].mxu0
        %v4324 = vadd.f32 %v4211, %v4323
        %v4325 = vpop.f32.mrb[0].mxu0
        %v4326 = vadd.f32 %v4213, %v4325
        %4327 = vmatprep.mubr.bf16.mxu0 %v3333
        %4328 = vmatmul.mubr.bf16.gmra.mrb[0].mxu0 %v3332
        %v4329 = vpop.f32.mrb[0].mxu0
        %v4330 = vadd.f32 %v4217, %v4329
        %v4331 = vpop.f32.mrb[0].mxu0
        %v4332 = vadd.f32 %v4219, %v4331
        %v4333 = vpop.f32.mrb[0].mxu0
        %v4334 = vadd.f32 %v4221, %v4333
        %v4335 = vpop.f32.mrb[0].mxu0
        %v4336 = vadd.f32 %v4223, %v4335
        %4337 = vmatprep.mubr.bf16.mxu0 %v3337
        %4338 = vmatmul.mubr.bf16.gmra.mrb[0].mxu0 %v3336
        %v4339 = vpop.f32.mrb[0].mxu0
        %v4340 = vadd.f32 %v4227, %v4339
        %v4341 = vpop.f32.mrb[0].mxu0
        %v4342 = vadd.f32 %v4229, %v4341
        %v4343 = vpop.f32.mrb[0].mxu0
        %v4344 = vadd.f32 %v4231, %v4343
        %v4345 = vpop.f32.mrb[0].mxu0
        %v4346 = vadd.f32 %v4233, %v4345
        %4347 = vmatprep.mubr.bf16.mxu0 %v3341
        %4348 = vmatmul.mubr.bf16.gmra.mrb[0].mxu0 %v3340
        %v4349 = vpop.f32.mrb[0].mxu0
        %v4350 = vadd.f32 %v4237, %v4349
        %v4351 = vpop.f32.mrb[0].mxu0
        %v4352 = vadd.f32 %v4239, %v4351
        %v4353 = vpop.f32.mrb[0].mxu0
        %v4354 = vadd.f32 %v4241, %v4353
        %v4355 = vpop.f32.mrb[0].mxu0
        %v4356 = vadd.f32 %v4243, %v4355
        %4357 = vdwg.mxu0
        %4358 = vmatprep.subr.bf16.mxu0 %v3879
        %4359 = vmatpush1.bf16.msra.mxu0 %v3878
        %4360 = vmatprep.subr.bf16.mxu0 %v3883
        %4361 = vmatpush1.bf16.msra.mxu0 %v3882
        %4362 = vmatprep.subr.bf16.mxu0 %v3887
        %4363 = vmatpush1.bf16.msra.mxu0 %v3886
        %4364 = vmatprep.subr.bf16.mxu0 %v3891
        %4365 = vmatpush1.bf16.msra.mxu0 %v3890
        %4366 = vmatprep.subr.bf16.mxu0 %v3895
        %4367 = vmatpush1.bf16.msra.mxu0 %v3894
        %4368 = vmatprep.subr.bf16.mxu0 %v3899
        %4369 = vmatpush1.bf16.msra.mxu0 %v3898
        %4370 = vmatprep.subr.bf16.mxu0 %v3903
        %4371 = vmatpush1.bf16.msra.mxu0 %v3902
        %4372 = vmatprep.subr.bf16.mxu0 %v3907
        %4373 = vmatpush1.bf16.msra.mxu0 %v3906
        %4374 = vmatprep.subr.bf16.mxu0 %v3911
        %4375 = vmatpush1.bf16.msra.mxu0 %v3910
        %4376 = vmatprep.subr.bf16.mxu0 %v3915
        %4377 = vmatpush1.bf16.msra.mxu0 %v3914
        %4378 = vmatprep.subr.bf16.mxu0 %v3919
        %4379 = vmatpush1.bf16.msra.mxu0 %v3918
        %4380 = vmatprep.subr.bf16.mxu0 %v3923
        %4381 = vmatpush1.bf16.msra.mxu0 %v3922
        %4382 = vmatprep.subr.bf16.mxu0 %v3927
        %4383 = vmatpush1.bf16.msra.mxu0 %v3926
        %4384 = vmatprep.subr.bf16.mxu0 %v3931
        %4385 = vmatpush1.bf16.msra.mxu0 %v3930
        %4386 = vmatprep.subr.bf16.mxu0 %v3935
        %4387 = vmatpush1.bf16.msra.mxu0 %v3934
        %4388 = vmatprep.subr.bf16.mxu0 %v3939
        %4389 = vmatpush1.bf16.msra.mxu0 %v3938
        %4390 = vmatprep.mubr.bf16.mxu0 %v3311
        %4391 = vmatmul.mubr.bf16.gmra.mrb[0].mxu0 %v3310
        %v4392 = vpop.f32.mrb[0].mxu0
        %v4393 = vadd.f32 %v3483, %v4392
        %v4394 = vpop.f32.mrb[0].mxu0
        %v4395 = vadd.f32 %v3487, %v4394
        %v4396 = vpop.f32.mrb[0].mxu0
        %v4397 = vadd.f32 %v3483, %v4396
        %v4398 = vpop.f32.mrb[0].mxu0
        %v4399 = vadd.f32 %v3487, %v4398
        %4400 = vmatprep.mubr.bf16.mxu0 %v3315
        %4401 = vmatmul.mubr.bf16.gmra.mrb[0].mxu0 %v3314
        %v4402 = vpop.f32.mrb[0].mxu0
        %v4403 = vadd.f32 %v3483, %v4402
        %v4404 = vpop.f32.mrb[0].mxu0
        %v4405 = vadd.f32 %v3487, %v4404
        %v4406 = vpop.f32.mrb[0].mxu0
        %v4407 = vadd.f32 %v3483, %v4406
        %v4408 = vpop.f32.mrb[0].mxu0
        %v4409 = vadd.f32 %v3487, %v4408
        %4410 = vmatprep.mubr.bf16.mxu0 %v3319
        %4411 = vmatmul.mubr.bf16.gmra.mrb[0].mxu0 %v3318
        %v4412 = vpop.f32.mrb[0].mxu0
        %v4413 = vadd.f32 %v3483, %v4412
        %v4414 = vpop.f32.mrb[0].mxu0
        %v4415 = vadd.f32 %v3487, %v4414
        %v4416 = vpop.f32.mrb[0].mxu0
        %v4417 = vadd.f32 %v3483, %v4416
        %v4418 = vpop.f32.mrb[0].mxu0
        %v4419 = vadd.f32 %v3487, %v4418
        %4420 = vmatprep.mubr.bf16.mxu0 %v3323
        %4421 = vmatmul.mubr.bf16.gmra.mrb[0].mxu0 %v3322
        %v4422 = vpop.f32.mrb[0].mxu0
        %v4423 = vadd.f32 %v3483, %v4422
        %v4424 = vpop.f32.mrb[0].mxu0
        %v4425 = vadd.f32 %v3487, %v4424
        %v4426 = vpop.f32.mrb[0].mxu0
        %v4427 = vadd.f32 %v3483, %v4426
        %v4428 = vpop.f32.mrb[0].mxu0
        %v4429 = vadd.f32 %v3487, %v4428
        %4430 = vmatprep.mubr.bf16.mxu0 %v3327
        %4431 = vmatmul.mubr.bf16.gmra.mrb[0].mxu0 %v3326
        %v4432 = vpop.f32.mrb[0].mxu0
        %v4433 = vadd.f32 %v3483, %v4432
        %v4434 = vpop.f32.mrb[0].mxu0
        %v4435 = vadd.f32 %v3487, %v4434
        %v4436 = vpop.f32.mrb[0].mxu0
        %v4437 = vadd.f32 %v3483, %v4436
        %v4438 = vpop.f32.mrb[0].mxu0
        %v4439 = vadd.f32 %v3487, %v4438
        %4440 = vmatprep.mubr.bf16.mxu0 %v3331
        %4441 = vmatmul.mubr.bf16.gmra.mrb[0].mxu0 %v3330
        %v4442 = vpop.f32.mrb[0].mxu0
        %v4443 = vadd.f32 %v3483, %v4442
        %v4444 = vpop.f32.mrb[0].mxu0
        %v4445 = vadd.f32 %v3487, %v4444
        %v4446 = vpop.f32.mrb[0].mxu0
        %v4447 = vadd.f32 %v3483, %v4446
        %v4448 = vpop.f32.mrb[0].mxu0
        %v4449 = vadd.f32 %v3487, %v4448
        %4450 = vmatprep.mubr.bf16.mxu0 %v3335
        %4451 = vmatmul.mubr.bf16.gmra.mrb[0].mxu0 %v3334
        %v4452 = vpop.f32.mrb[0].mxu0
        %v4453 = vadd.f32 %v3483, %v4452
        %v4454 = vpop.f32.mrb[0].mxu0
        %v4455 = vadd.f32 %v3487, %v4454
        %v4456 = vpop.f32.mrb[0].mxu0
        %v4457 = vadd.f32 %v3483, %v4456
        %v4458 = vpop.f32.mrb[0].mxu0
        %v4459 = vadd.f32 %v3487, %v4458
        %4460 = vmatprep.mubr.bf16.mxu0 %v3339
        %4461 = vmatmul.mubr.bf16.gmra.mrb[0].mxu0 %v3338
        %v4462 = vpop.f32.mrb[0].mxu0
        %v4463 = vadd.f32 %v3483, %v4462
        %v4464 = vpop.f32.mrb[0].mxu0
        %v4465 = vadd.f32 %v3487, %v4464
        %v4466 = vpop.f32.mrb[0].mxu0
        %v4467 = vadd.f32 %v3483, %v4466
        %v4468 = vpop.f32.mrb[0].mxu0
        %v4469 = vadd.f32 %v3487, %v4468
        %4470 = vdwg.mxu0
        %4471 = vmatprep.subr.bf16.mxu0 %v3943
        %4472 = vmatpush1.bf16.msra.mxu0 %v3942
        %4473 = vmatprep.subr.bf16.mxu0 %v3947
        %4474 = vmatpush1.bf16.msra.mxu0 %v3946
        %4475 = vmatprep.subr.bf16.mxu0 %v3951
        %4476 = vmatpush1.bf16.msra.mxu0 %v3950
        %4477 = vmatprep.subr.bf16.mxu0 %v3955
        %4478 = vmatpush1.bf16.msra.mxu0 %v3954
        %4479 = vmatprep.subr.bf16.mxu0 %v3959
        %4480 = vmatpush1.bf16.msra.mxu0 %v3958
        %4481 = vmatprep.subr.bf16.mxu0 %v3963
        %4482 = vmatpush1.bf16.msra.mxu0 %v3962
        %4483 = vmatprep.subr.bf16.mxu0 %v3967
        %4484 = vmatpush1.bf16.msra.mxu0 %v3966
        %4485 = vmatprep.subr.bf16.mxu0 %v3971
        %4486 = vmatpush1.bf16.msra.mxu0 %v3970
        %4487 = vmatprep.subr.bf16.mxu0 %v3975
        %4488 = vmatpush1.bf16.msra.mxu0 %v3974
        %4489 = vmatprep.subr.bf16.mxu0 %v3979
        %4490 = vmatpush1.bf16.msra.mxu0 %v3978
        %4491 = vmatprep.subr.bf16.mxu0 %v3983
        %4492 = vmatpush1.bf16.msra.mxu0 %v3982
        %4493 = vmatprep.subr.bf16.mxu0 %v3987
        %4494 = vmatpush1.bf16.msra.mxu0 %v3986
        %4495 = vmatprep.subr.bf16.mxu0 %v3991
        %4496 = vmatpush1.bf16.msra.mxu0 %v3990
        %4497 = vmatprep.subr.bf16.mxu0 %v3995
        %4498 = vmatpush1.bf16.msra.mxu0 %v3994
        %4499 = vmatprep.subr.bf16.mxu0 %v3999
        %4500 = vmatpush1.bf16.msra.mxu0 %v3998
        %4501 = vmatprep.subr.bf16.mxu0 %v4003
        %4502 = vmatpush1.bf16.msra.mxu0 %v4002
        %4503 = vmatprep.mubr.bf16.mxu0 %v3313
        %4504 = vmatmul.mubr.bf16.gmra.mrb[0].mxu0 %v3312
        %v4505 = vpop.f32.mrb[0].mxu0
        %v4506 = vadd.f32 %v4393, %v4505
        %v4507 = vpop.f32.mrb[0].mxu0
        %v4508 = vadd.f32 %v4395, %v4507
        %v4509 = vpop.f32.mrb[0].mxu0
        %v4510 = vadd.f32 %v4397, %v4509
        %v4511 = vpop.f32.mrb[0].mxu0
        %v4512 = vadd.f32 %v4399, %v4511
        %4513 = vmatprep.mubr.bf16.mxu0 %v3317
        %4514 = vmatmul.mubr.bf16.gmra.mrb[0].mxu0 %v3316
        %v4515 = vpop.f32.mrb[0].mxu0
        %v4516 = vadd.f32 %v4403, %v4515
        %v4517 = vpop.f32.mrb[0].mxu0
        %v4518 = vadd.f32 %v4405, %v4517
        %v4519 = vpop.f32.mrb[0].mxu0
        %v4520 = vadd.f32 %v4407, %v4519
        %v4521 = vpop.f32.mrb[0].mxu0
        %v4522 = vadd.f32 %v4409, %v4521
        %4523 = vmatprep.mubr.bf16.mxu0 %v3321
        %4524 = vmatmul.mubr.bf16.gmra.mrb[0].mxu0 %v3320
        %v4525 = vpop.f32.mrb[0].mxu0
        %v4526 = vadd.f32 %v4413, %v4525
        %v4527 = vpop.f32.mrb[0].mxu0
        %v4528 = vadd.f32 %v4415, %v4527
        %v4529 = vpop.f32.mrb[0].mxu0
        %v4530 = vadd.f32 %v4417, %v4529
        %v4531 = vpop.f32.mrb[0].mxu0
        %v4532 = vadd.f32 %v4419, %v4531
        %4533 = vmatprep.mubr.bf16.mxu0 %v3325
        %4534 = vmatmul.mubr.bf16.gmra.mrb[0].mxu0 %v3324
        %v4535 = vpop.f32.mrb[0].mxu0
        %v4536 = vadd.f32 %v4423, %v4535
        %v4537 = vpop.f32.mrb[0].mxu0
        %v4538 = vadd.f32 %v4425, %v4537
        %v4539 = vpop.f32.mrb[0].mxu0
        %v4540 = vadd.f32 %v4427, %v4539
        %v4541 = vpop.f32.mrb[0].mxu0
        %v4542 = vadd.f32 %v4429, %v4541
        %4543 = vmatprep.mubr.bf16.mxu0 %v3329
        %4544 = vmatmul.mubr.bf16.gmra.mrb[0].mxu0 %v3328
        %v4545 = vpop.f32.mrb[0].mxu0
        %v4546 = vadd.f32 %v4433, %v4545
        %v4547 = vpop.f32.mrb[0].mxu0
        %v4548 = vadd.f32 %v4435, %v4547
        %v4549 = vpop.f32.mrb[0].mxu0
        %v4550 = vadd.f32 %v4437, %v4549
        %v4551 = vpop.f32.mrb[0].mxu0
        %v4552 = vadd.f32 %v4439, %v4551
        %4553 = vmatprep.mubr.bf16.mxu0 %v3333
        %4554 = vmatmul.mubr.bf16.gmra.mrb[0].mxu0 %v3332
        %v4555 = vpop.f32.mrb[0].mxu0
        %v4556 = vadd.f32 %v4443, %v4555
        %v4557 = vpop.f32.mrb[0].mxu0
        %v4558 = vadd.f32 %v4445, %v4557
        %v4559 = vpop.f32.mrb[0].mxu0
        %v4560 = vadd.f32 %v4447, %v4559
        %v4561 = vpop.f32.mrb[0].mxu0
        %v4562 = vadd.f32 %v4449, %v4561
        %4563 = vmatprep.mubr.bf16.mxu0 %v3337
        %4564 = vmatmul.mubr.bf16.gmra.mrb[0].mxu0 %v3336
        %v4565 = vpop.f32.mrb[0].mxu0
        %v4566 = vadd.f32 %v4453, %v4565
        %v4567 = vpop.f32.mrb[0].mxu0
        %v4568 = vadd.f32 %v4455, %v4567
        %v4569 = vpop.f32.mrb[0].mxu0
        %v4570 = vadd.f32 %v4457, %v4569
        %v4571 = vpop.f32.mrb[0].mxu0
        %v4572 = vadd.f32 %v4459, %v4571
        %4573 = vmatprep.mubr.bf16.mxu0 %v3341
        %4574 = vmatmul.mubr.bf16.gmra.mrb[0].mxu0 %v3340
        %v4575 = vpop.f32.mrb[0].mxu0
        %v4576 = vadd.f32 %v4463, %v4575
        %v4577 = vpop.f32.mrb[0].mxu0
        %v4578 = vadd.f32 %v4465, %v4577
        %v4579 = vpop.f32.mrb[0].mxu0
        %v4580 = vadd.f32 %v4467, %v4579
        %v4581 = vpop.f32.mrb[0].mxu0
        %v4582 = vadd.f32 %v4469, %v4581
        %4583 = vdwg.mxu0
        %v4584 = vtanh.pop %v4280
        %v4585 = vtanh.pop %v4282
        %v4586 = vtanh.pop %v4284
        %v4587 = vtanh.pop %v4286
        %v4588 = vtanh.pop %v4290
        %v4589 = vtanh.pop %v4292
        %v4590 = vtanh.pop %v4294
        %v4591 = vtanh.pop %v4296
        %v4592 = vtanh.pop %v4300
        %v4593 = vtanh.pop %v4302
        %v4594 = vtanh.pop %v4304
        %v4595 = vtanh.pop %v4306
        %v4596 = vtanh.pop %v4310
        %v4597 = vtanh.pop %v4312
        %v4598 = vtanh.pop %v4314
        %v4599 = vtanh.pop %v4316
        %v4600 = vtanh.pop %v4320
        %v4601 = vtanh.pop %v4322
        %v4602 = vtanh.pop %v4324
        %v4603 = vtanh.pop %v4326
        %v4604 = vtanh.pop %v4330
        %v4605 = vtanh.pop %v4332
        %v4606 = vtanh.pop %v4334
        %v4607 = vtanh.pop %v4336
        %v4608 = vtanh.pop %v4340
        %v4609 = vtanh.pop %v4342
        %v4610 = vtanh.pop %v4344
        %v4611 = vtanh.pop %v4346
        %v4612 = vtanh.pop %v4350
        %v4613 = vtanh.pop %v4352
        %v4614 = vtanh.pop %v4354
        %v4615 = vtanh.pop %v4356
        %v4616 = vxor.u32 %v4506, 2147483648
        %v4617 = vxor.u32 %v4508, 2147483648
        %v4618 = vxor.u32 %v4510, 2147483648
        %v4619 = vxor.u32 %v4512, 2147483648
        %v4620 = vxor.u32 %v4516, 2147483648
        %v4621 = vxor.u32 %v4518, 2147483648
        %v4622 = vxor.u32 %v4520, 2147483648
        %v4623 = vxor.u32 %v4522, 2147483648
        %v4624 = vxor.u32 %v4526, 2147483648
        %v4625 = vxor.u32 %v4528, 2147483648
        %v4626 = vxor.u32 %v4530, 2147483648
        %v4627 = vxor.u32 %v4532, 2147483648
        %v4628 = vxor.u32 %v4536, 2147483648
        %v4629 = vxor.u32 %v4538, 2147483648
        %v4630 = vxor.u32 %v4540, 2147483648
        %v4631 = vxor.u32 %v4542, 2147483648
        %v4632 = vxor.u32 %v4546, 2147483648
        %v4633 = vxor.u32 %v4548, 2147483648
        %v4634 = vxor.u32 %v4550, 2147483648
        %v4635 = vxor.u32 %v4552, 2147483648
        %v4636 = vxor.u32 %v4556, 2147483648
        %v4637 = vxor.u32 %v4558, 2147483648
        %v4638 = vxor.u32 %v4560, 2147483648
        %v4639 = vxor.u32 %v4562, 2147483648
        %v4640 = vxor.u32 %v4566, 2147483648
        %v4641 = vxor.u32 %v4568, 2147483648
        %v4642 = vxor.u32 %v4570, 2147483648
        %v4643 = vxor.u32 %v4572, 2147483648
        %v4644 = vxor.u32 %v4576, 2147483648
        %v4645 = vxor.u32 %v4578, 2147483648
        %v4646 = vxor.u32 %v4580, 2147483648
        %v4647 = vxor.u32 %v4582, 2147483648
        %v4648 = vmul.f32 %v4616, 1.442695
        %v4649 = vpow.pop %v4648
        %v4650 = vmul.f32 %v4617, 1.442695
        %v4651 = vpow.pop %v4650
        %v4652 = vmul.f32 %v4618, 1.442695
        %v4653 = vpow.pop %v4652
        %v4654 = vmul.f32 %v4619, 1.442695
        %v4655 = vpow.pop %v4654
        %v4656 = vmul.f32 %v4620, 1.442695
        %v4657 = vpow.pop %v4656
        %v4658 = vmul.f32 %v4621, 1.442695
        %v4659 = vpow.pop %v4658
        %v4660 = vmul.f32 %v4622, 1.442695
        %v4661 = vpow.pop %v4660
        %v4662 = vmul.f32 %v4623, 1.442695
        %v4663 = vpow.pop %v4662
        %v4664 = vmul.f32 %v4624, 1.442695
        %v4665 = vpow.pop %v4664
        %v4666 = vmul.f32 %v4625, 1.442695
        %v4667 = vpow.pop %v4666
        %v4668 = vmul.f32 %v4626, 1.442695
        %v4669 = vpow.pop %v4668
        %v4670 = vmul.f32 %v4627, 1.442695
        %v4671 = vpow.pop %v4670
        %v4672 = vmul.f32 %v4628, 1.442695
        %v4673 = vpow.pop %v4672
        %v4674 = vmul.f32 %v4629, 1.442695
        %v4675 = vpow.pop %v4674
        %v4676 = vmul.f32 %v4630, 1.442695
        %v4677 = vpow.pop %v4676
        %v4678 = vmul.f32 %v4631, 1.442695
        %v4679 = vpow.pop %v4678
        %v4680 = vmul.f32 %v4632, 1.442695
        %v4681 = vpow.pop %v4680
        %v4682 = vmul.f32 %v4633, 1.442695
        %v4683 = vpow.pop %v4682
        %v4684 = vmul.f32 %v4634, 1.442695
        %v4685 = vpow.pop %v4684
        %v4686 = vmul.f32 %v4635, 1.442695
        %v4687 = vpow.pop %v4686
        %v4688 = vmul.f32 %v4636, 1.442695
        %v4689 = vpow.pop %v4688
        %v4690 = vmul.f32 %v4637, 1.442695
        %v4691 = vpow.pop %v4690
        %v4692 = vmul.f32 %v4638, 1.442695
        %v4693 = vpow.pop %v4692
        %v4694 = vmul.f32 %v4639, 1.442695
        %v4695 = vpow.pop %v4694
        %v4696 = vmul.f32 %v4640, 1.442695
        %v4697 = vpow.pop %v4696
        %v4698 = vmul.f32 %v4641, 1.442695
        %v4699 = vpow.pop %v4698
        %v4700 = vmul.f32 %v4642, 1.442695
        %v4701 = vpow.pop %v4700
        %v4702 = vmul.f32 %v4643, 1.442695
        %v4703 = vpow.pop %v4702
        %v4704 = vmul.f32 %v4644, 1.442695
        %v4705 = vpow.pop %v4704
        %v4706 = vmul.f32 %v4645, 1.442695
        %v4707 = vpow.pop %v4706
        %v4708 = vmul.f32 %v4646, 1.442695
        %v4709 = vpow.pop %v4708
        %v4710 = vmul.f32 %v4647, 1.442695
        %v4711 = vpow.pop %v4710
        %v4712 = vadd.f32 %v4649, 1.0
        %v4713 = vadd.f32 %v4651, 1.0
        %v4714 = vadd.f32 %v4653, 1.0
        %v4715 = vadd.f32 %v4655, 1.0
        %v4716 = vadd.f32 %v4657, 1.0
        %v4717 = vadd.f32 %v4659, 1.0
        %v4718 = vadd.f32 %v4661, 1.0
        %v4719 = vadd.f32 %v4663, 1.0
        %v4720 = vadd.f32 %v4665, 1.0
        %v4721 = vadd.f32 %v4667, 1.0
        %v4722 = vadd.f32 %v4669, 1.0
        %v4723 = vadd.f32 %v4671, 1.0
        %v4724 = vadd.f32 %v4673, 1.0
        %v4725 = vadd.f32 %v4675, 1.0
        %v4726 = vadd.f32 %v4677, 1.0
        %v4727 = vadd.f32 %v4679, 1.0
        %v4728 = vadd.f32 %v4681, 1.0
        %v4729 = vadd.f32 %v4683, 1.0
        %v4730 = vadd.f32 %v4685, 1.0
        %v4731 = vadd.f32 %v4687, 1.0
        %v4732 = vadd.f32 %v4689, 1.0
        %v4733 = vadd.f32 %v4691, 1.0
        %v4734 = vadd.f32 %v4693, 1.0
        %v4735 = vadd.f32 %v4695, 1.0
        %v4736 = vadd.f32 %v4697, 1.0
        %v4737 = vadd.f32 %v4699, 1.0
        %v4738 = vadd.f32 %v4701, 1.0
        %v4739 = vadd.f32 %v4703, 1.0
        %v4740 = vadd.f32 %v4705, 1.0
        %v4741 = vadd.f32 %v4707, 1.0
        %v4742 = vadd.f32 %v4709, 1.0
        %v4743 = vadd.f32 %v4711, 1.0
        %v4744 = vrcp.pop %v4712
        %v4745 = vmul.f32 1.0, %v4744
        %v4746 = vrcp.pop %v4713
        %v4747 = vmul.f32 1.0, %v4746
        %v4748 = vrcp.pop %v4714
        %v4749 = vmul.f32 1.0, %v4748
        %v4750 = vrcp.pop %v4715
        %v4751 = vmul.f32 1.0, %v4750
        %v4752 = vrcp.pop %v4716
        %v4753 = vmul.f32 1.0, %v4752
        %v4754 = vrcp.pop %v4717
        %v4755 = vmul.f32 1.0, %v4754
        %v4756 = vrcp.pop %v4718
        %v4757 = vmul.f32 1.0, %v4756
        %v4758 = vrcp.pop %v4719
        %v4759 = vmul.f32 1.0, %v4758
        %v4760 = vrcp.pop %v4720
        %v4761 = vmul.f32 1.0, %v4760
        %v4762 = vrcp.pop %v4721
        %v4763 = vmul.f32 1.0, %v4762
        %v4764 = vrcp.pop %v4722
        %v4765 = vmul.f32 1.0, %v4764
        %v4766 = vrcp.pop %v4723
        %v4767 = vmul.f32 1.0, %v4766
        %v4768 = vrcp.pop %v4724
        %v4769 = vmul.f32 1.0, %v4768
        %v4770 = vrcp.pop %v4725
        %v4771 = vmul.f32 1.0, %v4770
        %v4772 = vrcp.pop %v4726
        %v4773 = vmul.f32 1.0, %v4772
        %v4774 = vrcp.pop %v4727
        %v4775 = vmul.f32 1.0, %v4774
        %v4776 = vrcp.pop %v4728
        %v4777 = vmul.f32 1.0, %v4776
        %v4778 = vrcp.pop %v4729
        %v4779 = vmul.f32 1.0, %v4778
        %v4780 = vrcp.pop %v4730
        %v4781 = vmul.f32 1.0, %v4780
        %v4782 = vrcp.pop %v4731
        %v4783 = vmul.f32 1.0, %v4782
        %v4784 = vrcp.pop %v4732
        %v4785 = vmul.f32 1.0, %v4784
        %v4786 = vrcp.pop %v4733
        %v4787 = vmul.f32 1.0, %v4786
        %v4788 = vrcp.pop %v4734
        %v4789 = vmul.f32 1.0, %v4788
        %v4790 = vrcp.pop %v4735
        %v4791 = vmul.f32 1.0, %v4790
        %v4792 = vrcp.pop %v4736
        %v4793 = vmul.f32 1.0, %v4792
        %v4794 = vrcp.pop %v4737
        %v4795 = vmul.f32 1.0, %v4794
        %v4796 = vrcp.pop %v4738
        %v4797 = vmul.f32 1.0, %v4796
        %v4798 = vrcp.pop %v4739
        %v4799 = vmul.f32 1.0, %v4798
        %v4800 = vrcp.pop %v4740
        %v4801 = vmul.f32 1.0, %v4800
        %v4802 = vrcp.pop %v4741
        %v4803 = vmul.f32 1.0, %v4802
        %v4804 = vrcp.pop %v4742
        %v4805 = vmul.f32 1.0, %v4804
        %v4806 = vrcp.pop %v4743
        %v4807 = vmul.f32 1.0, %v4806
        %v4808 = vmul.f32 %v4584, %v4745
        %v4809 = vmul.f32 %v4585, %v4747
        %v4810 = vmul.f32 %v4586, %v4749
        %v4811 = vmul.f32 %v4587, %v4751
        %v4812 = vmul.f32 %v4588, %v4753
        %v4813 = vmul.f32 %v4589, %v4755
        %v4814 = vmul.f32 %v4590, %v4757
        %v4815 = vmul.f32 %v4591, %v4759
        %v4816 = vmul.f32 %v4592, %v4761
        %v4817 = vmul.f32 %v4593, %v4763
        %v4818 = vmul.f32 %v4594, %v4765
        %v4819 = vmul.f32 %v4595, %v4767
        %v4820 = vmul.f32 %v4596, %v4769
        %v4821 = vmul.f32 %v4597, %v4771
        %v4822 = vmul.f32 %v4598, %v4773
        %v4823 = vmul.f32 %v4599, %v4775
        %v4824 = vmul.f32 %v4600, %v4777
        %v4825 = vmul.f32 %v4601, %v4779
        %v4826 = vmul.f32 %v4602, %v4781
        %v4827 = vmul.f32 %v4603, %v4783
        %v4828 = vmul.f32 %v4604, %v4785
        %v4829 = vmul.f32 %v4605, %v4787
        %v4830 = vmul.f32 %v4606, %v4789
        %v4831 = vmul.f32 %v4607, %v4791
        %v4832 = vmul.f32 %v4608, %v4793
        %v4833 = vmul.f32 %v4609, %v4795
        %v4834 = vmul.f32 %v4610, %v4797
        %v4835 = vmul.f32 %v4611, %v4799
        %v4836 = vmul.f32 %v4612, %v4801
        %v4837 = vmul.f32 %v4613, %v4803
        %v4838 = vmul.f32 %v4614, %v4805
        %v4839 = vmul.f32 %v4615, %v4807
        %v4840 = vpack.c.bf16 %v4810, %v4808
        %v4841 = vpack.c.bf16 %v4811, %v4809
        %v4842 = vpack.c.bf16 %v4814, %v4812
        %v4843 = vpack.c.bf16 %v4815, %v4813
        %v4844 = vpack.c.bf16 %v4818, %v4816
        %v4845 = vpack.c.bf16 %v4819, %v4817
        %v4846 = vpack.c.bf16 %v4822, %v4820
        %v4847 = vpack.c.bf16 %v4823, %v4821
        %v4848 = vpack.c.bf16 %v4826, %v4824
        %v4849 = vpack.c.bf16 %v4827, %v4825
        %v4850 = vpack.c.bf16 %v4830, %v4828
        %v4851 = vpack.c.bf16 %v4831, %v4829
        %v4852 = vpack.c.bf16 %v4834, %v4832
        %v4853 = vpack.c.bf16 %v4835, %v4833
        %v4854 = vpack.c.bf16 %v4838, %v4836
        %v4855 = vpack.c.bf16 %v4839, %v4837
        %v4856 = vld [vmem:[%s5] sm:$0x3]
        %v4859 = vunpack.c.l.s4 1966171168
        %v4860 = vunpack.c.0.s8 %v4859
        %v4861 = vlaneseq
        %v4862 = vshrl.u32 %v4861, 7
        %v4863 = vsub.s32 %v4860, %v4862
        %v4864 = vrot.slane %v4856, %v4863
        %v4865 = vcombine.high %v4864, %v4864
        %v4867 = vunpack.c.l.s4 1966171168
        %v4868 = vunpack.c.0.s8 %v4867
        %v4869 = vlaneseq
        %v4870 = vshrl.u32 %v4869, 7
        %v4871 = vsub.s32 %v4868, %v4870
        %v4872 = vrot.slane %v4864, %v4871
        %v4874 = vunpack.c.l.s4 1966171168
        %v4875 = vunpack.c.0.s8 %v4874
        %v4876 = vlaneseq
        %v4877 = vshrl.u32 %v4876, 7
        %v4878 = vsub.s32 %v4875, %v4877
        %v4879 = vrot.slane %v4865, %v4878
        %4882 = vmatprep.subr.bf16.mxu0 %v4841
        %4883 = vmatpush1.bf16.xpose.msra.mxu0 %v4840
        %4884 = vmatprep.subr.bf16.mxu0 %v4843
        %4885 = vmatpush1.bf16.xpose.msra.mxu0 %v4842
        %4886 = vmatprep.subr.bf16.mxu0 %v4845
        %4887 = vmatpush1.bf16.xpose.msra.mxu0 %v4844
        %4888 = vmatprep.subr.bf16.mxu0 %v4847
        %4889 = vmatpush1.bf16.xpose.msra.mxu0 %v4846
        %4890 = vmatprep.subr.bf16.mxu0 %v4849
        %4891 = vmatpush1.bf16.xpose.msra.mxu0 %v4848
        %4892 = vmatprep.subr.bf16.mxu0 %v4851
        %4893 = vmatpush1.bf16.xpose.msra.mxu0 %v4850
        %4894 = vmatprep.subr.bf16.mxu0 %v4853
        %4895 = vmatpush1.bf16.xpose.msra.mxu0 %v4852
        %4896 = vmatprep.subr.bf16.mxu0 %v4855
        %4897 = vmatpush1.bf16.xpose.msra.mxu0 %v4854
        %4898 = vmatprep.subr.bf16.mxu0 0
        %4899 = vmatpush1.bf16.xpose.msra.mxu0 0
        %4900 = vmatprep.subr.bf16.mxu0 0
        %4901 = vmatpush1.bf16.xpose.msra.mxu0 0
        %4902 = vmatprep.subr.bf16.mxu0 0
        %4903 = vmatpush1.bf16.xpose.msra.mxu0 0
        %4904 = vmatprep.subr.bf16.mxu0 0
        %4905 = vmatpush1.bf16.xpose.msra.mxu0 0
        %4906 = vmatprep.subr.bf16.mxu0 0
        %4907 = vmatpush1.bf16.xpose.msra.mxu0 0
        %4908 = vmatprep.subr.bf16.mxu0 0
        %4909 = vmatpush1.bf16.xpose.msra.mxu0 0
        %4910 = vmatprep.subr.bf16.mxu0 0
        %4911 = vmatpush1.bf16.xpose.msra.mxu0 0
        %4912 = vmatprep.subr.bf16.mxu0 0
        %4913 = vmatpush1.bf16.xpose.msra.mxu0 0
        %4914 = vmatprep.mubr.bf16.mxu0 %v4879
        %4915 = vmatmul.mubr.bf16.gmra.mrb[0].mxu0 %v4872
        %v4916 = vpop.f32.mrb[0].mxu0
        %v4917 = vadd.f32 0.0, %v4916
        %v4918 = vpop.f32.mrb[0].mxu0
        %v4919 = vpop.f32.mrb[0].mxu0
        %v4920 = vpop.f32.mrb[0].mxu0
        %4921 = vdwg.mxu0
        %v4922 = vld [vmem:[#allocation5] sm:$0x1]
        %4924 = vset.pattern.permute.xlu0 0
        %4925 = vperm.xlu0 %4924, %v4922
        %v4926 = vpop.permute.xlu0 %4925
        %v4928 = vlaneseq
        %v4929 = vshrl.u32 %v4928, 7
        %v4930 = vsub.s32 0, %v4929
        %v4931 = vrot.slane %v4926, %v4930
        %v4932 = vadd.f32 %v4917, %v4931
        %4933 = vst [vmem:[%s379] sm:$0x1] %v4932
        %s4934 = smul.u32 %s29, 128
        %v4935 = vlaneseq
        %v4936 = vand.u32 %v4935, 127
        %v4937 = vstv %s4934
        %v4938 = vadd.s32 %v4937, %v4936
        %vm4939 = vcmp.lt.s32.totalorder %v4938, 300
        %v4940 = vsel %vm4939, %v4917, -inf
        %v4941 = vld [vmem:[#allocation2] sm:$0x1]
        %vm4942 = vcmask 1040384
        %v4943 = vsel %vm4942, %v4940, -inf
        %4944 = vmax.xlane.f32.xlu0 %v4943
        %v4945 = vpop.xlane.xlu0 %4944
        %v4946 = vmax.f32 %v4941, %v4945
        %v4947 = vsub.f32 %v4941, %v4946
        %v4948 = vmul.f32 %v4947, 1.442695
        %v4949 = vpow.pop %v4948
        %4951 = vset.pattern.permute.xlu0 0
        %4952 = vperm.xlu0 %4951, %v4946
        %v4953 = vpop.permute.xlu0 %4952
        %v4955 = vlaneseq
        %v4956 = vshrl.u32 %v4955, 7
        %v4957 = vsub.s32 0, %v4956
        %v4958 = vrot.slane %v4953, %v4957
        %v4959 = vsub.f32 %v4940, %v4958
        %v4960 = vmul.f32 %v4959, 1.442695
        %v4961 = vpow.pop %v4960
        %v4962 = vld [vmem:[#allocation3] sm:$0x1]
        %v4963 = vmul.f32 %v4949, %v4962
        %v4964 = vsel %vm4942, %v4961, 0.0
        %4965 = vadd.xlane.f32.xlu0 %v4964
        %v4966 = vpop.xlane.xlu0 %4965
        %v4967 = vadd.f32 %v4963, %v4966
        %vm4968 = vcmask 0
        %4969 = vst.msk [vmem:[#allocation3] sm:$0x1] %vm4968, %v4967
        %v4970 = vld [vmem:[#allocation4] sm:$0xf]
        %4972 = vset.pattern.permute.xlu0 0
        %4973 = vperm.xlu0 %4972, %v4949
        %v4974 = vpop.permute.xlu0 %4973
        %v4976 = vlaneseq
        %v4977 = vshrl.u32 %v4976, 7
        %v4978 = vsub.s32 0, %v4977
        %v4979 = vrot.slane %v4974, %v4978
        %v4980 = vmul.f32 %v4979, %v4970
        %v4981 = vpack.c.bf16 %v4961, %v4961
        %4982 = vmatprep.subr.bf16.mxu0 %v3311
        %4983 = vmatpush1.bf16.msra.mxu0 %v3310
        %4984 = vmatprep.subr.bf16.mxu0 %v3315
        %4985 = vmatpush1.bf16.msra.mxu0 %v3314
        %4986 = vmatprep.subr.bf16.mxu0 %v3319
        %4987 = vmatpush1.bf16.msra.mxu0 %v3318
        %4988 = vmatprep.subr.bf16.mxu0 %v3323
        %4989 = vmatpush1.bf16.msra.mxu0 %v3322
        %4990 = vmatprep.subr.bf16.mxu0 %v3327
        %4991 = vmatpush1.bf16.msra.mxu0 %v3326
        %4992 = vmatprep.subr.bf16.mxu0 %v3331
        %4993 = vmatpush1.bf16.msra.mxu0 %v3330
        %4994 = vmatprep.subr.bf16.mxu0 %v3335
        %4995 = vmatpush1.bf16.msra.mxu0 %v3334
        %4996 = vmatprep.subr.bf16.mxu0 %v3339
        %4997 = vmatpush1.bf16.msra.mxu0 %v3338
        %4998 = vmatprep.subr.bf16.mxu0 0
        %4999 = vmatpush1.bf16.msra.mxu0 0
        %5000 = vmatprep.subr.bf16.mxu0 0
        %5001 = vmatpush1.bf16.msra.mxu0 0
        %5002 = vmatprep.subr.bf16.mxu0 0
        %5003 = vmatpush1.bf16.msra.mxu0 0
        %5004 = vmatprep.subr.bf16.mxu0 0
        %5005 = vmatpush1.bf16.msra.mxu0 0
        %5006 = vmatprep.subr.bf16.mxu0 0
        %5007 = vmatpush1.bf16.msra.mxu0 0
        %5008 = vmatprep.subr.bf16.mxu0 0
        %5009 = vmatpush1.bf16.msra.mxu0 0
        %5010 = vmatprep.subr.bf16.mxu0 0
        %5011 = vmatpush1.bf16.msra.mxu0 0
        %5012 = vmatprep.subr.bf16.mxu0 0
        %5013 = vmatpush1.bf16.msra.mxu0 0
        %5014 = vmatprep.mubr.bf16.mxu0 0
        %5015 = vmatmul.mubr.bf16.gmra.mrb[0].mxu0 %v4981
        %v5016 = vpop.f32.mrb[0].mxu0
        %v5017 = vadd.f32 0.0, %v5016
        %v5018 = vpop.f32.mrb[0].mxu0
        %v5019 = vadd.f32 0.0, %v5018
        %v5020 = vpop.f32.mrb[0].mxu0
        %v5021 = vpop.f32.mrb[0].mxu0
        %5022 = vdwg.mxu0
        %5023 = vmatprep.subr.bf16.mxu0 %v3313
        %5024 = vmatpush1.bf16.msra.mxu0 %v3312
        %5025 = vmatprep.subr.bf16.mxu0 %v3317
        %5026 = vmatpush1.bf16.msra.mxu0 %v3316
        %5027 = vmatprep.subr.bf16.mxu0 %v3321
        %5028 = vmatpush1.bf16.msra.mxu0 %v3320
        %5029 = vmatprep.subr.bf16.mxu0 %v3325
        %5030 = vmatpush1.bf16.msra.mxu0 %v3324
        %5031 = vmatprep.subr.bf16.mxu0 %v3329
        %5032 = vmatpush1.bf16.msra.mxu0 %v3328
        %5033 = vmatprep.subr.bf16.mxu0 %v3333
        %5034 = vmatpush1.bf16.msra.mxu0 %v3332
        %5035 = vmatprep.subr.bf16.mxu0 %v3337
        %5036 = vmatpush1.bf16.msra.mxu0 %v3336
        %5037 = vmatprep.subr.bf16.mxu0 %v3341
        %5038 = vmatpush1.bf16.msra.mxu0 %v3340
        %5039 = vmatprep.subr.bf16.mxu0 0
        %5040 = vmatpush1.bf16.msra.mxu0 0
        %5041 = vmatprep.subr.bf16.mxu0 0
        %5042 = vmatpush1.bf16.msra.mxu0 0
        %5043 = vmatprep.subr.bf16.mxu0 0
        %5044 = vmatpush1.bf16.msra.mxu0 0
        %5045 = vmatprep.subr.bf16.mxu0 0
        %5046 = vmatpush1.bf16.msra.mxu0 0
        %5047 = vmatprep.subr.bf16.mxu0 0
        %5048 = vmatpush1.bf16.msra.mxu0 0
        %5049 = vmatprep.subr.bf16.mxu0 0
        %5050 = vmatpush1.bf16.msra.mxu0 0
        %5051 = vmatprep.subr.bf16.mxu0 0
        %5052 = vmatpush1.bf16.msra.mxu0 0
        %5053 = vmatprep.subr.bf16.mxu0 0
        %5054 = vmatpush1.bf16.msra.mxu0 0
        %5055 = vmatprep.mubr.bf16.mxu0 0
        %5056 = vmatmul.mubr.bf16.gmra.mrb[0].mxu0 %v4981
        %v5057 = vpop.f32.mrb[0].mxu0
        %v5058 = vadd.f32 0.0, %v5057
        %v5059 = vpop.f32.mrb[0].mxu0
        %v5060 = vadd.f32 0.0, %v5059
        %v5061 = vpop.f32.mrb[0].mxu0
        %v5062 = vpop.f32.mrb[0].mxu0
        %5063 = vdwg.mxu0
        %v5068 = vcombine.low %v5017, %v5019
        %v5069 = vcombine.low %v5058, %v5060
        %v5071 = vunpack.c.l.s4 1966171168
        %v5072 = vunpack.c.0.s8 %v5071
        %v5073 = vlaneseq
        %v5074 = vshrl.u32 %v5073, 7
        %v5075 = vsub.s32 %v5072, %v5074
        %v5076 = vrot.slane %v5068, %v5075
        %v5078 = vunpack.c.l.s4 1966171168
        %v5079 = vunpack.c.0.s8 %v5078
        %v5080 = vlaneseq
        %v5081 = vshrl.u32 %v5080, 7
        %v5082 = vsub.s32 %v5079, %v5081
        %v5083 = vrot.slane %v5069, %v5082
        %v5084 = vcombine.low %v5076, %v5083
        %v5086 = vunpack.c.l.s4 1966171168
        %v5087 = vunpack.c.0.s8 %v5086
        %v5088 = vlaneseq
        %v5089 = vshrl.u32 %v5088, 7
        %v5090 = vsub.s32 %v5087, %v5089
        %v5091 = vrot.slane %v5084, %v5090
        %v5093 = vadd.f32 %v4980, %v5091
        %v5094 = vlaneseq
        %vm5095 = vcmp.ge.s32.totalorder %v5094, 0
        %vm5096 = vcmp.lt.s32.totalorder %v5094, 512
        %vm5097 = vmand %vm5095, %vm5096
        %5098 = vst.msk [vmem:[#allocation4] sm:$0xf] %vm5097, %v5093
        %5099 = vst.msk [vmem:[#allocation2] sm:$0x1] %vm4968, %v4946
        %p5100 = scmp.eq.s32.totalorder %s29, 2
        // Predicated region
        $region61: #{clam_sb_forward.1} parent=55 // pred_check
          %p5101 = pneg %p5100
        $region62: #{clam_sb_forward.1} parent=55 // pred_check_branch
          %5103 = sbr.rel (%p5101) target = $region64
        $region63: #{clam_sb_forward.1} parent=55 // pred_region
          %v5104 = vld [vmem:[#allocation4] sm:$0xf]
          %v5105 = vld [vmem:[#allocation3] sm:$0x1]
          %v5106 = vrcp.pop %v5105
          %5108 = vset.pattern.permute.xlu0 0
          %5109 = vperm.xlu0 %5108, %v5106
          %v5110 = vpop.permute.xlu0 %5109
          %v5112 = vlaneseq
          %v5113 = vshrl.u32 %v5112, 7
          %v5114 = vsub.s32 0, %v5113
          %v5115 = vrot.slane %v5110, %v5114
          %v5116 = vmul.f32 %v5104, %v5115
          %v5118 = vlaneseq
          %v5119 = vshrl.u32 %v5118, 7
          %v5120 = vsub.s32 0, %v5119
          %v5121 = vrot.slane %v5116, %v5120
          %v5122 = vlaneseq
          %v5123 = vshrl.u32 %v5122, 7
          %v5124 = vsub.s32 1, %v5123
          %v5125 = vrot.slane %v5116, %v5124
          %v5126 = vlaneseq
          %v5127 = vshrl.u32 %v5126, 7
          %v5128 = vsub.s32 2, %v5127
          %v5129 = vrot.slane %v5116, %v5128
          %v5130 = vlaneseq
          %v5131 = vshrl.u32 %v5130, 7
          %v5132 = vsub.s32 3, %v5131
          %v5133 = vrot.slane %v5116, %v5132
          %v5138 = vpack.c.bf16 %v5121, %v5121
          %v5139 = vpack.c.bf16 %v5125, %v5125
          %v5140 = vpack.c.bf16 %v5129, %v5129
          %v5141 = vpack.c.bf16 %v5133, %v5133
          %v5142 = vld [vmem:[%s7] sm:$0xf]
          %v5143 = vld [vmem:[%s7 + $0x4] sm:$0xf]
          %v5144 = vld [vmem:[%s7 + $0x8] sm:$0xf]
          %v5145 = vld [vmem:[%s7 + $0xc] sm:$0xf]
          %v5146 = vld [vmem:[%s7 + $0x10] sm:$0xf]
          %v5147 = vld [vmem:[%s7 + $0x14] sm:$0xf]
          %v5148 = vld [vmem:[%s7 + $0x18] sm:$0xf]
          %v5149 = vld [vmem:[%s7 + $0x1c] sm:$0xf]
          %v5150 = vld [vmem:[%s7 + $0x20] sm:$0xf]
          %v5151 = vld [vmem:[%s7 + $0x24] sm:$0xf]
          %v5152 = vld [vmem:[%s7 + $0x28] sm:$0xf]
          %v5153 = vld [vmem:[%s7 + $0x2c] sm:$0xf]
          %v5154 = vld [vmem:[%s7 + $0x30] sm:$0xf]
          %v5155 = vld [vmem:[%s7 + $0x34] sm:$0xf]
          %v5156 = vld [vmem:[%s7 + $0x38] sm:$0xf]
          %v5157 = vld [vmem:[%s7 + $0x3c] sm:$0xf]
          %v5158 = vld [vmem:[%s7 + $0x40] sm:$0xf]
          %v5159 = vld [vmem:[%s7 + $0x44] sm:$0xf]
          %v5160 = vld [vmem:[%s7 + $0x48] sm:$0xf]
          %v5161 = vld [vmem:[%s7 + $0x4c] sm:$0xf]
          %v5162 = vld [vmem:[%s7 + $0x50] sm:$0xf]
          %v5163 = vld [vmem:[%s7 + $0x54] sm:$0xf]
          %v5164 = vld [vmem:[%s7 + $0x58] sm:$0xf]
          %v5165 = vld [vmem:[%s7 + $0x5c] sm:$0xf]
          %v5166 = vld [vmem:[%s7 + $0x60] sm:$0xf]
          %v5167 = vld [vmem:[%s7 + $0x64] sm:$0xf]
          %v5168 = vld [vmem:[%s7 + $0x68] sm:$0xf]
          %v5169 = vld [vmem:[%s7 + $0x6c] sm:$0xf]
          %v5170 = vld [vmem:[%s7 + $0x70] sm:$0xf]
          %v5171 = vld [vmem:[%s7 + $0x74] sm:$0xf]
          %v5172 = vld [vmem:[%s7 + $0x78] sm:$0xf]
          %v5173 = vld [vmem:[%s7 + $0x7c] sm:$0xf]
          %v5174 = vld [vmem:[%s7 + $0x80] sm:$0xf]
          %v5175 = vld [vmem:[%s7 + $0x84] sm:$0xf]
          %v5176 = vld [vmem:[%s7 + $0x88] sm:$0xf]
          %v5177 = vld [vmem:[%s7 + $0x8c] sm:$0xf]
          %v5178 = vld [vmem:[%s7 + $0x90] sm:$0xf]
          %v5179 = vld [vmem:[%s7 + $0x94] sm:$0xf]
          %v5180 = vld [vmem:[%s7 + $0x98] sm:$0xf]
          %v5181 = vld [vmem:[%s7 + $0x9c] sm:$0xf]
          %v5182 = vld [vmem:[%s7 + $0xa0] sm:$0xf]
          %v5183 = vld [vmem:[%s7 + $0xa4] sm:$0xf]
          %v5184 = vld [vmem:[%s7 + $0xa8] sm:$0xf]
          %v5185 = vld [vmem:[%s7 + $0xac] sm:$0xf]
          %v5186 = vld [vmem:[%s7 + $0xb0] sm:$0xf]
          %v5187 = vld [vmem:[%s7 + $0xb4] sm:$0xf]
          %v5188 = vld [vmem:[%s7 + $0xb8] sm:$0xf]
          %v5189 = vld [vmem:[%s7 + $0xbc] sm:$0xf]
          %v5190 = vld [vmem:[%s7 + $0xc0] sm:$0xf]
          %v5191 = vld [vmem:[%s7 + $0xc4] sm:$0xf]
          %v5192 = vld [vmem:[%s7 + $0xc8] sm:$0xf]
          %v5193 = vld [vmem:[%s7 + $0xcc] sm:$0xf]
          %v5194 = vld [vmem:[%s7 + $0xd0] sm:$0xf]
          %v5195 = vld [vmem:[%s7 + $0xd4] sm:$0xf]
          %v5196 = vld [vmem:[%s7 + $0xd8] sm:$0xf]
          %v5197 = vld [vmem:[%s7 + $0xdc] sm:$0xf]
          %v5198 = vld [vmem:[%s7 + $0xe0] sm:$0xf]
          %v5199 = vld [vmem:[%s7 + $0xe4] sm:$0xf]
          %v5200 = vld [vmem:[%s7 + $0xe8] sm:$0xf]
          %v5201 = vld [vmem:[%s7 + $0xec] sm:$0xf]
          %v5202 = vld [vmem:[%s7 + $0xf0] sm:$0xf]
          %v5203 = vld [vmem:[%s7 + $0xf4] sm:$0xf]
          %v5204 = vld [vmem:[%s7 + $0xf8] sm:$0xf]
          %v5205 = vld [vmem:[%s7 + $0xfc] sm:$0xf]
          %v5206 = vld [vmem:[%s8] sm:$0x1]
          %v5271 = vunpack.c.l.b16 %v5142
          %v5272 = vunpack.c.l.b16 %v5143
          %v5273 = vunpack.c.l.b16 %v5144
          %v5274 = vunpack.c.l.b16 %v5145
          %v5275 = vunpack.c.l.b16 %v5146
          %v5276 = vunpack.c.l.b16 %v5147
          %v5277 = vunpack.c.l.b16 %v5148
          %v5278 = vunpack.c.l.b16 %v5149
          %v5279 = vunpack.c.l.b16 %v5150
          %v5280 = vunpack.c.l.b16 %v5151
          %v5281 = vunpack.c.l.b16 %v5152
          %v5282 = vunpack.c.l.b16 %v5153
          %v5283 = vunpack.c.l.b16 %v5154
          %v5284 = vunpack.c.l.b16 %v5155
          %v5285 = vunpack.c.l.b16 %v5156
          %v5286 = vunpack.c.l.b16 %v5157
          %v5287 = vunpack.c.l.b16 %v5158
          %v5288 = vunpack.c.l.b16 %v5159
          %v5289 = vunpack.c.l.b16 %v5160
          %v5290 = vunpack.c.l.b16 %v5161
          %v5291 = vunpack.c.l.b16 %v5162
          %v5292 = vunpack.c.l.b16 %v5163
          %v5293 = vunpack.c.l.b16 %v5164
          %v5294 = vunpack.c.l.b16 %v5165
          %v5295 = vunpack.c.l.b16 %v5166
          %v5296 = vunpack.c.l.b16 %v5167
          %v5297 = vunpack.c.l.b16 %v5168
          %v5298 = vunpack.c.l.b16 %v5169
          %v5299 = vunpack.c.l.b16 %v5170
          %v5300 = vunpack.c.l.b16 %v5171
          %v5301 = vunpack.c.l.b16 %v5172
          %v5302 = vunpack.c.l.b16 %v5173
          %v5303 = vunpack.c.l.b16 %v5174
          %v5304 = vunpack.c.l.b16 %v5175
          %v5305 = vunpack.c.l.b16 %v5176
          %v5306 = vunpack.c.l.b16 %v5177
          %v5307 = vunpack.c.l.b16 %v5178
          %v5308 = vunpack.c.l.b16 %v5179
          %v5309 = vunpack.c.l.b16 %v5180
          %v5310 = vunpack.c.l.b16 %v5181
          %v5311 = vunpack.c.l.b16 %v5182
          %v5312 = vunpack.c.l.b16 %v5183
          %v5313 = vunpack.c.l.b16 %v5184
          %v5314 = vunpack.c.l.b16 %v5185
          %v5315 = vunpack.c.l.b16 %v5186
          %v5316 = vunpack.c.l.b16 %v5187
          %v5317 = vunpack.c.l.b16 %v5188
          %v5318 = vunpack.c.l.b16 %v5189
          %v5319 = vunpack.c.l.b16 %v5190
          %v5320 = vunpack.c.l.b16 %v5191
          %v5321 = vunpack.c.l.b16 %v5192
          %v5322 = vunpack.c.l.b16 %v5193
          %v5323 = vunpack.c.l.b16 %v5194
          %v5324 = vunpack.c.l.b16 %v5195
          %v5325 = vunpack.c.l.b16 %v5196
          %v5326 = vunpack.c.l.b16 %v5197
          %v5327 = vunpack.c.l.b16 %v5198
          %v5328 = vunpack.c.l.b16 %v5199
          %v5329 = vunpack.c.l.b16 %v5200
          %v5330 = vunpack.c.l.b16 %v5201
          %v5331 = vunpack.c.l.b16 %v5202
          %v5332 = vunpack.c.l.b16 %v5203
          %v5333 = vunpack.c.l.b16 %v5204
          %v5334 = vunpack.c.l.b16 %v5205
          %v5335 = vpack.c.b16 %v5272, %v5271
          %v5336 = vpack.c.b16 %v5274, %v5273
          %v5337 = vpack.c.b16 %v5276, %v5275
          %v5338 = vpack.c.b16 %v5278, %v5277
          %v5339 = vpack.c.b16 %v5280, %v5279
          %v5340 = vpack.c.b16 %v5282, %v5281
          %v5341 = vpack.c.b16 %v5284, %v5283
          %v5342 = vpack.c.b16 %v5286, %v5285
          %v5343 = vpack.c.b16 %v5288, %v5287
          %v5344 = vpack.c.b16 %v5290, %v5289
          %v5345 = vpack.c.b16 %v5292, %v5291
          %v5346 = vpack.c.b16 %v5294, %v5293
          %v5347 = vpack.c.b16 %v5296, %v5295
          %v5348 = vpack.c.b16 %v5298, %v5297
          %v5349 = vpack.c.b16 %v5300, %v5299
          %v5350 = vpack.c.b16 %v5302, %v5301
          %v5351 = vpack.c.b16 %v5304, %v5303
          %v5352 = vpack.c.b16 %v5306, %v5305
          %v5353 = vpack.c.b16 %v5308, %v5307
          %v5354 = vpack.c.b16 %v5310, %v5309
          %v5355 = vpack.c.b16 %v5312, %v5311
          %v5356 = vpack.c.b16 %v5314, %v5313
          %v5357 = vpack.c.b16 %v5316, %v5315
          %v5358 = vpack.c.b16 %v5318, %v5317
          %v5359 = vpack.c.b16 %v5320, %v5319
          %v5360 = vpack.c.b16 %v5322, %v5321
          %v5361 = vpack.c.b16 %v5324, %v5323
          %v5362 = vpack.c.b16 %v5326, %v5325
          %v5363 = vpack.c.b16 %v5328, %v5327
          %v5364 = vpack.c.b16 %v5330, %v5329
          %v5365 = vpack.c.b16 %v5332, %v5331
          %v5366 = vpack.c.b16 %v5334, %v5333
          %5399 = vmatprep.subr.bf16.mxu0 0
          %5400 = vmatpush1.bf16.msra.mxu0 %v5335
          %5401 = vmatprep.subr.bf16.mxu0 0
          %5402 = vmatpush1.bf16.msra.mxu0 %v5336
          %5403 = vmatprep.subr.bf16.mxu0 0
          %5404 = vmatpush1.bf16.msra.mxu0 %v5337
          %5405 = vmatprep.subr.bf16.mxu0 0
          %5406 = vmatpush1.bf16.msra.mxu0 %v5338
          %5407 = vmatprep.subr.bf16.mxu0 0
          %5408 = vmatpush1.bf16.msra.mxu0 %v5339
          %5409 = vmatprep.subr.bf16.mxu0 0
          %5410 = vmatpush1.bf16.msra.mxu0 %v5340
          %5411 = vmatprep.subr.bf16.mxu0 0
          %5412 = vmatpush1.bf16.msra.mxu0 %v5341
          %5413 = vmatprep.subr.bf16.mxu0 0
          %5414 = vmatpush1.bf16.msra.mxu0 %v5342
          %5415 = vmatprep.subr.bf16.mxu0 0
          %5416 = vmatpush1.bf16.msra.mxu0 %v5343
          %5417 = vmatprep.subr.bf16.mxu0 0
          %5418 = vmatpush1.bf16.msra.mxu0 %v5344
          %5419 = vmatprep.subr.bf16.mxu0 0
          %5420 = vmatpush1.bf16.msra.mxu0 %v5345
          %5421 = vmatprep.subr.bf16.mxu0 0
          %5422 = vmatpush1.bf16.msra.mxu0 %v5346
          %5423 = vmatprep.subr.bf16.mxu0 0
          %5424 = vmatpush1.bf16.msra.mxu0 %v5347
          %5425 = vmatprep.subr.bf16.mxu0 0
          %5426 = vmatpush1.bf16.msra.mxu0 %v5348
          %5427 = vmatprep.subr.bf16.mxu0 0
          %5428 = vmatpush1.bf16.msra.mxu0 %v5349
          %5429 = vmatprep.subr.bf16.mxu0 0
          %5430 = vmatpush1.bf16.msra.mxu0 %v5350
          %5431 = vmatprep.mubr.bf16.mxu0 %v5139
          %5432 = vmatmul.mubr.bf16.gmra.mrb[0].mxu0 %v5138
          %v5433 = vpop.f32.mrb[0].mxu0
          %v5434 = vadd.f32 %v5206, %v5433
          %v5435 = vpop.f32.mrb[0].mxu0
          %v5436 = vpop.f32.mrb[0].mxu0
          %v5437 = vpop.f32.mrb[0].mxu0
          %5438 = vdwg.mxu0
          %5439 = vmatprep.subr.bf16.mxu0 0
          %5440 = vmatpush1.bf16.msra.mxu0 %v5351
          %5441 = vmatprep.subr.bf16.mxu0 0
          %5442 = vmatpush1.bf16.msra.mxu0 %v5352
          %5443 = vmatprep.subr.bf16.mxu0 0
          %5444 = vmatpush1.bf16.msra.mxu0 %v5353
          %5445 = vmatprep.subr.bf16.mxu0 0
          %5446 = vmatpush1.bf16.msra.mxu0 %v5354
          %5447 = vmatprep.subr.bf16.mxu0 0
          %5448 = vmatpush1.bf16.msra.mxu0 %v5355
          %5449 = vmatprep.subr.bf16.mxu0 0
          %5450 = vmatpush1.bf16.msra.mxu0 %v5356
          %5451 = vmatprep.subr.bf16.mxu0 0
          %5452 = vmatpush1.bf16.msra.mxu0 %v5357
          %5453 = vmatprep.subr.bf16.mxu0 0
          %5454 = vmatpush1.bf16.msra.mxu0 %v5358
          %5455 = vmatprep.subr.bf16.mxu0 0
          %5456 = vmatpush1.bf16.msra.mxu0 %v5359
          %5457 = vmatprep.subr.bf16.mxu0 0
          %5458 = vmatpush1.bf16.msra.mxu0 %v5360
          %5459 = vmatprep.subr.bf16.mxu0 0
          %5460 = vmatpush1.bf16.msra.mxu0 %v5361
          %5461 = vmatprep.subr.bf16.mxu0 0
          %5462 = vmatpush1.bf16.msra.mxu0 %v5362
          %5463 = vmatprep.subr.bf16.mxu0 0
          %5464 = vmatpush1.bf16.msra.mxu0 %v5363
          %5465 = vmatprep.subr.bf16.mxu0 0
          %5466 = vmatpush1.bf16.msra.mxu0 %v5364
          %5467 = vmatprep.subr.bf16.mxu0 0
          %5468 = vmatpush1.bf16.msra.mxu0 %v5365
          %5469 = vmatprep.subr.bf16.mxu0 0
          %5470 = vmatpush1.bf16.msra.mxu0 %v5366
          %5471 = vmatprep.mubr.bf16.mxu0 %v5141
          %5472 = vmatmul.mubr.bf16.gmra.mrb[0].mxu0 %v5140
          %v5473 = vpop.f32.mrb[0].mxu0
          %v5474 = vadd.f32 %v5434, %v5473
          %v5475 = vpop.f32.mrb[0].mxu0
          %v5476 = vpop.f32.mrb[0].mxu0
          %v5477 = vpop.f32.mrb[0].mxu0
          %5478 = vdwg.mxu0
          %vm5479 = vcmask 8192
          %5480 = vst.msk [vmem:[%s9] sm:$0x1] %vm5479, %v5474
          %v5481 = vsel %vm5479, %v5474, -inf
          %5482 = vmax.xlane.f32.xlu0 %v5481
          %v5483 = vpop.xlane.xlu0 %5482
          %v5484 = vsub.f32 %v5474, %v5483
          %v5485 = vmul.f32 %v5484, 1.442695
          %v5486 = vpow.pop %v5485
          %v5487 = vsel %vm5479, %v5486, 0.0
          %5488 = vadd.xlane.f32.xlu0 %v5487
          %v5489 = vpop.xlane.xlu0 %5488
          %v5490 = vrcp.pop %v5489
          %v5491 = vmul.f32 %v5486, %v5490
          %5492 = vst.msk [vmem:[#allocation6] sm:$0x1] %vm5479, %v5491
        $region64: #{clam_sb_forward.1} parent=55 // pred_fallthru
          _
        %s5493 = sand.u32 %s273, 1
        %s5494 = scalar_lea.sflag [#allocation9], %s5493
        %s5495 = sand.u32 %s273, 1
        %s5496 = scalar_lea.vmem [#allocation8], %s5495
        // Predicated region
        $region65: #{clam_sb_forward.1} parent=55 // pred_check
          %p5497 = pneg %p236
        $region66: #{clam_sb_forward.1} parent=55 // pred_check_branch
          %5499 = sbr.rel (%p5497) target = $region68
        $region67: #{clam_sb_forward.1} parent=55 // pred_region
          _
        $region68: #{clam_sb_forward.1} parent=55 // pred_fallthru
          _
        // Predicated region
        $region69: #{clam_sb_forward.1} parent=55 // pred_check
          %p5500 = pneg %p257
        $region70: #{clam_sb_forward.1} parent=55 // pred_check_branch
          %5502 = sbr.rel (%p5500) target = $region72
        $region71: #{clam_sb_forward.1} parent=55 // pred_region
          %s5504 = ssub.s32 16, 16
          %5505 = vsyncadd [#allocation7], %s5504
          %s5507 = sshll.u32 [#allocation6], 4
          %s5508 = int_to_ptr.vmem [resolvable:$true] %s5507
          %5510 = dma.vmem_to_hbm [thread:$0]  %s5508, 16, %s10, [#allocation7]
        $region72: #{clam_sb_forward.1} parent=55 // pred_fallthru
          _
        // Predicated region
        $region73: #{clam_sb_forward.1} parent=55 // pred_check
          %p5511 = pneg %p283
        $region74: #{clam_sb_forward.1} parent=55 // pred_check_branch
          %5513 = sbr.rel (%p5511) target = $region76
        $region75: #{clam_sb_forward.1} parent=55 // pred_region
          %s5515 = ssub.s32 16, 16
          %5516 = vsyncadd %s5494, %s5515
          %s5517 = smul.addr %s29, 16
          %s5518 = scalar_lea.hbm %s11, %s5517
          %s5520 = sshll.u32 %s5496, 4
          %s5521 = int_to_ptr.vmem [resolvable:$true] %s5520
          %5523 = dma.vmem_to_hbm [thread:$0]  %s5521, 16, %s5518, %s5494
        $region76: #{clam_sb_forward.1} parent=55 // pred_fallthru
          _
        // Predicated region
        $region77: #{clam_sb_forward.1} parent=55 // pred_check
          %p5524 = pneg %p236
        $region78: #{clam_sb_forward.1} parent=55 // pred_check_branch
          %5526 = sbr.rel (%p5524) target = $region80
        $region79: #{clam_sb_forward.1} parent=55 // pred_region
          _
        $region80: #{clam_sb_forward.1} parent=55 // pred_fallthru
          _
        // Predicated region
        $region81: #{clam_sb_forward.1} parent=55 // pred_check
          %p5527 = pneg %p257
        $region82: #{clam_sb_forward.1} parent=55 // pred_check_branch
          %5529 = sbr.rel (%p5527) target = $region84
        $region83: #{clam_sb_forward.1} parent=55 // pred_region
          %5530 = dma.done [#allocation7], 16
        $region84: #{clam_sb_forward.1} parent=55 // pred_fallthru
          _
      $region56: #{clam_sb_forward.1} parent=5 // pred_fallthru
        _
      %p5531 = scmp.le.s32.totalorder 2, %s24
      // Predicated region
      $region85: #{clam_sb_forward.1} parent=5 // pred_check
        %p5532 = pneg %p5531
      $region86: #{clam_sb_forward.1} parent=5 // pred_check_branch
        %5534 = sbr.rel (%p5532) target = $region88
      $region87: #{clam_sb_forward.1} parent=5 // pred_region
        %s5535 = ssub.s32 %s24, 2
        // Predicated region
        $region89: #{clam_sb_forward.1} parent=87 // pred_check
          %p5536 = pneg %p289
        $region90: #{clam_sb_forward.1} parent=87 // pred_check_branch
          %5538 = sbr.rel (%p5536) target = $region92
        $region91: #{clam_sb_forward.1} parent=87 // pred_region
          %s5539 = sand.u32 %s274, 1
          %s5540 = scalar_lea.sflag [#allocation9], %s5539
          %s5541 = sand.u32 %s274, 1
          %s5542 = scalar_lea.vmem [#allocation8], %s5541
          %5543 = dma.done %s5540, 16
        $region92: #{clam_sb_forward.1} parent=87 // pred_fallthru
          _
      $region88: #{clam_sb_forward.1} parent=5 // pred_fallthru
        _
    $region6: #{clam_sb_forward.1} parent=1 // loop_footer
      %s28 = sadd.s32 1, %s24
    $region7: #{clam_sb_forward.1} parent=1 // loop_footer_branch
      %23 = sbr.rel target = $region3
    $region8: #{clam_sb_forward.1} parent=1 // loop_exit
      _
    %5544 = vsyncpa [#allocation7], 1
    %s5545 = scalar_lea.sflag [#allocation7], 1
    %5546 = vsyncpa %s5545, 1
    %5547 = vsyncpa [#allocation9], 1
    %s5548 = scalar_lea.sflag [#allocation9], 1
    %5549 = vsyncpa %s5548, 1

</llo_original>
